<compile_context>
chip_gen: v5e
topology: v5e:2x2
jax: 0.10.0
libtpu: 0.0.40
codegen_flags: <defaults>
</compile_context>

<pallas_src>
import jax
import jax.numpy as jnp
from jax.experimental import pallas as pl
from jax.experimental.pallas import tpu as pltpu


def _rcab_kernel(x_ref, w1_ref, b1_ref, w2_ref, b2_ref,
                 wd_ref, bd_ref, wu_ref, bu_ref, pool_ref, unpool_ref,
                 out_ref):
    # x_ref       : (B, H, W*C)     lane-dense input tile (f32)
    # w1_ref/w2_ref: (3, W*C, W*C)  banded per-dy conv matrices (bf16)
    # b1_ref/b2_ref: (1, W*C)       conv bias tiled across W (f32)
    # wd_ref: (C, Cr) bf16, bd_ref: (1, Cr) f32   CA "down" 1x1 conv
    # wu_ref: (Cr, C) bf16, bu_ref: (1, C)  f32   CA "up"   1x1 conv
    # pool_ref    : (W*C, C) bf16   per-channel lane-group sum matrix
    # unpool_ref  : (C, W*C) bf16   per-channel scale broadcast matrix
    # out_ref     : (B, H, W*C)     lane-dense output
    B, H, WC = out_ref.shape
    C = pool_ref.shape[1]
    W = WC // C
    inv_hw = 1.0 / float(H * W)

    x_f32 = x_ref[...]                                    # (B, H, WC)
    zrow = jnp.zeros((B, 1, WC), jnp.float32)

    def conv3x3(act_f32, w_ref, b_ref):
        # out[y] = act[y-1] @ W0 + act[y] @ W1 + act[y+1] @ W2  ('same' pad)
        # All three dots share one (B*H, WC) bf16 LHS -> big-M MXU fill.
        lhs = act_f32.astype(jnp.bfloat16).reshape(B * H, WC)
        p0 = jnp.dot(lhs, w_ref[0], preferred_element_type=jnp.float32)
        p1 = jnp.dot(lhs, w_ref[1], preferred_element_type=jnp.float32)
        p2 = jnp.dot(lhs, w_ref[2], preferred_element_type=jnp.float32)
        p0 = p0.reshape(B, H, WC)
        p1 = p1.reshape(B, H, WC)
        p2 = p2.reshape(B, H, WC)
        # Vertical 'same' padding via output-row shifts (no padded scratch).
        up = jnp.concatenate([zrow, p0[:, :H - 1, :]], axis=1)   # row y <- p0[y-1]
        dn = jnp.concatenate([p2[:, 1:, :], zrow], axis=1)       # row y <- p2[y+1]
        return p1 + up + dn + b_ref[...]

    # ---- conv1 -> ReLU -> conv2 (all rows of the batch tile at once) -------
    h1 = jnp.maximum(conv3x3(x_f32, w1_ref, b1_ref), 0.0)        # (B, H, WC)
    res = conv3x3(h1, w2_ref, b2_ref)                            # (B, H, WC)

    # ---- channel attention, batched over the image tile --------------------
    rowsum = jnp.sum(res, axis=1)                                # (B, WC)
    pooled = jnp.dot(rowsum.astype(jnp.bfloat16), pool_ref[...],
                     preferred_element_type=jnp.float32)         # (B, C)
    y = pooled * inv_hw                                          # global avg pool
    z = jnp.maximum(
        jnp.dot(y.astype(jnp.bfloat16), wd_ref[...],
                preferred_element_type=jnp.float32) + bd_ref[...], 0.0)   # (B, Cr)
    s = jax.nn.sigmoid(
        jnp.dot(z.astype(jnp.bfloat16), wu_ref[...],
                preferred_element_type=jnp.float32) + bu_ref[...])        # (B, C)
    s_big = jnp.dot(s.astype(jnp.bfloat16), unpool_ref[...],
                    preferred_element_type=jnp.float32)          # (B, WC)

    # ---- channel-wise scale + residual add (dense full-lane store) ---------
    out_ref[...] = (res * s_big[:, None, :] + x_f32).astype(out_ref.dtype)


def _pick_b_tile(n):
    """Largest batch tile <= 8 that keeps the grid multi-step.

    Prefers >=4 grid steps (2x the TensorCores on v7x) with a tile >=4 (so the
    MXU sees M = b_tile*H >= 64 rows per weight push); degrades gracefully for
    small N.
    """
    divs = [d for d in range(1, min(n, 8) + 1) if n % d == 0]
    for min_steps, min_tile in ((4, 4), (2, 2), (2, 1), (1, 1)):
        cands = [d for d in divs if n // d >= min_steps and d >= min_tile]
        if cands:
            return max(cands)
    return n


@jax.jit
def rcab_forward(x_nchw, w1, b1, w2, b2, wd, bd, wu, bu):
    """RCAB forward. x_nchw: (N, C, H, W) float32, PyTorch convention.

    w1, w2: (9, Cin, Cout) tap-major 3x3 conv weights; b1, b2: (C,)
    wd: (C, Cr), bd: (Cr,), wu: (Cr, C), bu: (C,)  -- channel-attention MLP.
    """
    N, C, H, W = x_nchw.shape
    Cr = wd.shape[1]
    WC = W * C
    b_tile = _pick_b_tile(N)

    # NCHW -> lane-dense (N, H, W*C).  For a chained stack of RCABs, keep the
    # activations in this layout across blocks instead of converting per call.
    x_ld = jnp.transpose(x_nchw, (0, 2, 3, 1)).reshape(N, H, WC)

    # Banded per-dy conv matrices (3, W*C, W*C), in bf16 for the MXU:
    #   M[dy][(w+dx-1)*C + ci, w*C + co] = w[dy, dx, ci, co]
    # (horizontal 'same' padding is implicit in the eye() band truncation).
    # At production RCAN shapes (large n_feat*W) these should be band-tiled
    # over a W*C grid axis so they fit the per-generation VMEM budget.
    def banded(w9):
        w33 = w9.reshape(3, 3, C, C)
        return jnp.stack([
            sum(jnp.kron(jnp.eye(W, k=1 - dx, dtype=w9.dtype), w33[dy, dx])
                for dx in range(3))
            for dy in range(3)]).astype(jnp.bfloat16)

    w1b, w2b = banded(w1), banded(w2)
    b1t = jnp.tile(b1, W).reshape(1, WC).astype(jnp.float32)
    b2t = jnp.tile(b2, W).reshape(1, WC).astype(jnp.float32)
    pool = jnp.tile(jnp.eye(C, dtype=jnp.bfloat16), (W, 1))    # (W*C, C)
    unpool = jnp.tile(jnp.eye(C, dtype=jnp.bfloat16), (1, W))  # (C, W*C)
    wd_b = wd.astype(jnp.bfloat16)
    wu_b = wu.astype(jnp.bfloat16)
    bd2 = bd.reshape(1, Cr).astype(jnp.float32)
    bu2 = bu.reshape(1, C).astype(jnp.float32)

    out_ld = pl.pallas_call(
        _rcab_kernel,
        out_shape=jax.ShapeDtypeStruct((N, H, WC), x_nchw.dtype),
        grid_spec=pltpu.PrefetchScalarGridSpec(
            num_scalar_prefetch=0,
            grid=(N // b_tile,),
            in_specs=[
                pl.BlockSpec((b_tile, H, WC), lambda n: (n, 0, 0)),
                pl.BlockSpec((3, WC, WC), lambda n: (0, 0, 0)),
                pl.BlockSpec((1, WC), lambda n: (0, 0)),
                pl.BlockSpec((3, WC, WC), lambda n: (0, 0, 0)),
                pl.BlockSpec((1, WC), lambda n: (0, 0)),
                pl.BlockSpec((C, Cr), lambda n: (0, 0)),
                pl.BlockSpec((1, Cr), lambda n: (0, 0)),
                pl.BlockSpec((Cr, C), lambda n: (0, 0)),
                pl.BlockSpec((1, C), lambda n: (0, 0)),
                pl.BlockSpec((WC, C), lambda n: (0, 0)),
                pl.BlockSpec((C, WC), lambda n: (0, 0)),
            ],
            out_specs=pl.BlockSpec((b_tile, H, WC), lambda n: (n, 0, 0)),
        ),
        compiler_params=pltpu.CompilerParams(
            dimension_semantics=("parallel",)),
    )(x_ld, w1b, b1t, w2b, b2t, wd_b, bd2, wu_b, bu2, pool, unpool)

    # lane-dense (N, H, W*C) -> NCHW to match the PyTorch module's convention.
    return jnp.transpose(out_ld.reshape(N, H, W, C), (0, 3, 1, 2))


def _reference_rcab(x_nchw, w1, b1, w2, b2, wd, bd, wu, bu):
    """Pure-JAX reference (lax.conv) for numerical validation."""
    C = x_nchw.shape[1]
    x = jnp.transpose(x_nchw, (0, 2, 3, 1))  # NHWC
    w1_hwio = w1.reshape(3, 3, C, C)
    w2_hwio = w2.reshape(3, 3, C, C)
    dn = ('NHWC', 'HWIO', 'NHWC')
    h = jax.lax.conv_general_dilated(x, w1_hwio, (1, 1), 'SAME',
                                     dimension_numbers=dn) + b1
    h = jnp.maximum(h, 0.0)
    res = jax.lax.conv_general_dilated(h, w2_hwio, (1, 1), 'SAME',
                                       dimension_numbers=dn) + b2
    y = jnp.mean(res, axis=(1, 2), keepdims=True)                  # (N,1,1,C)
    z = jnp.maximum(jnp.einsum('nabc,cr->nabr', y, wd) + bd, 0.0)  # (N,1,1,Cr)
    s = jax.nn.sigmoid(jnp.einsum('nabr,rc->nabc', z, wu) + bu)    # (N,1,1,C)
    out = res * s + x
    return jnp.transpose(out, (0, 3, 1, 2))


if __name__ == "__main__":
    # Shapes consistent with RCAB(conv, n_feat=16, kernel_size=3, reduction=4).
    # N=8 exercises both the batched-M conv matmuls (b_tile=4 -> M=64) and a
    # multi-step grid (2 steps) for megacore/pipelining.
    N, C, H, W = 8, 16, 16, 16
    reduction = 4
    Cr = C // reduction

    key = jax.random.PRNGKey(0)
    ks = jax.random.split(key, 9)
    x = jax.random.normal(ks[0], (N, C, H, W), jnp.float32)

    # 3x3 conv weights stored tap-major: (9, Cin, Cout); biases: (C,)
    w1 = jax.random.normal(ks[1], (9, C, C), jnp.float32) * 0.05
    b1 = jax.random.normal(ks[2], (C,), jnp.float32) * 0.05
    w2 = jax.random.normal(ks[3], (9, C, C), jnp.float32) * 0.05
    b2 = jax.random.normal(ks[4], (C,), jnp.float32) * 0.05
    # Channel-attention 1x1 convs: down (C -> Cr), up (Cr -> C)
    wd = jax.random.normal(ks[5], (C, Cr), jnp.float32) * 0.1
    bd = jax.random.normal(ks[6], (Cr,), jnp.float32) * 0.1
    wu = jax.random.normal(ks[7], (Cr, C), jnp.float32) * 0.1
    bu = jax.random.normal(ks[8], (C,), jnp.float32) * 0.1

    out = rcab_forward(x, w1, b1, w2, b2, wd, bd, wu, bu)
    out = jax.block_until_ready(out)

    ref = jax.block_until_ready(_reference_rcab(x, w1, b1, w2, b2, wd, bd, wu, bu))
    assert out.shape == (N, C, H, W)
    # bf16 MXU operands -> loosened tolerance vs. the f32 reference.
    err = float(jnp.max(jnp.abs(out - ref)))
    assert err < 5e-2, f"mismatch vs. reference: max abs err = {err}"

    print("KERNEL_OK")
</pallas_src>

<mosaic_0001>
module attributes {stable_mosaic.version = 11 : i64} {
  func.func @_rcab_kernel(%arg0: i32, %arg1: memref<4x16x256xf32, #tpu.memory_space<vmem>>, %arg2: memref<3x256x256xbf16, #tpu.memory_space<vmem>>, %arg3: memref<1x256xf32, #tpu.memory_space<vmem>>, %arg4: memref<3x256x256xbf16, #tpu.memory_space<vmem>>, %arg5: memref<1x256xf32, #tpu.memory_space<vmem>>, %arg6: memref<16x4xbf16, #tpu.memory_space<vmem>>, %arg7: memref<1x4xf32, #tpu.memory_space<vmem>>, %arg8: memref<4x16xbf16, #tpu.memory_space<vmem>>, %arg9: memref<1x16xf32, #tpu.memory_space<vmem>>, %arg10: memref<256x16xbf16, #tpu.memory_space<vmem>>, %arg11: memref<16x256xbf16, #tpu.memory_space<vmem>>, %arg12: memref<4x16x256xf32, #tpu.memory_space<vmem>>) attributes {dimension_semantics = [#tpu.dimension_semantics<parallel>], iteration_bounds = array<i64: 2>, scalar_prefetch = 0 : i64, scratch_operands = 0 : i64, tpu.core_type = #tpu.core_type<tc>, window_params = [{transform_indices = @transform_0, window_bounds = array<i64: 4, 16, 256>}, {pipeline_mode = #tpu.pipeline_mode<synchronous>, transform_indices = @transform_1, window_bounds = array<i64: 3, 256, 256>}, {pipeline_mode = #tpu.pipeline_mode<synchronous>, transform_indices = @transform_2, window_bounds = array<i64: 1, 256>}, {pipeline_mode = #tpu.pipeline_mode<synchronous>, transform_indices = @transform_3, window_bounds = array<i64: 3, 256, 256>}, {pipeline_mode = #tpu.pipeline_mode<synchronous>, transform_indices = @transform_4, window_bounds = array<i64: 1, 256>}, {pipeline_mode = #tpu.pipeline_mode<synchronous>, transform_indices = @transform_5, window_bounds = array<i64: 16, 4>}, {pipeline_mode = #tpu.pipeline_mode<synchronous>, transform_indices = @transform_6, window_bounds = array<i64: 1, 4>}, {pipeline_mode = #tpu.pipeline_mode<synchronous>, transform_indices = @transform_7, window_bounds = array<i64: 4, 16>}, {pipeline_mode = #tpu.pipeline_mode<synchronous>, transform_indices = @transform_8, window_bounds = array<i64: 1, 16>}, {pipeline_mode = #tpu.pipeline_mode<synchronous>, transform_indices = @transform_9, window_bounds = array<i64: 256, 16>}, {pipeline_mode = #tpu.pipeline_mode<synchronous>, transform_indices = @transform_10, window_bounds = array<i64: 16, 256>}, {transform_indices = @transform_11, window_bounds = array<i64: 4, 16, 256>}]} {
    %c0 = arith.constant 0 : index
    %c0_0 = arith.constant 0 : index
    %c0_1 = arith.constant 0 : index
    %0 = vector.load %arg1[%c0, %c0_0, %c0_1] : memref<4x16x256xf32, #tpu.memory_space<vmem>>, vector<4x16x256xf32>
    %cst = arith.constant 0.000000e+00 : f32
    %1 = vector.broadcast %cst : f32 to vector<4x1x256xf32>
    %2 = arith.truncf %0 : vector<4x16x256xf32> to vector<4x16x256xbf16>
    %3 = vector.shape_cast %2 : vector<4x16x256xbf16> to vector<64x256xbf16>
    %c0_2 = arith.constant 0 : index
    %c0_3 = arith.constant 0 : index
    %c0_4 = arith.constant 0 : index
    %4 = vector.load %arg2[%c0_2, %c0_3, %c0_4] : memref<3x256x256xbf16, #tpu.memory_space<vmem>>, vector<1x256x256xbf16>
    %5 = vector.shape_cast %4 : vector<1x256x256xbf16> to vector<256x256xbf16>
    %cst_5 = arith.constant dense<0.000000e+00> : vector<64x256xf32>
    %6 = tpu.matmul %3, %5, %cst_5 {dimension_numbers = #tpu.dot_dimension_numbers<[1], [0], [0], [1], [0, 0, 1, 1], [], []>} : vector<64x256xbf16>, vector<256x256xbf16>, vector<64x256xf32> -> vector<64x256xf32>
    %c1 = arith.constant 1 : index
    %c0_6 = arith.constant 0 : index
    %c0_7 = arith.constant 0 : index
    %7 = vector.load %arg2[%c1, %c0_6, %c0_7] : memref<3x256x256xbf16, #tpu.memory_space<vmem>>, vector<1x256x256xbf16>
    %8 = vector.shape_cast %7 : vector<1x256x256xbf16> to vector<256x256xbf16>
    %cst_8 = arith.constant dense<0.000000e+00> : vector<64x256xf32>
    %9 = tpu.matmul %3, %8, %cst_8 {dimension_numbers = #tpu.dot_dimension_numbers<[1], [0], [0], [1], [0, 0, 1, 1], [], []>} : vector<64x256xbf16>, vector<256x256xbf16>, vector<64x256xf32> -> vector<64x256xf32>
    %c2 = arith.constant 2 : index
    %c0_9 = arith.constant 0 : index
    %c0_10 = arith.constant 0 : index
    %10 = vector.load %arg2[%c2, %c0_9, %c0_10] : memref<3x256x256xbf16, #tpu.memory_space<vmem>>, vector<1x256x256xbf16>
    %11 = vector.shape_cast %10 : vector<1x256x256xbf16> to vector<256x256xbf16>
    %cst_11 = arith.constant dense<0.000000e+00> : vector<64x256xf32>
    %12 = tpu.matmul %3, %11, %cst_11 {dimension_numbers = #tpu.dot_dimension_numbers<[1], [0], [0], [1], [0, 0, 1, 1], [], []>} : vector<64x256xbf16>, vector<256x256xbf16>, vector<64x256xf32> -> vector<64x256xf32>
    %13 = vector.shape_cast %6 : vector<64x256xf32> to vector<4x16x256xf32>
    %14 = vector.shape_cast %9 : vector<64x256xf32> to vector<4x16x256xf32>
    %15 = vector.shape_cast %12 : vector<64x256xf32> to vector<4x16x256xf32>
    %16 = vector.extract_strided_slice %13 {offsets = [0, 0, 0], sizes = [4, 15, 256], strides = [1, 1, 1]} : vector<4x16x256xf32> to vector<4x15x256xf32>
    %17 = tpu.concatenate %1, %16 in 1 : vector<4x1x256xf32>, vector<4x15x256xf32> -> vector<4x16x256xf32>
    %18 = vector.extract_strided_slice %15 {offsets = [0, 1, 0], sizes = [4, 15, 256], strides = [1, 1, 1]} : vector<4x16x256xf32> to vector<4x15x256xf32>
    %19 = tpu.concatenate %18, %1 in 1 : vector<4x15x256xf32>, vector<4x1x256xf32> -> vector<4x16x256xf32>
    %20 = arith.addf %14, %17 : vector<4x16x256xf32>
    %21 = arith.addf %20, %19 : vector<4x16x256xf32>
    %c0_12 = arith.constant 0 : index
    %c0_13 = arith.constant 0 : index
    %22 = vector.load %arg3[%c0_12, %c0_13] : memref<1x256xf32, #tpu.memory_space<vmem>>, vector<1x256xf32>
    %23 = vector.shape_cast %22 : vector<1x256xf32> to vector<1x1x256xf32>
    %24 = vector.broadcast %23 : vector<1x1x256xf32> to vector<4x16x256xf32>
    %25 = arith.addf %21, %24 : vector<4x16x256xf32>
    %cst_14 = arith.constant 0.000000e+00 : f32
    %26 = vector.broadcast %cst_14 : f32 to vector<4x16x256xf32>
    %27 = arith.maximumf %25, %26 : vector<4x16x256xf32>
    %28 = arith.truncf %27 : vector<4x16x256xf32> to vector<4x16x256xbf16>
    %29 = vector.shape_cast %28 : vector<4x16x256xbf16> to vector<64x256xbf16>
    %c0_15 = arith.constant 0 : index
    %c0_16 = arith.constant 0 : index
    %c0_17 = arith.constant 0 : index
    %30 = vector.load %arg4[%c0_15, %c0_16, %c0_17] : memref<3x256x256xbf16, #tpu.memory_space<vmem>>, vector<1x256x256xbf16>
    %31 = vector.shape_cast %30 : vector<1x256x256xbf16> to vector<256x256xbf16>
    %cst_18 = arith.constant dense<0.000000e+00> : vector<64x256xf32>
    %32 = tpu.matmul %29, %31, %cst_18 {dimension_numbers = #tpu.dot_dimension_numbers<[1], [0], [0], [1], [0, 0, 1, 1], [], []>} : vector<64x256xbf16>, vector<256x256xbf16>, vector<64x256xf32> -> vector<64x256xf32>
    %c1_19 = arith.constant 1 : index
    %c0_20 = arith.constant 0 : index
    %c0_21 = arith.constant 0 : index
    %33 = vector.load %arg4[%c1_19, %c0_20, %c0_21] : memref<3x256x256xbf16, #tpu.memory_space<vmem>>, vector<1x256x256xbf16>
    %34 = vector.shape_cast %33 : vector<1x256x256xbf16> to vector<256x256xbf16>
    %cst_22 = arith.constant dense<0.000000e+00> : vector<64x256xf32>
    %35 = tpu.matmul %29, %34, %cst_22 {dimension_numbers = #tpu.dot_dimension_numbers<[1], [0], [0], [1], [0, 0, 1, 1], [], []>} : vector<64x256xbf16>, vector<256x256xbf16>, vector<64x256xf32> -> vector<64x256xf32>
    %c2_23 = arith.constant 2 : index
    %c0_24 = arith.constant 0 : index
    %c0_25 = arith.constant 0 : index
    %36 = vector.load %arg4[%c2_23, %c0_24, %c0_25] : memref<3x256x256xbf16, #tpu.memory_space<vmem>>, vector<1x256x256xbf16>
    %37 = vector.shape_cast %36 : vector<1x256x256xbf16> to vector<256x256xbf16>
    %cst_26 = arith.constant dense<0.000000e+00> : vector<64x256xf32>
    %38 = tpu.matmul %29, %37, %cst_26 {dimension_numbers = #tpu.dot_dimension_numbers<[1], [0], [0], [1], [0, 0, 1, 1], [], []>} : vector<64x256xbf16>, vector<256x256xbf16>, vector<64x256xf32> -> vector<64x256xf32>
    %39 = vector.shape_cast %32 : vector<64x256xf32> to vector<4x16x256xf32>
    %40 = vector.shape_cast %35 : vector<64x256xf32> to vector<4x16x256xf32>
    %41 = vector.shape_cast %38 : vector<64x256xf32> to vector<4x16x256xf32>
    %42 = vector.extract_strided_slice %39 {offsets = [0, 0, 0], sizes = [4, 15, 256], strides = [1, 1, 1]} : vector<4x16x256xf32> to vector<4x15x256xf32>
    %43 = tpu.concatenate %1, %42 in 1 : vector<4x1x256xf32>, vector<4x15x256xf32> -> vector<4x16x256xf32>
    %44 = vector.extract_strided_slice %41 {offsets = [0, 1, 0], sizes = [4, 15, 256], strides = [1, 1, 1]} : vector<4x16x256xf32> to vector<4x15x256xf32>
    %45 = tpu.concatenate %44, %1 in 1 : vector<4x15x256xf32>, vector<4x1x256xf32> -> vector<4x16x256xf32>
    %46 = arith.addf %40, %43 : vector<4x16x256xf32>
    %47 = arith.addf %46, %45 : vector<4x16x256xf32>
    %c0_27 = arith.constant 0 : index
    %c0_28 = arith.constant 0 : index
    %48 = vector.load %arg5[%c0_27, %c0_28] : memref<1x256xf32, #tpu.memory_space<vmem>>, vector<1x256xf32>
    %49 = vector.shape_cast %48 : vector<1x256xf32> to vector<1x1x256xf32>
    %50 = vector.broadcast %49 : vector<1x1x256xf32> to vector<4x16x256xf32>
    %51 = arith.addf %47, %50 : vector<4x16x256xf32>
    %cst_29 = arith.constant dense<0.000000e+00> : vector<4x256xf32>
    %52 = vector.multi_reduction <add>, %51, %cst_29 [1] : vector<4x16x256xf32> to vector<4x256xf32>
    %53 = arith.truncf %52 : vector<4x256xf32> to vector<4x256xbf16>
    %c0_30 = arith.constant 0 : index
    %c0_31 = arith.constant 0 : index
    %54 = vector.load %arg10[%c0_30, %c0_31] : memref<256x16xbf16, #tpu.memory_space<vmem>>, vector<256x16xbf16>
    %cst_32 = arith.constant dense<0.000000e+00> : vector<4x16xf32>
    %55 = tpu.matmul %53, %54, %cst_32 {dimension_numbers = #tpu.dot_dimension_numbers<[1], [0], [0], [1], [0, 0, 1, 1], [], []>} : vector<4x256xbf16>, vector<256x16xbf16>, vector<4x16xf32> -> vector<4x16xf32>
    %cst_33 = arith.constant 3.906250e-03 : f32
    %56 = vector.broadcast %cst_33 : f32 to vector<4x16xf32>
    %57 = arith.mulf %55, %56 : vector<4x16xf32>
    %58 = arith.truncf %57 : vector<4x16xf32> to vector<4x16xbf16>
    %c0_34 = arith.constant 0 : index
    %c0_35 = arith.constant 0 : index
    %59 = vector.load %arg6[%c0_34, %c0_35] : memref<16x4xbf16, #tpu.memory_space<vmem>>, vector<16x4xbf16>
    %cst_36 = arith.constant dense<0.000000e+00> : vector<4x4xf32>
    %60 = tpu.matmul %58, %59, %cst_36 {dimension_numbers = #tpu.dot_dimension_numbers<[1], [0], [0], [1], [0, 0, 1, 1], [], []>} : vector<4x16xbf16>, vector<16x4xbf16>, vector<4x4xf32> -> vector<4x4xf32>
    %c0_37 = arith.constant 0 : index
    %c0_38 = arith.constant 0 : index
    %61 = vector.load %arg7[%c0_37, %c0_38] : memref<1x4xf32, #tpu.memory_space<vmem>>, vector<1x4xf32>
    %62 = vector.broadcast %61 : vector<1x4xf32> to vector<4x4xf32>
    %63 = arith.addf %60, %62 : vector<4x4xf32>
    %cst_39 = arith.constant 0.000000e+00 : f32
    %64 = vector.broadcast %cst_39 : f32 to vector<4x4xf32>
    %65 = arith.maximumf %63, %64 : vector<4x4xf32>
    %66 = arith.truncf %65 : vector<4x4xf32> to vector<4x4xbf16>
    %c0_40 = arith.constant 0 : index
    %c0_41 = arith.constant 0 : index
    %67 = vector.load %arg8[%c0_40, %c0_41] : memref<4x16xbf16, #tpu.memory_space<vmem>>, vector<4x16xbf16>
    %cst_42 = arith.constant dense<0.000000e+00> : vector<4x16xf32>
    %68 = tpu.matmul %66, %67, %cst_42 {dimension_numbers = #tpu.dot_dimension_numbers<[1], [0], [0], [1], [0, 0, 1, 1], [], []>} : vector<4x4xbf16>, vector<4x16xbf16>, vector<4x16xf32> -> vector<4x16xf32>
    %c0_43 = arith.constant 0 : index
    %c0_44 = arith.constant 0 : index
    %69 = vector.load %arg9[%c0_43, %c0_44] : memref<1x16xf32, #tpu.memory_space<vmem>>, vector<1x16xf32>
    %70 = vector.broadcast %69 : vector<1x16xf32> to vector<4x16xf32>
    %71 = arith.addf %68, %70 : vector<4x16xf32>
    %72 = arith.negf %71 : vector<4x16xf32>
    %73 = math.exp %72 : vector<4x16xf32>
    %cst_45 = arith.constant 1.000000e+00 : f32
    %74 = vector.broadcast %cst_45 : f32 to vector<4x16xf32>
    %75 = arith.addf %74, %73 : vector<4x16xf32>
    %76 = arith.divf %74, %75 : vector<4x16xf32>
    %77 = arith.truncf %76 : vector<4x16xf32> to vector<4x16xbf16>
    %c0_46 = arith.constant 0 : index
    %c0_47 = arith.constant 0 : index
    %78 = vector.load %arg11[%c0_46, %c0_47] : memref<16x256xbf16, #tpu.memory_space<vmem>>, vector<16x256xbf16>
    %cst_48 = arith.constant dense<0.000000e+00> : vector<4x256xf32>
    %79 = tpu.matmul %77, %78, %cst_48 {dimension_numbers = #tpu.dot_dimension_numbers<[1], [0], [0], [1], [0, 0, 1, 1], [], []>} : vector<4x16xbf16>, vector<16x256xbf16>, vector<4x256xf32> -> vector<4x256xf32>
    %80 = vector.shape_cast %79 : vector<4x256xf32> to vector<4x1x256xf32>
    %81 = vector.broadcast %80 : vector<4x1x256xf32> to vector<4x16x256xf32>
    %82 = arith.mulf %51, %81 : vector<4x16x256xf32>
    %83 = arith.addf %82, %0 : vector<4x16x256xf32>
    %c0_49 = arith.constant 0 : index
    %c0_50 = arith.constant 0 : index
    %c0_51 = arith.constant 0 : index
    %84 = vector.load %arg12[%c0_49, %c0_50, %c0_51] : memref<4x16x256xf32, #tpu.memory_space<vmem>>, vector<4x16x256xf32>
    tpu.vector_store %arg12[%c0_49, %c0_50, %c0_51], %83 {strides = array<i32>} : memref<4x16x256xf32, #tpu.memory_space<vmem>>, vector<4x16x256xf32>,
    return
  }
  func.func @transform_0(%arg0: i32) -> (i32, i32, i32) {
    %c0_i32 = arith.constant 0 : i32
    %c0_i32_0 = arith.constant 0 : i32
    %c0_i32_1 = arith.constant 0 : i32
    return %arg0, %c0_i32, %c0_i32_0 : i32, i32, i32
  }
  func.func @transform_1(%arg0: i32) -> (i32, i32, i32) {
    %c0_i32 = arith.constant 0 : i32
    %c0_i32_0 = arith.constant 0 : i32
    %c0_i32_1 = arith.constant 0 : i32
    %c0_i32_2 = arith.constant 0 : i32
    return %c0_i32, %c0_i32_0, %c0_i32_1 : i32, i32, i32
  }
  func.func @transform_2(%arg0: i32) -> (i32, i32) {
    %c0_i32 = arith.constant 0 : i32
    %c0_i32_0 = arith.constant 0 : i32
    %c0_i32_1 = arith.constant 0 : i32
    return %c0_i32, %c0_i32_0 : i32, i32
  }
  func.func @transform_3(%arg0: i32) -> (i32, i32, i32) {
    %c0_i32 = arith.constant 0 : i32
    %c0_i32_0 = arith.constant 0 : i32
    %c0_i32_1 = arith.constant 0 : i32
    %c0_i32_2 = arith.constant 0 : i32
    return %c0_i32, %c0_i32_0, %c0_i32_1 : i32, i32, i32
  }
  func.func @transform_4(%arg0: i32) -> (i32, i32) {
    %c0_i32 = arith.constant 0 : i32
    %c0_i32_0 = arith.constant 0 : i32
    %c0_i32_1 = arith.constant 0 : i32
    return %c0_i32, %c0_i32_0 : i32, i32
  }
  func.func @transform_5(%arg0: i32) -> (i32, i32) {
    %c0_i32 = arith.constant 0 : i32
    %c0_i32_0 = arith.constant 0 : i32
    %c0_i32_1 = arith.constant 0 : i32
    return %c0_i32, %c0_i32_0 : i32, i32
  }
  func.func @transform_6(%arg0: i32) -> (i32, i32) {
    %c0_i32 = arith.constant 0 : i32
    %c0_i32_0 = arith.constant 0 : i32
    %c0_i32_1 = arith.constant 0 : i32
    return %c0_i32, %c0_i32_0 : i32, i32
  }
  func.func @transform_7(%arg0: i32) -> (i32, i32) {
    %c0_i32 = arith.constant 0 : i32
    %c0_i32_0 = arith.constant 0 : i32
    %c0_i32_1 = arith.constant 0 : i32
    return %c0_i32, %c0_i32_0 : i32, i32
  }
  func.func @transform_8(%arg0: i32) -> (i32, i32) {
    %c0_i32 = arith.constant 0 : i32
    %c0_i32_0 = arith.constant 0 : i32
    %c0_i32_1 = arith.constant 0 : i32
    return %c0_i32, %c0_i32_0 : i32, i32
  }
  func.func @transform_9(%arg0: i32) -> (i32, i32) {
    %c0_i32 = arith.constant 0 : i32
    %c0_i32_0 = arith.constant 0 : i32
    %c0_i32_1 = arith.constant 0 : i32
    return %c0_i32, %c0_i32_0 : i32, i32
  }
  func.func @transform_10(%arg0: i32) -> (i32, i32) {
    %c0_i32 = arith.constant 0 : i32
    %c0_i32_0 = arith.constant 0 : i32
    %c0_i32_1 = arith.constant 0 : i32
    return %c0_i32, %c0_i32_0 : i32, i32
  }
  func.func @transform_11(%arg0: i32) -> (i32, i32, i32) {
    %c0_i32 = arith.constant 0 : i32
    %c0_i32_0 = arith.constant 0 : i32
    %c0_i32_1 = arith.constant 0 : i32
    return %arg0, %c0_i32, %c0_i32_0 : i32, i32, i32
  }
}

</mosaic_0001>

<llo_original>
// kernel: tile.39
$region0: #{tile.39}
  %s0 = inlined_call_operand.vmem [shape: bf16[16,16,16], index: 0, kind: input, shape index: {}]
  %s1 = inlined_call_operand.vmem [shape: bf16[16,256], index: 1, kind: output, shape index: {}]
  $region1: #{tile.39} parent=0
    #allocation0 [shape = 'u8[16384]{0}', space=vmem, size = 0x4000, scoped, tag = 'scoped mem for output reshape']
    #allocation1 [shape = 'u8[131072]{0}', space=vmem, size = 0x20000, scoped, tag = 'scoped mem for input reshape']
    %s3 = ssub.s32 256, 1
    %s4 = scalar_lea.vmem %s0, 124
    %s5 = sshrl.u32 %s3, 1
    %s6 = sor.u32 %s3, %s5
    %s7 = sand.u32 %s6, 85
    %s8 = sshrl.u32 %s7, 1
    %s9 = sor.u32 %s7, %s8
    %s10 = sand.u32 51, %s9
    %s11 = sshrl.u32 %s10, 2
    %s12 = sor.u32 %s10, %s11
    %s13 = sand.u32 15, %s12
    %v14 = vld [vmem:[%s4] sm:%s13]
    %v15 = vunpack.c.l.bf16 %v14
    %v16 = vunpack.c.h.bf16 %v14
    %s17 = scalar_lea.vmem [#allocation1], 248
    %18 = vst [vmem:[%s17] sm:%s3] %v15
    %s19 = scalar_lea.vmem %s0, 120
    %s20 = sshrl.u32 %s3, 1
    %s21 = sor.u32 %s3, %s20
    %s22 = sand.u32 %s21, 85
    %s23 = sshrl.u32 %s22, 1
    %s24 = sor.u32 %s22, %s23
    %s25 = sand.u32 51, %s24
    %s26 = sshrl.u32 %s25, 2
    %s27 = sor.u32 %s25, %s26
    %s28 = sand.u32 15, %s27
    %v29 = vld [vmem:[%s19] sm:%s28]
    %v30 = vunpack.c.l.bf16 %v29
    %v31 = vunpack.c.h.bf16 %v29
    %s32 = scalar_lea.vmem [#allocation1], 240
    %33 = vst [vmem:[%s32] sm:%s3] %v30
    %s34 = scalar_lea.vmem %s0, 116
    %s35 = sshrl.u32 %s3, 1
    %s36 = sor.u32 %s3, %s35
    %s37 = sand.u32 %s36, 85
    %s38 = sshrl.u32 %s37, 1
    %s39 = sor.u32 %s37, %s38
    %s40 = sand.u32 51, %s39
    %s41 = sshrl.u32 %s40, 2
    %s42 = sor.u32 %s40, %s41
    %s43 = sand.u32 15, %s42
    %v44 = vld [vmem:[%s34] sm:%s43]
    %v45 = vunpack.c.l.bf16 %v44
    %v46 = vunpack.c.h.bf16 %v44
    %s47 = scalar_lea.vmem [#allocation1], 232
    %48 = vst [vmem:[%s47] sm:%s3] %v45
    %s49 = scalar_lea.vmem %s0, 112
    %s50 = sshrl.u32 %s3, 1
    %s51 = sor.u32 %s3, %s50
    %s52 = sand.u32 %s51, 85
    %s53 = sshrl.u32 %s52, 1
    %s54 = sor.u32 %s52, %s53
    %s55 = sand.u32 51, %s54
    %s56 = sshrl.u32 %s55, 2
    %s57 = sor.u32 %s55, %s56
    %s58 = sand.u32 15, %s57
    %v59 = vld [vmem:[%s49] sm:%s58]
    %v60 = vunpack.c.l.bf16 %v59
    %v61 = vunpack.c.h.bf16 %v59
    %s62 = scalar_lea.vmem [#allocation1], 224
    %63 = vst [vmem:[%s62] sm:%s3] %v60
    %s64 = scalar_lea.vmem %s0, 108
    %s65 = sshrl.u32 %s3, 1
    %s66 = sor.u32 %s3, %s65
    %s67 = sand.u32 %s66, 85
    %s68 = sshrl.u32 %s67, 1
    %s69 = sor.u32 %s67, %s68
    %s70 = sand.u32 51, %s69
    %s71 = sshrl.u32 %s70, 2
    %s72 = sor.u32 %s70, %s71
    %s73 = sand.u32 15, %s72
    %v74 = vld [vmem:[%s64] sm:%s73]
    %v75 = vunpack.c.l.bf16 %v74
    %v76 = vunpack.c.h.bf16 %v74
    %s77 = scalar_lea.vmem [#allocation1], 216
    %78 = vst [vmem:[%s77] sm:%s3] %v75
    %s79 = scalar_lea.vmem %s0, 104
    %s80 = sshrl.u32 %s3, 1
    %s81 = sor.u32 %s3, %s80
    %s82 = sand.u32 %s81, 85
    %s83 = sshrl.u32 %s82, 1
    %s84 = sor.u32 %s82, %s83
    %s85 = sand.u32 51, %s84
    %s86 = sshrl.u32 %s85, 2
    %s87 = sor.u32 %s85, %s86
    %s88 = sand.u32 15, %s87
    %v89 = vld [vmem:[%s79] sm:%s88]
    %v90 = vunpack.c.l.bf16 %v89
    %v91 = vunpack.c.h.bf16 %v89
    %s92 = scalar_lea.vmem [#allocation1], 208
    %93 = vst [vmem:[%s92] sm:%s3] %v90
    %s94 = scalar_lea.vmem %s0, 100
    %s95 = sshrl.u32 %s3, 1
    %s96 = sor.u32 %s3, %s95
    %s97 = sand.u32 %s96, 85
    %s98 = sshrl.u32 %s97, 1
    %s99 = sor.u32 %s97, %s98
    %s100 = sand.u32 51, %s99
    %s101 = sshrl.u32 %s100, 2
    %s102 = sor.u32 %s100, %s101
    %s103 = sand.u32 15, %s102
    %v104 = vld [vmem:[%s94] sm:%s103]
    %v105 = vunpack.c.l.bf16 %v104
    %v106 = vunpack.c.h.bf16 %v104
    %s107 = scalar_lea.vmem [#allocation1], 200
    %108 = vst [vmem:[%s107] sm:%s3] %v105
    %s109 = scalar_lea.vmem %s0, 96
    %s110 = sshrl.u32 %s3, 1
    %s111 = sor.u32 %s3, %s110
    %s112 = sand.u32 %s111, 85
    %s113 = sshrl.u32 %s112, 1
    %s114 = sor.u32 %s112, %s113
    %s115 = sand.u32 51, %s114
    %s116 = sshrl.u32 %s115, 2
    %s117 = sor.u32 %s115, %s116
    %s118 = sand.u32 15, %s117
    %v119 = vld [vmem:[%s109] sm:%s118]
    %v120 = vunpack.c.l.bf16 %v119
    %v121 = vunpack.c.h.bf16 %v119
    %s122 = scalar_lea.vmem [#allocation1], 192
    %123 = vst [vmem:[%s122] sm:%s3] %v120
    %s124 = scalar_lea.vmem %s0, 92
    %s125 = sshrl.u32 %s3, 1
    %s126 = sor.u32 %s3, %s125
    %s127 = sand.u32 %s126, 85
    %s128 = sshrl.u32 %s127, 1
    %s129 = sor.u32 %s127, %s128
    %s130 = sand.u32 51, %s129
    %s131 = sshrl.u32 %s130, 2
    %s132 = sor.u32 %s130, %s131
    %s133 = sand.u32 15, %s132
    %v134 = vld [vmem:[%s124] sm:%s133]
    %v135 = vunpack.c.l.bf16 %v134
    %v136 = vunpack.c.h.bf16 %v134
    %s137 = scalar_lea.vmem [#allocation1], 184
    %138 = vst [vmem:[%s137] sm:%s3] %v135
    %s139 = scalar_lea.vmem %s0, 88
    %s140 = sshrl.u32 %s3, 1
    %s141 = sor.u32 %s3, %s140
    %s142 = sand.u32 %s141, 85
    %s143 = sshrl.u32 %s142, 1
    %s144 = sor.u32 %s142, %s143
    %s145 = sand.u32 51, %s144
    %s146 = sshrl.u32 %s145, 2
    %s147 = sor.u32 %s145, %s146
    %s148 = sand.u32 15, %s147
    %v149 = vld [vmem:[%s139] sm:%s148]
    %v150 = vunpack.c.l.bf16 %v149
    %v151 = vunpack.c.h.bf16 %v149
    %s152 = scalar_lea.vmem [#allocation1], 176
    %153 = vst [vmem:[%s152] sm:%s3] %v150
    %s154 = scalar_lea.vmem %s0, 84
    %s155 = sshrl.u32 %s3, 1
    %s156 = sor.u32 %s3, %s155
    %s157 = sand.u32 %s156, 85
    %s158 = sshrl.u32 %s157, 1
    %s159 = sor.u32 %s157, %s158
    %s160 = sand.u32 51, %s159
    %s161 = sshrl.u32 %s160, 2
    %s162 = sor.u32 %s160, %s161
    %s163 = sand.u32 15, %s162
    %v164 = vld [vmem:[%s154] sm:%s163]
    %v165 = vunpack.c.l.bf16 %v164
    %v166 = vunpack.c.h.bf16 %v164
    %s167 = scalar_lea.vmem [#allocation1], 168
    %168 = vst [vmem:[%s167] sm:%s3] %v165
    %s169 = scalar_lea.vmem %s0, 80
    %s170 = sshrl.u32 %s3, 1
    %s171 = sor.u32 %s3, %s170
    %s172 = sand.u32 %s171, 85
    %s173 = sshrl.u32 %s172, 1
    %s174 = sor.u32 %s172, %s173
    %s175 = sand.u32 51, %s174
    %s176 = sshrl.u32 %s175, 2
    %s177 = sor.u32 %s175, %s176
    %s178 = sand.u32 15, %s177
    %v179 = vld [vmem:[%s169] sm:%s178]
    %v180 = vunpack.c.l.bf16 %v179
    %v181 = vunpack.c.h.bf16 %v179
    %s182 = scalar_lea.vmem [#allocation1], 160
    %183 = vst [vmem:[%s182] sm:%s3] %v180
    %s184 = scalar_lea.vmem %s0, 76
    %s185 = sshrl.u32 %s3, 1
    %s186 = sor.u32 %s3, %s185
    %s187 = sand.u32 %s186, 85
    %s188 = sshrl.u32 %s187, 1
    %s189 = sor.u32 %s187, %s188
    %s190 = sand.u32 51, %s189
    %s191 = sshrl.u32 %s190, 2
    %s192 = sor.u32 %s190, %s191
    %s193 = sand.u32 15, %s192
    %v194 = vld [vmem:[%s184] sm:%s193]
    %v195 = vunpack.c.l.bf16 %v194
    %v196 = vunpack.c.h.bf16 %v194
    %s197 = scalar_lea.vmem [#allocation1], 152
    %198 = vst [vmem:[%s197] sm:%s3] %v195
    %s199 = scalar_lea.vmem %s0, 72
    %s200 = sshrl.u32 %s3, 1
    %s201 = sor.u32 %s3, %s200
    %s202 = sand.u32 %s201, 85
    %s203 = sshrl.u32 %s202, 1
    %s204 = sor.u32 %s202, %s203
    %s205 = sand.u32 51, %s204
    %s206 = sshrl.u32 %s205, 2
    %s207 = sor.u32 %s205, %s206
    %s208 = sand.u32 15, %s207
    %v209 = vld [vmem:[%s199] sm:%s208]
    %v210 = vunpack.c.l.bf16 %v209
    %v211 = vunpack.c.h.bf16 %v209
    %s212 = scalar_lea.vmem [#allocation1], 144
    %213 = vst [vmem:[%s212] sm:%s3] %v210
    %s214 = scalar_lea.vmem %s0, 68
    %s215 = sshrl.u32 %s3, 1
    %s216 = sor.u32 %s3, %s215
    %s217 = sand.u32 %s216, 85
    %s218 = sshrl.u32 %s217, 1
    %s219 = sor.u32 %s217, %s218
    %s220 = sand.u32 51, %s219
    %s221 = sshrl.u32 %s220, 2
    %s222 = sor.u32 %s220, %s221
    %s223 = sand.u32 15, %s222
    %v224 = vld [vmem:[%s214] sm:%s223]
    %v225 = vunpack.c.l.bf16 %v224
    %v226 = vunpack.c.h.bf16 %v224
    %s227 = scalar_lea.vmem [#allocation1], 136
    %228 = vst [vmem:[%s227] sm:%s3] %v225
    %s229 = scalar_lea.vmem %s0, 64
    %s230 = sshrl.u32 %s3, 1
    %s231 = sor.u32 %s3, %s230
    %s232 = sand.u32 %s231, 85
    %s233 = sshrl.u32 %s232, 1
    %s234 = sor.u32 %s232, %s233
    %s235 = sand.u32 51, %s234
    %s236 = sshrl.u32 %s235, 2
    %s237 = sor.u32 %s235, %s236
    %s238 = sand.u32 15, %s237
    %v239 = vld [vmem:[%s229] sm:%s238]
    %v240 = vunpack.c.l.bf16 %v239
    %v241 = vunpack.c.h.bf16 %v239
    %s242 = scalar_lea.vmem [#allocation1], 128
    %243 = vst [vmem:[%s242] sm:%s3] %v240
    %s244 = scalar_lea.vmem %s0, 60
    %s245 = sshrl.u32 %s3, 1
    %s246 = sor.u32 %s3, %s245
    %s247 = sand.u32 %s246, 85
    %s248 = sshrl.u32 %s247, 1
    %s249 = sor.u32 %s247, %s248
    %s250 = sand.u32 51, %s249
    %s251 = sshrl.u32 %s250, 2
    %s252 = sor.u32 %s250, %s251
    %s253 = sand.u32 15, %s252
    %v254 = vld [vmem:[%s244] sm:%s253]
    %v255 = vunpack.c.l.bf16 %v254
    %v256 = vunpack.c.h.bf16 %v254
    %s257 = scalar_lea.vmem [#allocation1], 120
    %258 = vst [vmem:[%s257] sm:%s3] %v255
    %s259 = scalar_lea.vmem %s0, 56
    %s260 = sshrl.u32 %s3, 1
    %s261 = sor.u32 %s3, %s260
    %s262 = sand.u32 %s261, 85
    %s263 = sshrl.u32 %s262, 1
    %s264 = sor.u32 %s262, %s263
    %s265 = sand.u32 51, %s264
    %s266 = sshrl.u32 %s265, 2
    %s267 = sor.u32 %s265, %s266
    %s268 = sand.u32 15, %s267
    %v269 = vld [vmem:[%s259] sm:%s268]
    %v270 = vunpack.c.l.bf16 %v269
    %v271 = vunpack.c.h.bf16 %v269
    %s272 = scalar_lea.vmem [#allocation1], 112
    %273 = vst [vmem:[%s272] sm:%s3] %v270
    %s274 = scalar_lea.vmem %s0, 52
    %s275 = sshrl.u32 %s3, 1
    %s276 = sor.u32 %s3, %s275
    %s277 = sand.u32 %s276, 85
    %s278 = sshrl.u32 %s277, 1
    %s279 = sor.u32 %s277, %s278
    %s280 = sand.u32 51, %s279
    %s281 = sshrl.u32 %s280, 2
    %s282 = sor.u32 %s280, %s281
    %s283 = sand.u32 15, %s282
    %v284 = vld [vmem:[%s274] sm:%s283]
    %v285 = vunpack.c.l.bf16 %v284
    %v286 = vunpack.c.h.bf16 %v284
    %s287 = scalar_lea.vmem [#allocation1], 104
    %288 = vst [vmem:[%s287] sm:%s3] %v285
    %s289 = scalar_lea.vmem %s0, 48
    %s290 = sshrl.u32 %s3, 1
    %s291 = sor.u32 %s3, %s290
    %s292 = sand.u32 %s291, 85
    %s293 = sshrl.u32 %s292, 1
    %s294 = sor.u32 %s292, %s293
    %s295 = sand.u32 51, %s294
    %s296 = sshrl.u32 %s295, 2
    %s297 = sor.u32 %s295, %s296
    %s298 = sand.u32 15, %s297
    %v299 = vld [vmem:[%s289] sm:%s298]
    %v300 = vunpack.c.l.bf16 %v299
    %v301 = vunpack.c.h.bf16 %v299
    %s302 = scalar_lea.vmem [#allocation1], 96
    %303 = vst [vmem:[%s302] sm:%s3] %v300
    %s304 = scalar_lea.vmem %s0, 44
    %s305 = sshrl.u32 %s3, 1
    %s306 = sor.u32 %s3, %s305
    %s307 = sand.u32 %s306, 85
    %s308 = sshrl.u32 %s307, 1
    %s309 = sor.u32 %s307, %s308
    %s310 = sand.u32 51, %s309
    %s311 = sshrl.u32 %s310, 2
    %s312 = sor.u32 %s310, %s311
    %s313 = sand.u32 15, %s312
    %v314 = vld [vmem:[%s304] sm:%s313]
    %v315 = vunpack.c.l.bf16 %v314
    %v316 = vunpack.c.h.bf16 %v314
    %s317 = scalar_lea.vmem [#allocation1], 88
    %318 = vst [vmem:[%s317] sm:%s3] %v315
    %s319 = scalar_lea.vmem %s0, 40
    %s320 = sshrl.u32 %s3, 1
    %s321 = sor.u32 %s3, %s320
    %s322 = sand.u32 %s321, 85
    %s323 = sshrl.u32 %s322, 1
    %s324 = sor.u32 %s322, %s323
    %s325 = sand.u32 51, %s324
    %s326 = sshrl.u32 %s325, 2
    %s327 = sor.u32 %s325, %s326
    %s328 = sand.u32 15, %s327
    %v329 = vld [vmem:[%s319] sm:%s328]
    %v330 = vunpack.c.l.bf16 %v329
    %v331 = vunpack.c.h.bf16 %v329
    %s332 = scalar_lea.vmem [#allocation1], 80
    %333 = vst [vmem:[%s332] sm:%s3] %v330
    %s334 = scalar_lea.vmem %s0, 36
    %s335 = sshrl.u32 %s3, 1
    %s336 = sor.u32 %s3, %s335
    %s337 = sand.u32 %s336, 85
    %s338 = sshrl.u32 %s337, 1
    %s339 = sor.u32 %s337, %s338
    %s340 = sand.u32 51, %s339
    %s341 = sshrl.u32 %s340, 2
    %s342 = sor.u32 %s340, %s341
    %s343 = sand.u32 15, %s342
    %v344 = vld [vmem:[%s334] sm:%s343]
    %v345 = vunpack.c.l.bf16 %v344
    %v346 = vunpack.c.h.bf16 %v344
    %s347 = scalar_lea.vmem [#allocation1], 72
    %348 = vst [vmem:[%s347] sm:%s3] %v345
    %s349 = scalar_lea.vmem %s0, 32
    %s350 = sshrl.u32 %s3, 1
    %s351 = sor.u32 %s3, %s350
    %s352 = sand.u32 %s351, 85
    %s353 = sshrl.u32 %s352, 1
    %s354 = sor.u32 %s352, %s353
    %s355 = sand.u32 51, %s354
    %s356 = sshrl.u32 %s355, 2
    %s357 = sor.u32 %s355, %s356
    %s358 = sand.u32 15, %s357
    %v359 = vld [vmem:[%s349] sm:%s358]
    %v360 = vunpack.c.l.bf16 %v359
    %v361 = vunpack.c.h.bf16 %v359
    %s362 = scalar_lea.vmem [#allocation1], 64
    %363 = vst [vmem:[%s362] sm:%s3] %v360
    %s364 = scalar_lea.vmem %s0, 28
    %s365 = sshrl.u32 %s3, 1
    %s366 = sor.u32 %s3, %s365
    %s367 = sand.u32 %s366, 85
    %s368 = sshrl.u32 %s367, 1
    %s369 = sor.u32 %s367, %s368
    %s370 = sand.u32 51, %s369
    %s371 = sshrl.u32 %s370, 2
    %s372 = sor.u32 %s370, %s371
    %s373 = sand.u32 15, %s372
    %v374 = vld [vmem:[%s364] sm:%s373]
    %v375 = vunpack.c.l.bf16 %v374
    %v376 = vunpack.c.h.bf16 %v374
    %s377 = scalar_lea.vmem [#allocation1], 56
    %378 = vst [vmem:[%s377] sm:%s3] %v375
    %s379 = scalar_lea.vmem %s0, 24
    %s380 = sshrl.u32 %s3, 1
    %s381 = sor.u32 %s3, %s380
    %s382 = sand.u32 %s381, 85
    %s383 = sshrl.u32 %s382, 1
    %s384 = sor.u32 %s382, %s383
    %s385 = sand.u32 51, %s384
    %s386 = sshrl.u32 %s385, 2
    %s387 = sor.u32 %s385, %s386
    %s388 = sand.u32 15, %s387
    %v389 = vld [vmem:[%s379] sm:%s388]
    %v390 = vunpack.c.l.bf16 %v389
    %v391 = vunpack.c.h.bf16 %v389
    %s392 = scalar_lea.vmem [#allocation1], 48
    %393 = vst [vmem:[%s392] sm:%s3] %v390
    %s394 = scalar_lea.vmem %s0, 20
    %s395 = sshrl.u32 %s3, 1
    %s396 = sor.u32 %s3, %s395
    %s397 = sand.u32 %s396, 85
    %s398 = sshrl.u32 %s397, 1
    %s399 = sor.u32 %s397, %s398
    %s400 = sand.u32 51, %s399
    %s401 = sshrl.u32 %s400, 2
    %s402 = sor.u32 %s400, %s401
    %s403 = sand.u32 15, %s402
    %v404 = vld [vmem:[%s394] sm:%s403]
    %v405 = vunpack.c.l.bf16 %v404
    %v406 = vunpack.c.h.bf16 %v404
    %s407 = scalar_lea.vmem [#allocation1], 40
    %408 = vst [vmem:[%s407] sm:%s3] %v405
    %s409 = scalar_lea.vmem %s0, 16
    %s410 = sshrl.u32 %s3, 1
    %s411 = sor.u32 %s3, %s410
    %s412 = sand.u32 %s411, 85
    %s413 = sshrl.u32 %s412, 1
    %s414 = sor.u32 %s412, %s413
    %s415 = sand.u32 51, %s414
    %s416 = sshrl.u32 %s415, 2
    %s417 = sor.u32 %s415, %s416
    %s418 = sand.u32 15, %s417
    %v419 = vld [vmem:[%s409] sm:%s418]
    %v420 = vunpack.c.l.bf16 %v419
    %v421 = vunpack.c.h.bf16 %v419
    %s422 = scalar_lea.vmem [#allocation1], 32
    %423 = vst [vmem:[%s422] sm:%s3] %v420
    %s424 = scalar_lea.vmem %s0, 12
    %s425 = sshrl.u32 %s3, 1
    %s426 = sor.u32 %s3, %s425
    %s427 = sand.u32 %s426, 85
    %s428 = sshrl.u32 %s427, 1
    %s429 = sor.u32 %s427, %s428
    %s430 = sand.u32 51, %s429
    %s431 = sshrl.u32 %s430, 2
    %s432 = sor.u32 %s430, %s431
    %s433 = sand.u32 15, %s432
    %v434 = vld [vmem:[%s424] sm:%s433]
    %v435 = vunpack.c.l.bf16 %v434
    %v436 = vunpack.c.h.bf16 %v434
    %s437 = scalar_lea.vmem [#allocation1], 24
    %438 = vst [vmem:[%s437] sm:%s3] %v435
    %s439 = scalar_lea.vmem %s0, 8
    %s440 = sshrl.u32 %s3, 1
    %s441 = sor.u32 %s3, %s440
    %s442 = sand.u32 %s441, 85
    %s443 = sshrl.u32 %s442, 1
    %s444 = sor.u32 %s442, %s443
    %s445 = sand.u32 51, %s444
    %s446 = sshrl.u32 %s445, 2
    %s447 = sor.u32 %s445, %s446
    %s448 = sand.u32 15, %s447
    %v449 = vld [vmem:[%s439] sm:%s448]
    %v450 = vunpack.c.l.bf16 %v449
    %v451 = vunpack.c.h.bf16 %v449
    %s452 = scalar_lea.vmem [#allocation1], 16
    %453 = vst [vmem:[%s452] sm:%s3] %v450
    %s454 = scalar_lea.vmem %s0, 4
    %s455 = sshrl.u32 %s3, 1
    %s456 = sor.u32 %s3, %s455
    %s457 = sand.u32 %s456, 85
    %s458 = sshrl.u32 %s457, 1
    %s459 = sor.u32 %s457, %s458
    %s460 = sand.u32 51, %s459
    %s461 = sshrl.u32 %s460, 2
    %s462 = sor.u32 %s460, %s461
    %s463 = sand.u32 15, %s462
    %v464 = vld [vmem:[%s454] sm:%s463]
    %v465 = vunpack.c.l.bf16 %v464
    %v466 = vunpack.c.h.bf16 %v464
    %s467 = scalar_lea.vmem [#allocation1], 8
    %468 = vst [vmem:[%s467] sm:%s3] %v465
    %s469 = sshrl.u32 %s3, 1
    %s470 = sor.u32 %s3, %s469
    %s471 = sand.u32 %s470, 85
    %s472 = sshrl.u32 %s471, 1
    %s473 = sor.u32 %s471, %s472
    %s474 = sand.u32 51, %s473
    %s475 = sshrl.u32 %s474, 2
    %s476 = sor.u32 %s474, %s475
    %s477 = sand.u32 15, %s476
    %v478 = vld [vmem:[%s0] sm:%s477]
    %v479 = vunpack.c.l.bf16 %v478
    %v480 = vunpack.c.h.bf16 %v478
    %481 = vst [vmem:[#allocation1] sm:%s3] %v479
    %v482 = vld [vmem:[#allocation1] ss:$8 sm:$0xf]
    %v483 = vld [vmem:[#allocation1] ss:$8 sm:$0xf0]
    %vm484 = vcmask 1047556
    %v485 = vsel %vm484, %v483, %v482
    %vm486 = vcmask 130048
    %487 = vst.msk [vmem:[#allocation0] ss:$8 sm:$0x3] %vm486, %v485
    %s488 = scalar_lea.vmem [#allocation0], 4294967281
    %489 = vst.msk [vmem:[%s488] ss:$8 sm:$0xc] %vm486, %v485
    %s490 = scalar_lea.vmem [#allocation0], 4294967266
    %491 = vst.msk [vmem:[%s490] ss:$8 sm:$0x30] %vm486, %v485
    %s492 = scalar_lea.vmem [#allocation0], 4294967251
    %493 = vst.msk [vmem:[%s492] ss:$8 sm:$0xc0] %vm486, %v485
    %s494 = scalar_lea.vmem [#allocation1], 64
    %v495 = vld [vmem:[%s494] ss:$8 sm:$0xf]
    %s496 = scalar_lea.vmem [#allocation1], 64
    %v497 = vld [vmem:[%s496] ss:$8 sm:$0xf0]
    %vm498 = vcmask 1047556
    %v499 = vsel %vm498, %v497, %v495
    %vm500 = vcmask 130048
    %s501 = scalar_lea.vmem [#allocation0], 4
    %502 = vst.msk [vmem:[%s501] ss:$8 sm:$0x3] %vm500, %v499
    %s503 = scalar_lea.vmem [#allocation0], 4294967285
    %504 = vst.msk [vmem:[%s503] ss:$8 sm:$0xc] %vm500, %v499
    %s505 = scalar_lea.vmem [#allocation0], 4294967270
    %506 = vst.msk [vmem:[%s505] ss:$8 sm:$0x30] %vm500, %v499
    %s507 = scalar_lea.vmem [#allocation0], 4294967255
    %508 = vst.msk [vmem:[%s507] ss:$8 sm:$0xc0] %vm500, %v499
    %s509 = scalar_lea.vmem [#allocation1], 128
    %v510 = vld [vmem:[%s509] ss:$8 sm:$0xf]
    %s511 = scalar_lea.vmem [#allocation1], 128
    %v512 = vld [vmem:[%s511] ss:$8 sm:$0xf0]
    %vm513 = vcmask 1047556
    %v514 = vsel %vm513, %v512, %v510
    %vm515 = vcmask 130048
    %s516 = scalar_lea.vmem [#allocation0], 16
    %517 = vst.msk [vmem:[%s516] ss:$8 sm:$0x3] %vm515, %v514
    %s518 = scalar_lea.vmem [#allocation0], 1
    %519 = vst.msk [vmem:[%s518] ss:$8 sm:$0xc] %vm515, %v514
    %s520 = scalar_lea.vmem [#allocation0], 4294967282
    %521 = vst.msk [vmem:[%s520] ss:$8 sm:$0x30] %vm515, %v514
    %s522 = scalar_lea.vmem [#allocation0], 4294967267
    %523 = vst.msk [vmem:[%s522] ss:$8 sm:$0xc0] %vm515, %v514
    %s524 = scalar_lea.vmem [#allocation1], 192
    %v525 = vld [vmem:[%s524] ss:$8 sm:$0xf]
    %s526 = scalar_lea.vmem [#allocation1], 192
    %v527 = vld [vmem:[%s526] ss:$8 sm:$0xf0]
    %vm528 = vcmask 1047556
    %v529 = vsel %vm528, %v527, %v525
    %vm530 = vcmask 130048
    %s531 = scalar_lea.vmem [#allocation0], 20
    %532 = vst.msk [vmem:[%s531] ss:$8 sm:$0x3] %vm530, %v529
    %s533 = scalar_lea.vmem [#allocation0], 5
    %534 = vst.msk [vmem:[%s533] ss:$8 sm:$0xc] %vm530, %v529
    %s535 = scalar_lea.vmem [#allocation0], 4294967286
    %536 = vst.msk [vmem:[%s535] ss:$8 sm:$0x30] %vm530, %v529
    %s537 = scalar_lea.vmem [#allocation0], 4294967271
    %538 = vst.msk [vmem:[%s537] ss:$8 sm:$0xc0] %vm530, %v529
    %s539 = scalar_lea.vmem [#allocation1], 7
    %s540 = smov 3
    %v541 = vld [vmem:[%s539] ss:$16 sm:%s540]
    %s542 = scalar_lea.vmem [#allocation1], 7
    %s543 = smov 12
    %v544 = vld [vmem:[%s542] ss:$16 sm:%s543]
    %vm545 = vcmask 1043458
    %v546 = vsel %vm545, %v544, %v541
    %s547 = scalar_lea.vmem [#allocation1], 7
    %s548 = smov 48
    %v549 = vld [vmem:[%s547] ss:$16 sm:%s548]
    %vm550 = vcmask 1045508
    %v551 = vsel %vm550, %v549, %v546
    %s552 = scalar_lea.vmem [#allocation1], 7
    %s553 = smov 192
    %v554 = vld [vmem:[%s552] ss:$16 sm:%s553]
    %vm555 = vcmask 1047558
    %v556 = vsel %vm555, %v554, %v551
    %557 = vrot.lane.b32.xlu0 %v556, 112
    %v558 = vpop.permute.xlu0 %557
    %vm559 = vcmask 1048448
    %560 = vst.msk [vmem:[#allocation0] sm:$0xff] %vm559, %v558
    %s561 = scalar_lea.vmem [#allocation1], 15
    %s562 = smov 3
    %v563 = vld [vmem:[%s561] ss:$16 sm:%s562]
    %s564 = scalar_lea.vmem [#allocation1], 15
    %s565 = smov 12
    %v566 = vld [vmem:[%s564] ss:$16 sm:%s565]
    %vm567 = vcmask 1043458
    %v568 = vsel %vm567, %v566, %v563
    %s569 = scalar_lea.vmem [#allocation1], 15
    %s570 = smov 48
    %v571 = vld [vmem:[%s569] ss:$16 sm:%s570]
    %vm572 = vcmask 1045508
    %v573 = vsel %vm572, %v571, %v568
    %s574 = scalar_lea.vmem [#allocation1], 15
    %s575 = smov 192
    %v576 = vld [vmem:[%s574] ss:$16 sm:%s575]
    %vm577 = vcmask 1047558
    %v578 = vsel %vm577, %v576, %v573
    %579 = vrot.lane.b32.xlu0 %v578, 112
    %v580 = vpop.permute.xlu0 %579
    %vm581 = vcmask 1048448
    %s582 = scalar_lea.vmem [#allocation0], 8
    %583 = vst.msk [vmem:[%s582] sm:$0xff] %vm581, %v580
    %s584 = scalar_lea.vmem [#allocation1], 135
    %s585 = smov 3
    %v586 = vld [vmem:[%s584] ss:$16 sm:%s585]
    %s587 = scalar_lea.vmem [#allocation1], 135
    %s588 = smov 12
    %v589 = vld [vmem:[%s587] ss:$16 sm:%s588]
    %vm590 = vcmask 1043458
    %v591 = vsel %vm590, %v589, %v586
    %s592 = scalar_lea.vmem [#allocation1], 135
    %s593 = smov 48
    %v594 = vld [vmem:[%s592] ss:$16 sm:%s593]
    %vm595 = vcmask 1045508
    %v596 = vsel %vm595, %v594, %v591
    %s597 = scalar_lea.vmem [#allocation1], 135
    %s598 = smov 192
    %v599 = vld [vmem:[%s597] ss:$16 sm:%s598]
    %vm600 = vcmask 1047558
    %v601 = vsel %vm600, %v599, %v596
    %602 = vrot.lane.b32.xlu0 %v601, 112
    %v603 = vpop.permute.xlu0 %602
    %vm604 = vcmask 1048448
    %s605 = scalar_lea.vmem [#allocation0], 16
    %606 = vst.msk [vmem:[%s605] sm:$0xff] %vm604, %v603
    %s607 = scalar_lea.vmem [#allocation1], 143
    %s608 = smov 3
    %v609 = vld [vmem:[%s607] ss:$16 sm:%s608]
    %s610 = scalar_lea.vmem [#allocation1], 143
    %s611 = smov 12
    %v612 = vld [vmem:[%s610] ss:$16 sm:%s611]
    %vm613 = vcmask 1043458
    %v614 = vsel %vm613, %v612, %v609
    %s615 = scalar_lea.vmem [#allocation1], 143
    %s616 = smov 48
    %v617 = vld [vmem:[%s615] ss:$16 sm:%s616]
    %vm618 = vcmask 1045508
    %v619 = vsel %vm618, %v617, %v614
    %s620 = scalar_lea.vmem [#allocation1], 143
    %s621 = smov 192
    %v622 = vld [vmem:[%s620] ss:$16 sm:%s621]
    %vm623 = vcmask 1047558
    %v624 = vsel %vm623, %v622, %v619
    %625 = vrot.lane.b32.xlu0 %v624, 112
    %v626 = vpop.permute.xlu0 %625
    %vm627 = vcmask 1048448
    %s628 = scalar_lea.vmem [#allocation0], 24
    %629 = vst.msk [vmem:[%s628] sm:$0xff] %vm627, %v626
    %s630 = scalar_lea.vmem [#allocation1], 6
    %s631 = smov 3
    %v632 = vld [vmem:[%s630] ss:$16 sm:%s631]
    %s633 = scalar_lea.vmem [#allocation1], 6
    %s634 = smov 12
    %v635 = vld [vmem:[%s633] ss:$16 sm:%s634]
    %vm636 = vcmask 1043458
    %v637 = vsel %vm636, %v635, %v632
    %s638 = scalar_lea.vmem [#allocation1], 6
    %s639 = smov 48
    %v640 = vld [vmem:[%s638] ss:$16 sm:%s639]
    %vm641 = vcmask 1045508
    %v642 = vsel %vm641, %v640, %v637
    %s643 = scalar_lea.vmem [#allocation1], 6
    %s644 = smov 192
    %v645 = vld [vmem:[%s643] ss:$16 sm:%s644]
    %vm646 = vcmask 1047558
    %v647 = vsel %vm646, %v645, %v642
    %648 = vrot.lane.b32.xlu0 %v647, 96
    %v649 = vpop.permute.xlu0 %648
    %vm650 = vcmask 917248
    %651 = vst.msk [vmem:[#allocation0] sm:$0xff] %vm650, %v649
    %s652 = scalar_lea.vmem [#allocation1], 14
    %s653 = smov 3
    %v654 = vld [vmem:[%s652] ss:$16 sm:%s653]
    %s655 = scalar_lea.vmem [#allocation1], 14
    %s656 = smov 12
    %v657 = vld [vmem:[%s655] ss:$16 sm:%s656]
    %vm658 = vcmask 1043458
    %v659 = vsel %vm658, %v657, %v654
    %s660 = scalar_lea.vmem [#allocation1], 14
    %s661 = smov 48
    %v662 = vld [vmem:[%s660] ss:$16 sm:%s661]
    %vm663 = vcmask 1045508
    %v664 = vsel %vm663, %v662, %v659
    %s665 = scalar_lea.vmem [#allocation1], 14
    %s666 = smov 192
    %v667 = vld [vmem:[%s665] ss:$16 sm:%s666]
    %vm668 = vcmask 1047558
    %v669 = vsel %vm668, %v667, %v664
    %670 = vrot.lane.b32.xlu0 %v669, 96
    %v671 = vpop.permute.xlu0 %670
    %vm672 = vcmask 917248
    %s673 = scalar_lea.vmem [#allocation0], 8
    %674 = vst.msk [vmem:[%s673] sm:$0xff] %vm672, %v671
    %s675 = scalar_lea.vmem [#allocation1], 134
    %s676 = smov 3
    %v677 = vld [vmem:[%s675] ss:$16 sm:%s676]
    %s678 = scalar_lea.vmem [#allocation1], 134
    %s679 = smov 12
    %v680 = vld [vmem:[%s678] ss:$16 sm:%s679]
    %vm681 = vcmask 1043458
    %v682 = vsel %vm681, %v680, %v677
    %s683 = scalar_lea.vmem [#allocation1], 134
    %s684 = smov 48
    %v685 = vld [vmem:[%s683] ss:$16 sm:%s684]
    %vm686 = vcmask 1045508
    %v687 = vsel %vm686, %v685, %v682
    %s688 = scalar_lea.vmem [#allocation1], 134
    %s689 = smov 192
    %v690 = vld [vmem:[%s688] ss:$16 sm:%s689]
    %vm691 = vcmask 1047558
    %v692 = vsel %vm691, %v690, %v687
    %693 = vrot.lane.b32.xlu0 %v692, 96
    %v694 = vpop.permute.xlu0 %693
    %vm695 = vcmask 917248
    %s696 = scalar_lea.vmem [#allocation0], 16
    %697 = vst.msk [vmem:[%s696] sm:$0xff] %vm695, %v694
    %s698 = scalar_lea.vmem [#allocation1], 142
    %s699 = smov 3
    %v700 = vld [vmem:[%s698] ss:$16 sm:%s699]
    %s701 = scalar_lea.vmem [#allocation1], 142
    %s702 = smov 12
    %v703 = vld [vmem:[%s701] ss:$16 sm:%s702]
    %vm704 = vcmask 1043458
    %v705 = vsel %vm704, %v703, %v700
    %s706 = scalar_lea.vmem [#allocation1], 142
    %s707 = smov 48
    %v708 = vld [vmem:[%s706] ss:$16 sm:%s707]
    %vm709 = vcmask 1045508
    %v710 = vsel %vm709, %v708, %v705
    %s711 = scalar_lea.vmem [#allocation1], 142
    %s712 = smov 192
    %v713 = vld [vmem:[%s711] ss:$16 sm:%s712]
    %vm714 = vcmask 1047558
    %v715 = vsel %vm714, %v713, %v710
    %716 = vrot.lane.b32.xlu0 %v715, 96
    %v717 = vpop.permute.xlu0 %716
    %vm718 = vcmask 917248
    %s719 = scalar_lea.vmem [#allocation0], 24
    %720 = vst.msk [vmem:[%s719] sm:$0xff] %vm718, %v717
    %s721 = scalar_lea.vmem [#allocation1], 5
    %s722 = smov 3
    %v723 = vld [vmem:[%s721] ss:$16 sm:%s722]
    %s724 = scalar_lea.vmem [#allocation1], 5
    %s725 = smov 12
    %v726 = vld [vmem:[%s724] ss:$16 sm:%s725]
    %vm727 = vcmask 1043458
    %v728 = vsel %vm727, %v726, %v723
    %s729 = scalar_lea.vmem [#allocation1], 5
    %s730 = smov 48
    %v731 = vld [vmem:[%s729] ss:$16 sm:%s730]
    %vm732 = vcmask 1045508
    %v733 = vsel %vm732, %v731, %v728
    %s734 = scalar_lea.vmem [#allocation1], 5
    %s735 = smov 192
    %v736 = vld [vmem:[%s734] ss:$16 sm:%s735]
    %vm737 = vcmask 1047558
    %v738 = vsel %vm737, %v736, %v733
    %739 = vrot.lane.b32.xlu0 %v738, 80
    %v740 = vpop.permute.xlu0 %739
    %vm741 = vcmask 786048
    %742 = vst.msk [vmem:[#allocation0] sm:$0xff] %vm741, %v740
    %s743 = scalar_lea.vmem [#allocation1], 13
    %s744 = smov 3
    %v745 = vld [vmem:[%s743] ss:$16 sm:%s744]
    %s746 = scalar_lea.vmem [#allocation1], 13
    %s747 = smov 12
    %v748 = vld [vmem:[%s746] ss:$16 sm:%s747]
    %vm749 = vcmask 1043458
    %v750 = vsel %vm749, %v748, %v745
    %s751 = scalar_lea.vmem [#allocation1], 13
    %s752 = smov 48
    %v753 = vld [vmem:[%s751] ss:$16 sm:%s752]
    %vm754 = vcmask 1045508
    %v755 = vsel %vm754, %v753, %v750
    %s756 = scalar_lea.vmem [#allocation1], 13
    %s757 = smov 192
    %v758 = vld [vmem:[%s756] ss:$16 sm:%s757]
    %vm759 = vcmask 1047558
    %v760 = vsel %vm759, %v758, %v755
    %761 = vrot.lane.b32.xlu0 %v760, 80
    %v762 = vpop.permute.xlu0 %761
    %vm763 = vcmask 786048
    %s764 = scalar_lea.vmem [#allocation0], 8
    %765 = vst.msk [vmem:[%s764] sm:$0xff] %vm763, %v762
    %s766 = scalar_lea.vmem [#allocation1], 133
    %s767 = smov 3
    %v768 = vld [vmem:[%s766] ss:$16 sm:%s767]
    %s769 = scalar_lea.vmem [#allocation1], 133
    %s770 = smov 12
    %v771 = vld [vmem:[%s769] ss:$16 sm:%s770]
    %vm772 = vcmask 1043458
    %v773 = vsel %vm772, %v771, %v768
    %s774 = scalar_lea.vmem [#allocation1], 133
    %s775 = smov 48
    %v776 = vld [vmem:[%s774] ss:$16 sm:%s775]
    %vm777 = vcmask 1045508
    %v778 = vsel %vm777, %v776, %v773
    %s779 = scalar_lea.vmem [#allocation1], 133
    %s780 = smov 192
    %v781 = vld [vmem:[%s779] ss:$16 sm:%s780]
    %vm782 = vcmask 1047558
    %v783 = vsel %vm782, %v781, %v778
    %784 = vrot.lane.b32.xlu0 %v783, 80
    %v785 = vpop.permute.xlu0 %784
    %vm786 = vcmask 786048
    %s787 = scalar_lea.vmem [#allocation0], 16
    %788 = vst.msk [vmem:[%s787] sm:$0xff] %vm786, %v785
    %s789 = scalar_lea.vmem [#allocation1], 141
    %s790 = smov 3
    %v791 = vld [vmem:[%s789] ss:$16 sm:%s790]
    %s792 = scalar_lea.vmem [#allocation1], 141
    %s793 = smov 12
    %v794 = vld [vmem:[%s792] ss:$16 sm:%s793]
    %vm795 = vcmask 1043458
    %v796 = vsel %vm795, %v794, %v791
    %s797 = scalar_lea.vmem [#allocation1], 141
    %s798 = smov 48
    %v799 = vld [vmem:[%s797] ss:$16 sm:%s798]
    %vm800 = vcmask 1045508
    %v801 = vsel %vm800, %v799, %v796
    %s802 = scalar_lea.vmem [#allocation1], 141
    %s803 = smov 192
    %v804 = vld [vmem:[%s802] ss:$16 sm:%s803]
    %vm805 = vcmask 1047558
    %v806 = vsel %vm805, %v804, %v801
    %807 = vrot.lane.b32.xlu0 %v806, 80
    %v808 = vpop.permute.xlu0 %807
    %vm809 = vcmask 786048
    %s810 = scalar_lea.vmem [#allocation0], 24
    %811 = vst.msk [vmem:[%s810] sm:$0xff] %vm809, %v808
    %s812 = scalar_lea.vmem [#allocation1], 4
    %s813 = smov 3
    %v814 = vld [vmem:[%s812] ss:$16 sm:%s813]
    %s815 = scalar_lea.vmem [#allocation1], 4
    %s816 = smov 12
    %v817 = vld [vmem:[%s815] ss:$16 sm:%s816]
    %vm818 = vcmask 1043458
    %v819 = vsel %vm818, %v817, %v814
    %s820 = scalar_lea.vmem [#allocation1], 4
    %s821 = smov 48
    %v822 = vld [vmem:[%s820] ss:$16 sm:%s821]
    %vm823 = vcmask 1045508
    %v824 = vsel %vm823, %v822, %v819
    %s825 = scalar_lea.vmem [#allocation1], 4
    %s826 = smov 192
    %v827 = vld [vmem:[%s825] ss:$16 sm:%s826]
    %vm828 = vcmask 1047558
    %v829 = vsel %vm828, %v827, %v824
    %830 = vrot.lane.b32.xlu0 %v829, 64
    %v831 = vpop.permute.xlu0 %830
    %vm832 = vcmask 654848
    %833 = vst.msk [vmem:[#allocation0] sm:$0xff] %vm832, %v831
    %s834 = scalar_lea.vmem [#allocation1], 12
    %s835 = smov 3
    %v836 = vld [vmem:[%s834] ss:$16 sm:%s835]
    %s837 = scalar_lea.vmem [#allocation1], 12
    %s838 = smov 12
    %v839 = vld [vmem:[%s837] ss:$16 sm:%s838]
    %vm840 = vcmask 1043458
    %v841 = vsel %vm840, %v839, %v836
    %s842 = scalar_lea.vmem [#allocation1], 12
    %s843 = smov 48
    %v844 = vld [vmem:[%s842] ss:$16 sm:%s843]
    %vm845 = vcmask 1045508
    %v846 = vsel %vm845, %v844, %v841
    %s847 = scalar_lea.vmem [#allocation1], 12
    %s848 = smov 192
    %v849 = vld [vmem:[%s847] ss:$16 sm:%s848]
    %vm850 = vcmask 1047558
    %v851 = vsel %vm850, %v849, %v846
    %852 = vrot.lane.b32.xlu0 %v851, 64
    %v853 = vpop.permute.xlu0 %852
    %vm854 = vcmask 654848
    %s855 = scalar_lea.vmem [#allocation0], 8
    %856 = vst.msk [vmem:[%s855] sm:$0xff] %vm854, %v853
    %s857 = scalar_lea.vmem [#allocation1], 132
    %s858 = smov 3
    %v859 = vld [vmem:[%s857] ss:$16 sm:%s858]
    %s860 = scalar_lea.vmem [#allocation1], 132
    %s861 = smov 12
    %v862 = vld [vmem:[%s860] ss:$16 sm:%s861]
    %vm863 = vcmask 1043458
    %v864 = vsel %vm863, %v862, %v859
    %s865 = scalar_lea.vmem [#allocation1], 132
    %s866 = smov 48
    %v867 = vld [vmem:[%s865] ss:$16 sm:%s866]
    %vm868 = vcmask 1045508
    %v869 = vsel %vm868, %v867, %v864
    %s870 = scalar_lea.vmem [#allocation1], 132
    %s871 = smov 192
    %v872 = vld [vmem:[%s870] ss:$16 sm:%s871]
    %vm873 = vcmask 1047558
    %v874 = vsel %vm873, %v872, %v869
    %875 = vrot.lane.b32.xlu0 %v874, 64
    %v876 = vpop.permute.xlu0 %875
    %vm877 = vcmask 654848
    %s878 = scalar_lea.vmem [#allocation0], 16
    %879 = vst.msk [vmem:[%s878] sm:$0xff] %vm877, %v876
    %s880 = scalar_lea.vmem [#allocation1], 140
    %s881 = smov 3
    %v882 = vld [vmem:[%s880] ss:$16 sm:%s881]
    %s883 = scalar_lea.vmem [#allocation1], 140
    %s884 = smov 12
    %v885 = vld [vmem:[%s883] ss:$16 sm:%s884]
    %vm886 = vcmask 1043458
    %v887 = vsel %vm886, %v885, %v882
    %s888 = scalar_lea.vmem [#allocation1], 140
    %s889 = smov 48
    %v890 = vld [vmem:[%s888] ss:$16 sm:%s889]
    %vm891 = vcmask 1045508
    %v892 = vsel %vm891, %v890, %v887
    %s893 = scalar_lea.vmem [#allocation1], 140
    %s894 = smov 192
    %v895 = vld [vmem:[%s893] ss:$16 sm:%s894]
    %vm896 = vcmask 1047558
    %v897 = vsel %vm896, %v895, %v892
    %898 = vrot.lane.b32.xlu0 %v897, 64
    %v899 = vpop.permute.xlu0 %898
    %vm900 = vcmask 654848
    %s901 = scalar_lea.vmem [#allocation0], 24
    %902 = vst.msk [vmem:[%s901] sm:$0xff] %vm900, %v899
    %s903 = scalar_lea.vmem [#allocation1], 3
    %s904 = smov 3
    %v905 = vld [vmem:[%s903] ss:$16 sm:%s904]
    %s906 = scalar_lea.vmem [#allocation1], 3
    %s907 = smov 12
    %v908 = vld [vmem:[%s906] ss:$16 sm:%s907]
    %vm909 = vcmask 1043458
    %v910 = vsel %vm909, %v908, %v905
    %s911 = scalar_lea.vmem [#allocation1], 3
    %s912 = smov 48
    %v913 = vld [vmem:[%s911] ss:$16 sm:%s912]
    %vm914 = vcmask 1045508
    %v915 = vsel %vm914, %v913, %v910
    %s916 = scalar_lea.vmem [#allocation1], 3
    %s917 = smov 192
    %v918 = vld [vmem:[%s916] ss:$16 sm:%s917]
    %vm919 = vcmask 1047558
    %v920 = vsel %vm919, %v918, %v915
    %921 = vrot.lane.b32.xlu0 %v920, 48
    %v922 = vpop.permute.xlu0 %921
    %vm923 = vcmask 523648
    %924 = vst.msk [vmem:[#allocation0] sm:$0xff] %vm923, %v922
    %s925 = scalar_lea.vmem [#allocation1], 11
    %s926 = smov 3
    %v927 = vld [vmem:[%s925] ss:$16 sm:%s926]
    %s928 = scalar_lea.vmem [#allocation1], 11
    %s929 = smov 12
    %v930 = vld [vmem:[%s928] ss:$16 sm:%s929]
    %vm931 = vcmask 1043458
    %v932 = vsel %vm931, %v930, %v927
    %s933 = scalar_lea.vmem [#allocation1], 11
    %s934 = smov 48
    %v935 = vld [vmem:[%s933] ss:$16 sm:%s934]
    %vm936 = vcmask 1045508
    %v937 = vsel %vm936, %v935, %v932
    %s938 = scalar_lea.vmem [#allocation1], 11
    %s939 = smov 192
    %v940 = vld [vmem:[%s938] ss:$16 sm:%s939]
    %vm941 = vcmask 1047558
    %v942 = vsel %vm941, %v940, %v937
    %943 = vrot.lane.b32.xlu0 %v942, 48
    %v944 = vpop.permute.xlu0 %943
    %vm945 = vcmask 523648
    %s946 = scalar_lea.vmem [#allocation0], 8
    %947 = vst.msk [vmem:[%s946] sm:$0xff] %vm945, %v944
    %s948 = scalar_lea.vmem [#allocation1], 131
    %s949 = smov 3
    %v950 = vld [vmem:[%s948] ss:$16 sm:%s949]
    %s951 = scalar_lea.vmem [#allocation1], 131
    %s952 = smov 12
    %v953 = vld [vmem:[%s951] ss:$16 sm:%s952]
    %vm954 = vcmask 1043458
    %v955 = vsel %vm954, %v953, %v950
    %s956 = scalar_lea.vmem [#allocation1], 131
    %s957 = smov 48
    %v958 = vld [vmem:[%s956] ss:$16 sm:%s957]
    %vm959 = vcmask 1045508
    %v960 = vsel %vm959, %v958, %v955
    %s961 = scalar_lea.vmem [#allocation1], 131
    %s962 = smov 192
    %v963 = vld [vmem:[%s961] ss:$16 sm:%s962]
    %vm964 = vcmask 1047558
    %v965 = vsel %vm964, %v963, %v960
    %966 = vrot.lane.b32.xlu0 %v965, 48
    %v967 = vpop.permute.xlu0 %966
    %vm968 = vcmask 523648
    %s969 = scalar_lea.vmem [#allocation0], 16
    %970 = vst.msk [vmem:[%s969] sm:$0xff] %vm968, %v967
    %s971 = scalar_lea.vmem [#allocation1], 139
    %s972 = smov 3
    %v973 = vld [vmem:[%s971] ss:$16 sm:%s972]
    %s974 = scalar_lea.vmem [#allocation1], 139
    %s975 = smov 12
    %v976 = vld [vmem:[%s974] ss:$16 sm:%s975]
    %vm977 = vcmask 1043458
    %v978 = vsel %vm977, %v976, %v973
    %s979 = scalar_lea.vmem [#allocation1], 139
    %s980 = smov 48
    %v981 = vld [vmem:[%s979] ss:$16 sm:%s980]
    %vm982 = vcmask 1045508
    %v983 = vsel %vm982, %v981, %v978
    %s984 = scalar_lea.vmem [#allocation1], 139
    %s985 = smov 192
    %v986 = vld [vmem:[%s984] ss:$16 sm:%s985]
    %vm987 = vcmask 1047558
    %v988 = vsel %vm987, %v986, %v983
    %989 = vrot.lane.b32.xlu0 %v988, 48
    %v990 = vpop.permute.xlu0 %989
    %vm991 = vcmask 523648
    %s992 = scalar_lea.vmem [#allocation0], 24
    %993 = vst.msk [vmem:[%s992] sm:$0xff] %vm991, %v990
    %s994 = scalar_lea.vmem [#allocation1], 2
    %s995 = smov 3
    %v996 = vld [vmem:[%s994] ss:$16 sm:%s995]
    %s997 = scalar_lea.vmem [#allocation1], 2
    %s998 = smov 12
    %v999 = vld [vmem:[%s997] ss:$16 sm:%s998]
    %vm1000 = vcmask 1043458
    %v1001 = vsel %vm1000, %v999, %v996
    %s1002 = scalar_lea.vmem [#allocation1], 2
    %s1003 = smov 48
    %v1004 = vld [vmem:[%s1002] ss:$16 sm:%s1003]
    %vm1005 = vcmask 1045508
    %v1006 = vsel %vm1005, %v1004, %v1001
    %s1007 = scalar_lea.vmem [#allocation1], 2
    %s1008 = smov 192
    %v1009 = vld [vmem:[%s1007] ss:$16 sm:%s1008]
    %vm1010 = vcmask 1047558
    %v1011 = vsel %vm1010, %v1009, %v1006
    %1012 = vrot.lane.b32.xlu0 %v1011, 32
    %v1013 = vpop.permute.xlu0 %1012
    %vm1014 = vcmask 392448
    %1015 = vst.msk [vmem:[#allocation0] sm:$0xff] %vm1014, %v1013
    %s1016 = scalar_lea.vmem [#allocation1], 10
    %s1017 = smov 3
    %v1018 = vld [vmem:[%s1016] ss:$16 sm:%s1017]
    %s1019 = scalar_lea.vmem [#allocation1], 10
    %s1020 = smov 12
    %v1021 = vld [vmem:[%s1019] ss:$16 sm:%s1020]
    %vm1022 = vcmask 1043458
    %v1023 = vsel %vm1022, %v1021, %v1018
    %s1024 = scalar_lea.vmem [#allocation1], 10
    %s1025 = smov 48
    %v1026 = vld [vmem:[%s1024] ss:$16 sm:%s1025]
    %vm1027 = vcmask 1045508
    %v1028 = vsel %vm1027, %v1026, %v1023
    %s1029 = scalar_lea.vmem [#allocation1], 10
    %s1030 = smov 192
    %v1031 = vld [vmem:[%s1029] ss:$16 sm:%s1030]
    %vm1032 = vcmask 1047558
    %v1033 = vsel %vm1032, %v1031, %v1028
    %1034 = vrot.lane.b32.xlu0 %v1033, 32
    %v1035 = vpop.permute.xlu0 %1034
    %vm1036 = vcmask 392448
    %s1037 = scalar_lea.vmem [#allocation0], 8
    %1038 = vst.msk [vmem:[%s1037] sm:$0xff] %vm1036, %v1035
    %s1039 = scalar_lea.vmem [#allocation1], 130
    %s1040 = smov 3
    %v1041 = vld [vmem:[%s1039] ss:$16 sm:%s1040]
    %s1042 = scalar_lea.vmem [#allocation1], 130
    %s1043 = smov 12
    %v1044 = vld [vmem:[%s1042] ss:$16 sm:%s1043]
    %vm1045 = vcmask 1043458
    %v1046 = vsel %vm1045, %v1044, %v1041
    %s1047 = scalar_lea.vmem [#allocation1], 130
    %s1048 = smov 48
    %v1049 = vld [vmem:[%s1047] ss:$16 sm:%s1048]
    %vm1050 = vcmask 1045508
    %v1051 = vsel %vm1050, %v1049, %v1046
    %s1052 = scalar_lea.vmem [#allocation1], 130
    %s1053 = smov 192
    %v1054 = vld [vmem:[%s1052] ss:$16 sm:%s1053]
    %vm1055 = vcmask 1047558
    %v1056 = vsel %vm1055, %v1054, %v1051
    %1057 = vrot.lane.b32.xlu0 %v1056, 32
    %v1058 = vpop.permute.xlu0 %1057
    %vm1059 = vcmask 392448
    %s1060 = scalar_lea.vmem [#allocation0], 16
    %1061 = vst.msk [vmem:[%s1060] sm:$0xff] %vm1059, %v1058
    %s1062 = scalar_lea.vmem [#allocation1], 138
    %s1063 = smov 3
    %v1064 = vld [vmem:[%s1062] ss:$16 sm:%s1063]
    %s1065 = scalar_lea.vmem [#allocation1], 138
    %s1066 = smov 12
    %v1067 = vld [vmem:[%s1065] ss:$16 sm:%s1066]
    %vm1068 = vcmask 1043458
    %v1069 = vsel %vm1068, %v1067, %v1064
    %s1070 = scalar_lea.vmem [#allocation1], 138
    %s1071 = smov 48
    %v1072 = vld [vmem:[%s1070] ss:$16 sm:%s1071]
    %vm1073 = vcmask 1045508
    %v1074 = vsel %vm1073, %v1072, %v1069
    %s1075 = scalar_lea.vmem [#allocation1], 138
    %s1076 = smov 192
    %v1077 = vld [vmem:[%s1075] ss:$16 sm:%s1076]
    %vm1078 = vcmask 1047558
    %v1079 = vsel %vm1078, %v1077, %v1074
    %1080 = vrot.lane.b32.xlu0 %v1079, 32
    %v1081 = vpop.permute.xlu0 %1080
    %vm1082 = vcmask 392448
    %s1083 = scalar_lea.vmem [#allocation0], 24
    %1084 = vst.msk [vmem:[%s1083] sm:$0xff] %vm1082, %v1081
    %s1085 = scalar_lea.vmem [#allocation1], 1
    %s1086 = smov 3
    %v1087 = vld [vmem:[%s1085] ss:$16 sm:%s1086]
    %s1088 = scalar_lea.vmem [#allocation1], 1
    %s1089 = smov 12
    %v1090 = vld [vmem:[%s1088] ss:$16 sm:%s1089]
    %vm1091 = vcmask 1043458
    %v1092 = vsel %vm1091, %v1090, %v1087
    %s1093 = scalar_lea.vmem [#allocation1], 1
    %s1094 = smov 48
    %v1095 = vld [vmem:[%s1093] ss:$16 sm:%s1094]
    %vm1096 = vcmask 1045508
    %v1097 = vsel %vm1096, %v1095, %v1092
    %s1098 = scalar_lea.vmem [#allocation1], 1
    %s1099 = smov 192
    %v1100 = vld [vmem:[%s1098] ss:$16 sm:%s1099]
    %vm1101 = vcmask 1047558
    %v1102 = vsel %vm1101, %v1100, %v1097
    %1103 = vrot.lane.b32.xlu0 %v1102, 16
    %v1104 = vpop.permute.xlu0 %1103
    %vm1105 = vcmask 261248
    %1106 = vst.msk [vmem:[#allocation0] sm:$0xff] %vm1105, %v1104
    %s1107 = scalar_lea.vmem [#allocation1], 9
    %s1108 = smov 3
    %v1109 = vld [vmem:[%s1107] ss:$16 sm:%s1108]
    %s1110 = scalar_lea.vmem [#allocation1], 9
    %s1111 = smov 12
    %v1112 = vld [vmem:[%s1110] ss:$16 sm:%s1111]
    %vm1113 = vcmask 1043458
    %v1114 = vsel %vm1113, %v1112, %v1109
    %s1115 = scalar_lea.vmem [#allocation1], 9
    %s1116 = smov 48
    %v1117 = vld [vmem:[%s1115] ss:$16 sm:%s1116]
    %vm1118 = vcmask 1045508
    %v1119 = vsel %vm1118, %v1117, %v1114
    %s1120 = scalar_lea.vmem [#allocation1], 9
    %s1121 = smov 192
    %v1122 = vld [vmem:[%s1120] ss:$16 sm:%s1121]
    %vm1123 = vcmask 1047558
    %v1124 = vsel %vm1123, %v1122, %v1119
    %1125 = vrot.lane.b32.xlu0 %v1124, 16
    %v1126 = vpop.permute.xlu0 %1125
    %vm1127 = vcmask 261248
    %s1128 = scalar_lea.vmem [#allocation0], 8
    %1129 = vst.msk [vmem:[%s1128] sm:$0xff] %vm1127, %v1126
    %s1130 = scalar_lea.vmem [#allocation1], 129
    %s1131 = smov 3
    %v1132 = vld [vmem:[%s1130] ss:$16 sm:%s1131]
    %s1133 = scalar_lea.vmem [#allocation1], 129
    %s1134 = smov 12
    %v1135 = vld [vmem:[%s1133] ss:$16 sm:%s1134]
    %vm1136 = vcmask 1043458
    %v1137 = vsel %vm1136, %v1135, %v1132
    %s1138 = scalar_lea.vmem [#allocation1], 129
    %s1139 = smov 48
    %v1140 = vld [vmem:[%s1138] ss:$16 sm:%s1139]
    %vm1141 = vcmask 1045508
    %v1142 = vsel %vm1141, %v1140, %v1137
    %s1143 = scalar_lea.vmem [#allocation1], 129
    %s1144 = smov 192
    %v1145 = vld [vmem:[%s1143] ss:$16 sm:%s1144]
    %vm1146 = vcmask 1047558
    %v1147 = vsel %vm1146, %v1145, %v1142
    %1148 = vrot.lane.b32.xlu0 %v1147, 16
    %v1149 = vpop.permute.xlu0 %1148
    %vm1150 = vcmask 261248
    %s1151 = scalar_lea.vmem [#allocation0], 16
    %1152 = vst.msk [vmem:[%s1151] sm:$0xff] %vm1150, %v1149
    %s1153 = scalar_lea.vmem [#allocation1], 137
    %s1154 = smov 3
    %v1155 = vld [vmem:[%s1153] ss:$16 sm:%s1154]
    %s1156 = scalar_lea.vmem [#allocation1], 137
    %s1157 = smov 12
    %v1158 = vld [vmem:[%s1156] ss:$16 sm:%s1157]
    %vm1159 = vcmask 1043458
    %v1160 = vsel %vm1159, %v1158, %v1155
    %s1161 = scalar_lea.vmem [#allocation1], 137
    %s1162 = smov 48
    %v1163 = vld [vmem:[%s1161] ss:$16 sm:%s1162]
    %vm1164 = vcmask 1045508
    %v1165 = vsel %vm1164, %v1163, %v1160
    %s1166 = scalar_lea.vmem [#allocation1], 137
    %s1167 = smov 192
    %v1168 = vld [vmem:[%s1166] ss:$16 sm:%s1167]
    %vm1169 = vcmask 1047558
    %v1170 = vsel %vm1169, %v1168, %v1165
    %1171 = vrot.lane.b32.xlu0 %v1170, 16
    %v1172 = vpop.permute.xlu0 %1171
    %vm1173 = vcmask 261248
    %s1174 = scalar_lea.vmem [#allocation0], 24
    %1175 = vst.msk [vmem:[%s1174] sm:$0xff] %vm1173, %v1172
    %s1177 = ssub.s32 256, 1
    %v1178 = vld [vmem:[#allocation0] sm:%s1177]
    %v1179 = vpack.c.bf16 0.0, %v1178
    %s1181 = ssub.s32 16, 1
    %1182 = vst [vmem:[%s1] sm:%s1181] %v1179
    %s1183 = scalar_lea.vmem [#allocation0], 8
    %v1184 = vld [vmem:[%s1183] sm:%s1177]
    %v1185 = vpack.c.bf16 0.0, %v1184
    %s1187 = ssub.s32 16, 1
    %s1188 = scalar_lea.vmem %s1, 4
    %1189 = vst [vmem:[%s1188] sm:%s1187] %v1185
    %s1190 = scalar_lea.vmem [#allocation0], 16
    %v1191 = vld [vmem:[%s1190] sm:%s1177]
    %v1192 = vpack.c.bf16 0.0, %v1191
    %s1194 = ssub.s32 16, 1
    %s1195 = scalar_lea.vmem %s1, 8
    %1196 = vst [vmem:[%s1195] sm:%s1194] %v1192
    %s1197 = scalar_lea.vmem [#allocation0], 24
    %v1198 = vld [vmem:[%s1197] sm:%s1177]
    %v1199 = vpack.c.bf16 0.0, %v1198
    %s1201 = ssub.s32 16, 1
    %s1202 = scalar_lea.vmem %s1, 12
    %1203 = vst [vmem:[%s1202] sm:%s1201] %v1199

// kernel: tile.23
$region0: #{tile.23}
  #allocation0 [shape = 's32[1]{0}', space=sflag, size = 0x4, scoped, tag = 'scoped memory for tile.23']
  %s0 = inlined_call_operand.vmem [shape: f32[16], index: 0, kind: input, shape index: {}]
  %s1 = inlined_call_operand.vmem [shape: f32[16,16], index: 1, kind: output, shape index: {}]
  // Predicated region
  $region2: #{tile.23} parent=0 // pred_check
    _
  $region3: #{tile.23} parent=0 // pred_check_branch
    %3 = sbr.rel (0) target = $region5
  $region4: #{tile.23} parent=0 // pred_region
    _
  $region5: #{tile.23} parent=0 // pred_fallthru
    _
  %v4 = vld [vmem:[%s0] ss:$0 sm:$0xff]
  %5 = vst [vmem:[%s1] sm:$0xff] %v4
  %s6 = scalar_lea.vmem %s1, 8
  %7 = vst [vmem:[%s6] sm:$0xff] %v4

// kernel: tile.24
$region0: #{tile.24}
  %s0 = inlined_call_operand.vmem [shape: f32[16,16], index: 0, kind: input, shape index: {}]
  %s1 = inlined_call_operand.vmem [shape: f32[1,256], index: 1, kind: output, shape index: {}]
  $region1: #{tile.24} parent=0
    #allocation0 [shape = 'u8[8192]{0}', space=vmem, size = 0x2000, scoped, tag = 'scoped mem for output reshape']
    %s2 = smov 3
    %v3 = vld [vmem:[%s0] ss:$8 sm:%s2]
    %vm4 = vcmask 130048
    %5 = vst.msk [vmem:[#allocation0] ss:$8 sm:$0x3] %vm4, %v3
    %s6 = scalar_lea.vmem %s0, 7
    %s7 = smov 3
    %v8 = vld [vmem:[%s6] ss:$8 sm:%s7]
    %9 = vrot.lane.b32.xlu0 %v8, 112
    %v10 = vpop.permute.xlu0 %9
    %vm11 = vcmask 1048448
    %12 = vst.msk [vmem:[#allocation0] ss:$8 sm:$0x3] %vm11, %v10
    %s13 = scalar_lea.vmem %s0, 6
    %s14 = smov 3
    %v15 = vld [vmem:[%s13] ss:$8 sm:%s14]
    %16 = vrot.lane.b32.xlu0 %v15, 96
    %v17 = vpop.permute.xlu0 %16
    %vm18 = vcmask 917248
    %19 = vst.msk [vmem:[#allocation0] ss:$8 sm:$0x3] %vm18, %v17
    %s20 = scalar_lea.vmem %s0, 5
    %s21 = smov 3
    %v22 = vld [vmem:[%s20] ss:$8 sm:%s21]
    %23 = vrot.lane.b32.xlu0 %v22, 80
    %v24 = vpop.permute.xlu0 %23
    %vm25 = vcmask 786048
    %26 = vst.msk [vmem:[#allocation0] ss:$8 sm:$0x3] %vm25, %v24
    %s27 = scalar_lea.vmem %s0, 4
    %s28 = smov 3
    %v29 = vld [vmem:[%s27] ss:$8 sm:%s28]
    %30 = vrot.lane.b32.xlu0 %v29, 64
    %v31 = vpop.permute.xlu0 %30
    %vm32 = vcmask 654848
    %33 = vst.msk [vmem:[#allocation0] ss:$8 sm:$0x3] %vm32, %v31
    %s34 = scalar_lea.vmem %s0, 3
    %s35 = smov 3
    %v36 = vld [vmem:[%s34] ss:$8 sm:%s35]
    %37 = vrot.lane.b32.xlu0 %v36, 48
    %v38 = vpop.permute.xlu0 %37
    %vm39 = vcmask 523648
    %40 = vst.msk [vmem:[#allocation0] ss:$8 sm:$0x3] %vm39, %v38
    %s41 = scalar_lea.vmem %s0, 2
    %s42 = smov 3
    %v43 = vld [vmem:[%s41] ss:$8 sm:%s42]
    %44 = vrot.lane.b32.xlu0 %v43, 32
    %v45 = vpop.permute.xlu0 %44
    %vm46 = vcmask 392448
    %47 = vst.msk [vmem:[#allocation0] ss:$8 sm:$0x3] %vm46, %v45
    %s48 = scalar_lea.vmem %s0, 1
    %s49 = smov 3
    %v50 = vld [vmem:[%s48] ss:$8 sm:%s49]
    %51 = vrot.lane.b32.xlu0 %v50, 16
    %v52 = vpop.permute.xlu0 %51
    %vm53 = vcmask 261248
    %54 = vst.msk [vmem:[#allocation0] ss:$8 sm:$0x3] %vm53, %v52
    %s56 = ssub.s32 2, 1
    %v57 = vld [vmem:[#allocation0] sm:%s56]
    %s59 = ssub.s32 2, 1
    %60 = vst [vmem:[%s1] sm:%s59] %v57
    %s61 = scalar_lea.vmem [#allocation0], 8
    %v62 = vld [vmem:[%s61] sm:%s56]
    %s64 = ssub.s32 2, 1
    %s65 = scalar_lea.vmem %s1, 1
    %66 = vst [vmem:[%s65] sm:%s64] %v62

// kernel: rcab_forward.1
$region0: #{rcab_forward.1}
  #allocation0 [shape = 'u32[]', space=smem, size = 0x4, offset = 0x4, fixed_abs, tag = 'smem constant byte address 0x4 - core index']
  #allocation1 [shape = 'u32[72,128]{1,0:T(1,128)}', space=vmem, size = 0x9000, scoped, tag = 'internal scratch']
  %s0 = inlined_call_operand.vmem [shape: f32[8,16,256], index: 0, kind: input, shape index: {}]
  %s1 = inlined_call_operand.vmem [shape: bf16[3,256,256], index: 1, kind: input, shape index: {}]
  %s2 = inlined_call_operand.vmem [shape: f32[1,256], index: 2, kind: input, shape index: {}]
  %s3 = inlined_call_operand.vmem [shape: bf16[3,256,256], index: 3, kind: input, shape index: {}]
  %s4 = inlined_call_operand.vmem [shape: f32[1,256], index: 4, kind: input, shape index: {}]
  %s5 = inlined_call_operand.vmem [shape: bf16[16,4], index: 5, kind: input, shape index: {}]
  %s6 = inlined_call_operand.vmem [shape: f32[1,4], index: 6, kind: input, shape index: {}]
  %s7 = inlined_call_operand.vmem [shape: bf16[4,16], index: 7, kind: input, shape index: {}]
  %s8 = inlined_call_operand.vmem [shape: f32[1,16], index: 8, kind: input, shape index: {}]
  %s9 = inlined_call_operand.vmem [shape: bf16[256,16], index: 9, kind: input, shape index: {}]
  %s10 = inlined_call_operand.vmem [shape: bf16[16,256], index: 10, kind: input, shape index: {}]
  %s11 = inlined_call_operand.vmem [shape: f32[8,16,256], index: 11, kind: output, shape index: {}]
  %s12 = sld [smem:[#allocation0]]
  $region77: #{rcab_forward.1} parent=0
    _
  %s14 = ssub.s32 1, %s12
  %s15 = scalar_select 0, %s14, %s12
  loop: start=0, step=1, limit=4
  $region2: #{rcab_forward.1} parent=0 // loop_pre_header
    _
  $region3: #{rcab_forward.1} parent=0 // loop_header
    %s17 = sphi 0, %s21
    %p18 = scmp.ge.s32.totalorder %s17, 4
    %s27 = sphi 0, %s29
    %s30 = sphi 0, %s27
    %s31 = sphi 0, %s30
    %s47 = sphi 0, %s31
    %s51 = sphi 0, %s51
    %s53 = sphi 0, %s51
    %s54 = sphi 0, %s53
    %s68 = sphi 0, %s54
    %s72 = sphi 0, %s72
    %s74 = sphi 0, %s72
    %s75 = sphi 0, %s74
    %s89 = sphi 0, %s75
    %s93 = sphi 0, %s93
    %s95 = sphi 0, %s93
    %s96 = sphi 0, %s95
    %s110 = sphi 0, %s96
    %s114 = sphi 0, %s114
    %s116 = sphi 0, %s114
    %s117 = sphi 0, %s116
    %s131 = sphi 0, %s117
    %s135 = sphi 0, %s135
    %s137 = sphi 0, %s135
    %s138 = sphi 0, %s137
    %s152 = sphi 0, %s138
    %s156 = sphi 0, %s156
    %s158 = sphi 0, %s156
    %s159 = sphi 0, %s158
    %s173 = sphi 0, %s159
    %s177 = sphi 0, %s177
    %s179 = sphi 0, %s177
    %s180 = sphi 0, %s179
    %s194 = sphi 0, %s180
    %s198 = sphi 0, %s198
    %s200 = sphi 0, %s198
    %s201 = sphi 0, %s200
    %s215 = sphi 0, %s201
    %s219 = sphi 0, %s219
    %s221 = sphi 0, %s219
    %s222 = sphi 0, %s221
    %s236 = sphi 0, %s222
    %s240 = sphi 0, %s240
    %s242 = sphi 0, %s240
    %s243 = sphi 0, %s242
    %s257 = sphi 0, %s243
    %s263 = sphi 0, %s265
    %s266 = sphi 0, %s263
    %s267 = sphi 0, %s266
    %s283 = sphi 0, %s267
  $region4: #{rcab_forward.1} parent=0 // loop_header_branch
    %20 = sbr.rel (%p18) target = $region8
  $region5: #{rcab_forward.1} parent=0 // loop_body
    %s22 = ssub.s32 %s17, 1
    %s23 = ssub.s32 %s17, 2
    %s24 = sadd.s32 %s17, 1
    %s25 = ssub.s32 %s17, %s24
    %p26 = scmp.eq.s32.totalorder %s25, 0
    %s28 = sadd.s32 %s27, 1
    %s29 = scalar_select %p26, %s27, %s28
    %p32 = pneg %p26
    %p33 = scmp.eq.s32.totalorder %s17, 1
    %p34 = por %p32, %p33
    %p35 = scmp.ne.s32.totalorder %s27, %s30
    %p36 = scmp.eq.s32.totalorder %s17, 0
    %p37 = por %p35, %p36
    %p38 = scmp.ne.s32.totalorder %s27, %s30
    %p39 = scmp.eq.s32.totalorder %s22, 1
    %p40 = por %p38, %p39
    %p41 = scmp.ne.s32.totalorder %s30, %s31
    %p42 = scmp.eq.s32.totalorder %s22, 0
    %p43 = por %p41, %p42
    %p44 = scmp.ne.s32.totalorder %s30, %s31
    %p45 = scmp.eq.s32.totalorder %s23, 1
    %p46 = por %p44, %p45
    %p48 = scmp.ne.s32.totalorder %s31, %s47
    %p49 = scmp.eq.s32.totalorder %s23, 0
    %p50 = por %p48, %p49
    %s52 = sadd.s32 %s51, 1
    %p55 = scmp.eq.s32.totalorder %s17, 1
    %p56 = scmp.ne.s32.totalorder %s51, %s53
    %p57 = scmp.eq.s32.totalorder %s17, 0
    %p58 = por %p56, %p57
    %p59 = scmp.ne.s32.totalorder %s51, %s53
    %p60 = scmp.eq.s32.totalorder %s22, 1
    %p61 = por %p59, %p60
    %p62 = scmp.ne.s32.totalorder %s53, %s54
    %p63 = scmp.eq.s32.totalorder %s22, 0
    %p64 = por %p62, %p63
    %p65 = scmp.ne.s32.totalorder %s53, %s54
    %p66 = scmp.eq.s32.totalorder %s23, 1
    %p67 = por %p65, %p66
    %p69 = scmp.ne.s32.totalorder %s54, %s68
    %p70 = scmp.eq.s32.totalorder %s23, 0
    %p71 = por %p69, %p70
    %s73 = sadd.s32 %s72, 1
    %p76 = scmp.eq.s32.totalorder %s17, 1
    %p77 = scmp.ne.s32.totalorder %s72, %s74
    %p78 = scmp.eq.s32.totalorder %s17, 0
    %p79 = por %p77, %p78
    %p80 = scmp.ne.s32.totalorder %s72, %s74
    %p81 = scmp.eq.s32.totalorder %s22, 1
    %p82 = por %p80, %p81
    %p83 = scmp.ne.s32.totalorder %s74, %s75
    %p84 = scmp.eq.s32.totalorder %s22, 0
    %p85 = por %p83, %p84
    %p86 = scmp.ne.s32.totalorder %s74, %s75
    %p87 = scmp.eq.s32.totalorder %s23, 1
    %p88 = por %p86, %p87
    %p90 = scmp.ne.s32.totalorder %s75, %s89
    %p91 = scmp.eq.s32.totalorder %s23, 0
    %p92 = por %p90, %p91
    %s94 = sadd.s32 %s93, 1
    %p97 = scmp.eq.s32.totalorder %s17, 1
    %p98 = scmp.ne.s32.totalorder %s93, %s95
    %p99 = scmp.eq.s32.totalorder %s17, 0
    %p100 = por %p98, %p99
    %p101 = scmp.ne.s32.totalorder %s93, %s95
    %p102 = scmp.eq.s32.totalorder %s22, 1
    %p103 = por %p101, %p102
    %p104 = scmp.ne.s32.totalorder %s95, %s96
    %p105 = scmp.eq.s32.totalorder %s22, 0
    %p106 = por %p104, %p105
    %p107 = scmp.ne.s32.totalorder %s95, %s96
    %p108 = scmp.eq.s32.totalorder %s23, 1
    %p109 = por %p107, %p108
    %p111 = scmp.ne.s32.totalorder %s96, %s110
    %p112 = scmp.eq.s32.totalorder %s23, 0
    %p113 = por %p111, %p112
    %s115 = sadd.s32 %s114, 1
    %p118 = scmp.eq.s32.totalorder %s17, 1
    %p119 = scmp.ne.s32.totalorder %s114, %s116
    %p120 = scmp.eq.s32.totalorder %s17, 0
    %p121 = por %p119, %p120
    %p122 = scmp.ne.s32.totalorder %s114, %s116
    %p123 = scmp.eq.s32.totalorder %s22, 1
    %p124 = por %p122, %p123
    %p125 = scmp.ne.s32.totalorder %s116, %s117
    %p126 = scmp.eq.s32.totalorder %s22, 0
    %p127 = por %p125, %p126
    %p128 = scmp.ne.s32.totalorder %s116, %s117
    %p129 = scmp.eq.s32.totalorder %s23, 1
    %p130 = por %p128, %p129
    %p132 = scmp.ne.s32.totalorder %s117, %s131
    %p133 = scmp.eq.s32.totalorder %s23, 0
    %p134 = por %p132, %p133
    %s136 = sadd.s32 %s135, 1
    %p139 = scmp.eq.s32.totalorder %s17, 1
    %p140 = scmp.ne.s32.totalorder %s135, %s137
    %p141 = scmp.eq.s32.totalorder %s17, 0
    %p142 = por %p140, %p141
    %p143 = scmp.ne.s32.totalorder %s135, %s137
    %p144 = scmp.eq.s32.totalorder %s22, 1
    %p145 = por %p143, %p144
    %p146 = scmp.ne.s32.totalorder %s137, %s138
    %p147 = scmp.eq.s32.totalorder %s22, 0
    %p148 = por %p146, %p147
    %p149 = scmp.ne.s32.totalorder %s137, %s138
    %p150 = scmp.eq.s32.totalorder %s23, 1
    %p151 = por %p149, %p150
    %p153 = scmp.ne.s32.totalorder %s138, %s152
    %p154 = scmp.eq.s32.totalorder %s23, 0
    %p155 = por %p153, %p154
    %s157 = sadd.s32 %s156, 1
    %p160 = scmp.eq.s32.totalorder %s17, 1
    %p161 = scmp.ne.s32.totalorder %s156, %s158
    %p162 = scmp.eq.s32.totalorder %s17, 0
    %p163 = por %p161, %p162
    %p164 = scmp.ne.s32.totalorder %s156, %s158
    %p165 = scmp.eq.s32.totalorder %s22, 1
    %p166 = por %p164, %p165
    %p167 = scmp.ne.s32.totalorder %s158, %s159
    %p168 = scmp.eq.s32.totalorder %s22, 0
    %p169 = por %p167, %p168
    %p170 = scmp.ne.s32.totalorder %s158, %s159
    %p171 = scmp.eq.s32.totalorder %s23, 1
    %p172 = por %p170, %p171
    %p174 = scmp.ne.s32.totalorder %s159, %s173
    %p175 = scmp.eq.s32.totalorder %s23, 0
    %p176 = por %p174, %p175
    %s178 = sadd.s32 %s177, 1
    %p181 = scmp.eq.s32.totalorder %s17, 1
    %p182 = scmp.ne.s32.totalorder %s177, %s179
    %p183 = scmp.eq.s32.totalorder %s17, 0
    %p184 = por %p182, %p183
    %p185 = scmp.ne.s32.totalorder %s177, %s179
    %p186 = scmp.eq.s32.totalorder %s22, 1
    %p187 = por %p185, %p186
    %p188 = scmp.ne.s32.totalorder %s179, %s180
    %p189 = scmp.eq.s32.totalorder %s22, 0
    %p190 = por %p188, %p189
    %p191 = scmp.ne.s32.totalorder %s179, %s180
    %p192 = scmp.eq.s32.totalorder %s23, 1
    %p193 = por %p191, %p192
    %p195 = scmp.ne.s32.totalorder %s180, %s194
    %p196 = scmp.eq.s32.totalorder %s23, 0
    %p197 = por %p195, %p196
    %s199 = sadd.s32 %s198, 1
    %p202 = scmp.eq.s32.totalorder %s17, 1
    %p203 = scmp.ne.s32.totalorder %s198, %s200
    %p204 = scmp.eq.s32.totalorder %s17, 0
    %p205 = por %p203, %p204
    %p206 = scmp.ne.s32.totalorder %s198, %s200
    %p207 = scmp.eq.s32.totalorder %s22, 1
    %p208 = por %p206, %p207
    %p209 = scmp.ne.s32.totalorder %s200, %s201
    %p210 = scmp.eq.s32.totalorder %s22, 0
    %p211 = por %p209, %p210
    %p212 = scmp.ne.s32.totalorder %s200, %s201
    %p213 = scmp.eq.s32.totalorder %s23, 1
    %p214 = por %p212, %p213
    %p216 = scmp.ne.s32.totalorder %s201, %s215
    %p217 = scmp.eq.s32.totalorder %s23, 0
    %p218 = por %p216, %p217
    %s220 = sadd.s32 %s219, 1
    %p223 = scmp.eq.s32.totalorder %s17, 1
    %p224 = scmp.ne.s32.totalorder %s219, %s221
    %p225 = scmp.eq.s32.totalorder %s17, 0
    %p226 = por %p224, %p225
    %p227 = scmp.ne.s32.totalorder %s219, %s221
    %p228 = scmp.eq.s32.totalorder %s22, 1
    %p229 = por %p227, %p228
    %p230 = scmp.ne.s32.totalorder %s221, %s222
    %p231 = scmp.eq.s32.totalorder %s22, 0
    %p232 = por %p230, %p231
    %p233 = scmp.ne.s32.totalorder %s221, %s222
    %p234 = scmp.eq.s32.totalorder %s23, 1
    %p235 = por %p233, %p234
    %p237 = scmp.ne.s32.totalorder %s222, %s236
    %p238 = scmp.eq.s32.totalorder %s23, 0
    %p239 = por %p237, %p238
    %s241 = sadd.s32 %s240, 1
    %p244 = scmp.eq.s32.totalorder %s17, 1
    %p245 = scmp.ne.s32.totalorder %s240, %s242
    %p246 = scmp.eq.s32.totalorder %s17, 0
    %p247 = por %p245, %p246
    %p248 = scmp.ne.s32.totalorder %s240, %s242
    %p249 = scmp.eq.s32.totalorder %s22, 1
    %p250 = por %p248, %p249
    %p251 = scmp.ne.s32.totalorder %s242, %s243
    %p252 = scmp.eq.s32.totalorder %s22, 0
    %p253 = por %p251, %p252
    %p254 = scmp.ne.s32.totalorder %s242, %s243
    %p255 = scmp.eq.s32.totalorder %s23, 1
    %p256 = por %p254, %p255
    %p258 = scmp.ne.s32.totalorder %s243, %s257
    %p259 = scmp.eq.s32.totalorder %s23, 0
    %p260 = por %p258, %p259
    %s261 = ssub.s32 %s17, %s24
    %p262 = scmp.eq.s32.totalorder %s261, 0
    %s264 = sadd.s32 %s263, 1
    %s265 = scalar_select %p262, %s263, %s264
    %p268 = pneg %p262
    %p269 = scmp.eq.s32.totalorder %s17, 1
    %p270 = por %p268, %p269
    %p271 = scmp.ne.s32.totalorder %s263, %s266
    %p272 = scmp.eq.s32.totalorder %s17, 0
    %p273 = por %p271, %p272
    %p274 = scmp.ne.s32.totalorder %s263, %s266
    %p275 = scmp.eq.s32.totalorder %s22, 1
    %p276 = por %p274, %p275
    %p277 = scmp.ne.s32.totalorder %s266, %s267
    %p278 = scmp.eq.s32.totalorder %s22, 0
    %p279 = por %p277, %p278
    %p280 = scmp.ne.s32.totalorder %s266, %s267
    %p281 = scmp.eq.s32.totalorder %s23, 1
    %p282 = por %p280, %p281
    %p284 = scmp.ne.s32.totalorder %s267, %s283
    %p285 = scmp.eq.s32.totalorder %s23, 0
    %p286 = por %p284, %p285
    %p287 = scmp.le.s32.totalorder 1, %s17
    %p288 = scmp.lt.s32.totalorder %s17, 3
    %p289 = pnand %p287, %p288
    %p290 = pneg %p289
    // Predicated region
    $region9: #{rcab_forward.1} parent=5 // pred_check
      _
    $region10: #{rcab_forward.1} parent=5 // pred_check_branch
      %292 = sbr.rel (%p289) target = $region12
    $region11: #{rcab_forward.1} parent=5 // pred_region
      %s293 = ssub.s32 %s17, 1
      // Predicated region
      $region13: #{rcab_forward.1} parent=11 // pred_check
        %p294 = pneg %p64
      $region14: #{rcab_forward.1} parent=11 // pred_check_branch
        %296 = sbr.rel (%p294) target = $region16
      $region15: #{rcab_forward.1} parent=11 // pred_region
        _
      $region16: #{rcab_forward.1} parent=11 // pred_fallthru
        _
      // Predicated region
      $region17: #{rcab_forward.1} parent=11 // pred_check
        %p297 = pneg %p85
      $region18: #{rcab_forward.1} parent=11 // pred_check_branch
        %299 = sbr.rel (%p297) target = $region20
      $region19: #{rcab_forward.1} parent=11 // pred_region
        _
      $region20: #{rcab_forward.1} parent=11 // pred_fallthru
        _
      // Predicated region
      $region21: #{rcab_forward.1} parent=11 // pred_check
        %p300 = pneg %p106
      $region22: #{rcab_forward.1} parent=11 // pred_check_branch
        %302 = sbr.rel (%p300) target = $region24
      $region23: #{rcab_forward.1} parent=11 // pred_region
        _
      $region24: #{rcab_forward.1} parent=11 // pred_fallthru
        _
      // Predicated region
      $region25: #{rcab_forward.1} parent=11 // pred_check
        %p303 = pneg %p127
      $region26: #{rcab_forward.1} parent=11 // pred_check_branch
        %305 = sbr.rel (%p303) target = $region28
      $region27: #{rcab_forward.1} parent=11 // pred_region
        _
      $region28: #{rcab_forward.1} parent=11 // pred_fallthru
        _
      // Predicated region
      $region29: #{rcab_forward.1} parent=11 // pred_check
        %p306 = pneg %p148
      $region30: #{rcab_forward.1} parent=11 // pred_check_branch
        %308 = sbr.rel (%p306) target = $region32
      $region31: #{rcab_forward.1} parent=11 // pred_region
        _
      $region32: #{rcab_forward.1} parent=11 // pred_fallthru
        _
      // Predicated region
      $region33: #{rcab_forward.1} parent=11 // pred_check
        %p309 = pneg %p169
      $region34: #{rcab_forward.1} parent=11 // pred_check_branch
        %311 = sbr.rel (%p309) target = $region36
      $region35: #{rcab_forward.1} parent=11 // pred_region
        _
      $region36: #{rcab_forward.1} parent=11 // pred_fallthru
        _
      // Predicated region
      $region37: #{rcab_forward.1} parent=11 // pred_check
        %p312 = pneg %p190
      $region38: #{rcab_forward.1} parent=11 // pred_check_branch
        %314 = sbr.rel (%p312) target = $region40
      $region39: #{rcab_forward.1} parent=11 // pred_region
        _
      $region40: #{rcab_forward.1} parent=11 // pred_fallthru
        _
      // Predicated region
      $region41: #{rcab_forward.1} parent=11 // pred_check
        %p315 = pneg %p211
      $region42: #{rcab_forward.1} parent=11 // pred_check_branch
        %317 = sbr.rel (%p315) target = $region44
      $region43: #{rcab_forward.1} parent=11 // pred_region
        _
      $region44: #{rcab_forward.1} parent=11 // pred_fallthru
        _
      // Predicated region
      $region45: #{rcab_forward.1} parent=11 // pred_check
        %p318 = pneg %p232
      $region46: #{rcab_forward.1} parent=11 // pred_check_branch
        %320 = sbr.rel (%p318) target = $region48
      $region47: #{rcab_forward.1} parent=11 // pred_region
        _
      $region48: #{rcab_forward.1} parent=11 // pred_fallthru
        _
      // Predicated region
      $region49: #{rcab_forward.1} parent=11 // pred_check
        %p321 = pneg %p253
      $region50: #{rcab_forward.1} parent=11 // pred_check_branch
        %323 = sbr.rel (%p321) target = $region52
      $region51: #{rcab_forward.1} parent=11 // pred_region
        _
      $region52: #{rcab_forward.1} parent=11 // pred_fallthru
        _
    $region12: #{rcab_forward.1} parent=5 // pred_fallthru
      _
    %p324 = scmp.lt.s32.totalorder %s17, 2
    // Predicated region
    $region53: #{rcab_forward.1} parent=5 // pred_check
      %p325 = pneg %p324
    $region54: #{rcab_forward.1} parent=5 // pred_check_branch
      %327 = sbr.rel (%p325) target = $region56
    $region55: #{rcab_forward.1} parent=5 // pred_region
      // Predicated region
      $region57: #{rcab_forward.1} parent=55 // pred_check
        %p328 = pneg %p37
      $region58: #{rcab_forward.1} parent=55 // pred_check_branch
        %330 = sbr.rel (%p328) target = $region60
      $region59: #{rcab_forward.1} parent=55 // pred_region
        %s331 = smul.u32 4, %s17
        %p332 = scmp.lt.s32.totalorder %s331, 7
        %s333 = scalar_select %p332, %s331, 7
        %s334 = smul.addr %s333, 4
        %s335 = smul.addr %s334, 8
        %s336 = scalar_lea.vmem %s0, %s335
        %s337 = smul.u32 4, %s17
      $region60: #{rcab_forward.1} parent=55 // pred_fallthru
        _
    $region56: #{rcab_forward.1} parent=5 // pred_fallthru
      _
    %p338 = scmp.le.s32.totalorder 1, %s17
    %p339 = scmp.lt.s32.totalorder %s17, 3
    %p340 = pnand %p338, %p339
    %p341 = pneg %p340
    // Predicated region
    $region61: #{rcab_forward.1} parent=5 // pred_check
      _
    $region62: #{rcab_forward.1} parent=5 // pred_check_branch
      %343 = sbr.rel (%p340) target = $region64
    $region63: #{rcab_forward.1} parent=5 // pred_region
      %s344 = ssub.s32 %s17, 1
      %s345 = smul.u32 4, %s22
      %p346 = scmp.lt.s32.totalorder %s345, 7
      %s347 = scalar_select %p346, %s345, 7
      %s348 = smul.addr %s347, 4
      %s349 = smul.addr %s348, 8
      %s350 = scalar_lea.vmem %s0, %s349
      %p351 = pneg %p43
      %p352 = pneg %p40
      %p353 = pneg %p64
      %p354 = pneg %p61
      %p355 = pneg %p85
      %p356 = pneg %p82
      %p357 = pneg %p106
      %p358 = pneg %p103
      %p359 = pneg %p127
      %p360 = pneg %p124
      %p361 = pneg %p148
      %p362 = pneg %p145
      %p363 = pneg %p169
      %p364 = pneg %p166
      %p365 = pneg %p190
      %p366 = pneg %p187
      %p367 = pneg %p211
      %p368 = pneg %p208
      %p369 = pneg %p232
      %p370 = pneg %p229
      %p371 = pneg %p253
      %p372 = pneg %p250
      %p373 = pneg %p279
      %p374 = pneg %p276
      %s375 = smul.u32 4, %s22
      %p376 = scmp.lt.s32.totalorder %s375, 7
      %s377 = scalar_select %p376, %s375, 7
      %s378 = smul.addr %s377, 4
      %s379 = smul.addr %s378, 8
      %s380 = scalar_lea.vmem %s11, %s379
      %s381 = smul.u32 4, %s22
      %p382 = scmp.lt.s32.totalorder %s381, 7
      %s383 = scalar_select %p382, %s381, 7
      %s384 = smul.addr %s383, 4
      %s385 = smul.addr %s384, 8
      %s386 = scalar_lea.vmem %s0, %s385
      %s387 = smul.u32 4, %s22
      %s388 = smul.u32 4, %s22
      %p389 = scmp.lt.s32.totalorder %s388, 7
      %s390 = scalar_select %p389, %s388, 7
      %s391 = smul.addr %s390, 4
      %s392 = smul.addr %s391, 8
      %s393 = scalar_lea.vmem %s11, %s392
      %s394 = smul.u32 4, %s22
      %v396 = vld [vmem:[%s386] sm:$0xff]
      %v397 = vld [vmem:[%s386 + $0x8] sm:$0xff]
      %v398 = vld [vmem:[%s386 + $0x10] sm:$0xff]
      %v399 = vld [vmem:[%s386 + $0x18] sm:$0xff]
      %v400 = vld [vmem:[%s386 + $0x20] sm:$0xff]
      %v401 = vld [vmem:[%s386 + $0x28] sm:$0xff]
      %v402 = vld [vmem:[%s386 + $0x30] sm:$0xff]
      %v403 = vld [vmem:[%s386 + $0x38] sm:$0xff]
      %v404 = vld [vmem:[%s386 + $0x40] sm:$0xff]
      %v405 = vld [vmem:[%s386 + $0x48] sm:$0xff]
      %v406 = vld [vmem:[%s386 + $0x50] sm:$0xff]
      %v407 = vld [vmem:[%s386 + $0x58] sm:$0xff]
      %v408 = vld [vmem:[%s386 + $0x60] sm:$0xff]
      %v409 = vld [vmem:[%s386 + $0x68] sm:$0xff]
      %v410 = vld [vmem:[%s386 + $0x70] sm:$0xff]
      %v411 = vld [vmem:[%s386 + $0x78] sm:$0xff]
      %v412 = vpack.c.bf16 %v397, %v396
      %v413 = vpack.c.bf16 %v399, %v398
      %v414 = vpack.c.bf16 %v401, %v400
      %v415 = vpack.c.bf16 %v403, %v402
      %v416 = vpack.c.bf16 %v405, %v404
      %v417 = vpack.c.bf16 %v407, %v406
      %v418 = vpack.c.bf16 %v409, %v408
      %v419 = vpack.c.bf16 %v411, %v410
      %v420 = vld [vmem:[%s1] sm:$0xff]
      %v421 = vld [vmem:[%s1 + $0x8] sm:$0xff]
      %v422 = vld [vmem:[%s1 + $0x10] sm:$0xff]
      %v423 = vld [vmem:[%s1 + $0x18] sm:$0xff]
      %v424 = vld [vmem:[%s1 + $0x20] sm:$0xff]
      %v425 = vld [vmem:[%s1 + $0x28] sm:$0xff]
      %v426 = vld [vmem:[%s1 + $0x30] sm:$0xff]
      %v427 = vld [vmem:[%s1 + $0x38] sm:$0xff]
      %v428 = vld [vmem:[%s1 + $0x40] sm:$0xff]
      %v429 = vld [vmem:[%s1 + $0x48] sm:$0xff]
      %v430 = vld [vmem:[%s1 + $0x50] sm:$0xff]
      %v431 = vld [vmem:[%s1 + $0x58] sm:$0xff]
      %v432 = vld [vmem:[%s1 + $0x60] sm:$0xff]
      %v433 = vld [vmem:[%s1 + $0x68] sm:$0xff]
      %v434 = vld [vmem:[%s1 + $0x70] sm:$0xff]
      %v435 = vld [vmem:[%s1 + $0x78] sm:$0xff]
      %v436 = vld [vmem:[%s1 + $0x80] sm:$0xff]
      %v437 = vld [vmem:[%s1 + $0x88] sm:$0xff]
      %v438 = vld [vmem:[%s1 + $0x90] sm:$0xff]
      %v439 = vld [vmem:[%s1 + $0x98] sm:$0xff]
      %v440 = vld [vmem:[%s1 + $0xa0] sm:$0xff]
      %v441 = vld [vmem:[%s1 + $0xa8] sm:$0xff]
      %v442 = vld [vmem:[%s1 + $0xb0] sm:$0xff]
      %v443 = vld [vmem:[%s1 + $0xb8] sm:$0xff]
      %v444 = vld [vmem:[%s1 + $0xc0] sm:$0xff]
      %v445 = vld [vmem:[%s1 + $0xc8] sm:$0xff]
      %v446 = vld [vmem:[%s1 + $0xd0] sm:$0xff]
      %v447 = vld [vmem:[%s1 + $0xd8] sm:$0xff]
      %v448 = vld [vmem:[%s1 + $0xe0] sm:$0xff]
      %v449 = vld [vmem:[%s1 + $0xe8] sm:$0xff]
      %v450 = vld [vmem:[%s1 + $0xf0] sm:$0xff]
      %v451 = vld [vmem:[%s1 + $0xf8] sm:$0xff]
      %v460 = vunpack.c.l.b16 %v412
      %v461 = vunpack.c.h.b16 %v412
      %v462 = vunpack.c.l.b16 %v413
      %v463 = vunpack.c.h.b16 %v413
      %v464 = vunpack.c.l.b16 %v414
      %v465 = vunpack.c.h.b16 %v414
      %v466 = vunpack.c.l.b16 %v415
      %v467 = vunpack.c.h.b16 %v415
      %v468 = vunpack.c.l.b16 %v416
      %v469 = vunpack.c.h.b16 %v416
      %v470 = vunpack.c.l.b16 %v417
      %v471 = vunpack.c.h.b16 %v417
      %v472 = vunpack.c.l.b16 %v418
      %v473 = vunpack.c.h.b16 %v418
      %v474 = vunpack.c.l.b16 %v419
      %v475 = vunpack.c.h.b16 %v419
      %v476 = vpack.c.b16 %v462, %v460
      %v477 = vpack.c.b16 %v463, %v461
      %v478 = vpack.c.b16 %v466, %v464
      %v479 = vpack.c.b16 %v467, %v465
      %v480 = vpack.c.b16 %v470, %v468
      %v481 = vpack.c.b16 %v471, %v469
      %v482 = vpack.c.b16 %v474, %v472
      %v483 = vpack.c.b16 %v475, %v473
      %v524 = vunpack.c.l.b16 %v420
      %v525 = vunpack.c.h.b16 %v420
      %v526 = vunpack.c.l.b16 %v421
      %v527 = vunpack.c.h.b16 %v421
      %v528 = vunpack.c.l.b16 %v422
      %v529 = vunpack.c.h.b16 %v422
      %v530 = vunpack.c.l.b16 %v423
      %v531 = vunpack.c.h.b16 %v423
      %v532 = vunpack.c.l.b16 %v424
      %v533 = vunpack.c.h.b16 %v424
      %v534 = vunpack.c.l.b16 %v425
      %v535 = vunpack.c.h.b16 %v425
      %v536 = vunpack.c.l.b16 %v426
      %v537 = vunpack.c.h.b16 %v426
      %v538 = vunpack.c.l.b16 %v427
      %v539 = vunpack.c.h.b16 %v427
      %v540 = vunpack.c.l.b16 %v428
      %v541 = vunpack.c.h.b16 %v428
      %v542 = vunpack.c.l.b16 %v429
      %v543 = vunpack.c.h.b16 %v429
      %v544 = vunpack.c.l.b16 %v430
      %v545 = vunpack.c.h.b16 %v430
      %v546 = vunpack.c.l.b16 %v431
      %v547 = vunpack.c.h.b16 %v431
      %v548 = vunpack.c.l.b16 %v432
      %v549 = vunpack.c.h.b16 %v432
      %v550 = vunpack.c.l.b16 %v433
      %v551 = vunpack.c.h.b16 %v433
      %v552 = vunpack.c.l.b16 %v434
      %v553 = vunpack.c.h.b16 %v434
      %v554 = vunpack.c.l.b16 %v435
      %v555 = vunpack.c.h.b16 %v435
      %v556 = vunpack.c.l.b16 %v436
      %v557 = vunpack.c.h.b16 %v436
      %v558 = vunpack.c.l.b16 %v437
      %v559 = vunpack.c.h.b16 %v437
      %v560 = vunpack.c.l.b16 %v438
      %v561 = vunpack.c.h.b16 %v438
      %v562 = vunpack.c.l.b16 %v439
      %v563 = vunpack.c.h.b16 %v439
      %v564 = vunpack.c.l.b16 %v440
      %v565 = vunpack.c.h.b16 %v440
      %v566 = vunpack.c.l.b16 %v441
      %v567 = vunpack.c.h.b16 %v441
      %v568 = vunpack.c.l.b16 %v442
      %v569 = vunpack.c.h.b16 %v442
      %v570 = vunpack.c.l.b16 %v443
      %v571 = vunpack.c.h.b16 %v443
      %v572 = vunpack.c.l.b16 %v444
      %v573 = vunpack.c.h.b16 %v444
      %v574 = vunpack.c.l.b16 %v445
      %v575 = vunpack.c.h.b16 %v445
      %v576 = vunpack.c.l.b16 %v446
      %v577 = vunpack.c.h.b16 %v446
      %v578 = vunpack.c.l.b16 %v447
      %v579 = vunpack.c.h.b16 %v447
      %v580 = vunpack.c.l.b16 %v448
      %v581 = vunpack.c.h.b16 %v448
      %v582 = vunpack.c.l.b16 %v449
      %v583 = vunpack.c.h.b16 %v449
      %v584 = vunpack.c.l.b16 %v450
      %v585 = vunpack.c.h.b16 %v450
      %v586 = vunpack.c.l.b16 %v451
      %v587 = vunpack.c.h.b16 %v451
      %v588 = vpack.c.b16 %v526, %v524
      %v589 = vpack.c.b16 %v527, %v525
      %v590 = vpack.c.b16 %v530, %v528
      %v591 = vpack.c.b16 %v531, %v529
      %v592 = vpack.c.b16 %v534, %v532
      %v593 = vpack.c.b16 %v535, %v533
      %v594 = vpack.c.b16 %v538, %v536
      %v595 = vpack.c.b16 %v539, %v537
      %v596 = vpack.c.b16 %v542, %v540
      %v597 = vpack.c.b16 %v543, %v541
      %v598 = vpack.c.b16 %v546, %v544
      %v599 = vpack.c.b16 %v547, %v545
      %v600 = vpack.c.b16 %v550, %v548
      %v601 = vpack.c.b16 %v551, %v549
      %v602 = vpack.c.b16 %v554, %v552
      %v603 = vpack.c.b16 %v555, %v553
      %v604 = vpack.c.b16 %v558, %v556
      %v605 = vpack.c.b16 %v559, %v557
      %v606 = vpack.c.b16 %v562, %v560
      %v607 = vpack.c.b16 %v563, %v561
      %v608 = vpack.c.b16 %v566, %v564
      %v609 = vpack.c.b16 %v567, %v565
      %v610 = vpack.c.b16 %v570, %v568
      %v611 = vpack.c.b16 %v571, %v569
      %v612 = vpack.c.b16 %v574, %v572
      %v613 = vpack.c.b16 %v575, %v573
      %v614 = vpack.c.b16 %v578, %v576
      %v615 = vpack.c.b16 %v579, %v577
      %v616 = vpack.c.b16 %v582, %v580
      %v617 = vpack.c.b16 %v583, %v581
      %v618 = vpack.c.b16 %v586, %v584
      %v619 = vpack.c.b16 %v587, %v585
      %652 = vmatpush.bf16.msra.mxu0 %v602
      %653 = vmatpush.bf16.msra.mxu0 %v600
      %654 = vmatpush.bf16.msra.mxu0 %v598
      %655 = vmatpush.bf16.msra.mxu0 %v596
      %656 = vmatpush.bf16.msra.mxu0 %v594
      %657 = vmatpush.bf16.msra.mxu0 %v592
      %658 = vmatpush.bf16.msra.mxu0 %v590
      %659 = vmatpush.bf16.msra.mxu0 %v588
      %660 = vmatmul.bf16.gmra.mxu0 %v476
      %v661 = vpop.f32.mrf.mxu0
      %v662 = vadd.f32 0.0, %v661
      %v663 = vpop.f32.mrf.mxu0
      %v664 = vadd.f32 0.0, %v663
      %665 = vmatmul.bf16.gmra.mxu0 %v478
      %v666 = vpop.f32.mrf.mxu0
      %v667 = vadd.f32 0.0, %v666
      %v668 = vpop.f32.mrf.mxu0
      %v669 = vadd.f32 0.0, %v668
      %670 = vmatmul.bf16.gmra.mxu0 %v480
      %v671 = vpop.f32.mrf.mxu0
      %v672 = vadd.f32 0.0, %v671
      %v673 = vpop.f32.mrf.mxu0
      %v674 = vadd.f32 0.0, %v673
      %675 = vmatmul.bf16.gmra.mxu0 %v482
      %v676 = vpop.f32.mrf.mxu0
      %v677 = vadd.f32 0.0, %v676
      %v678 = vpop.f32.mrf.mxu0
      %v679 = vadd.f32 0.0, %v678
      %680 = vdwg.mxu0
      %681 = vmatpush.bf16.msra.mxu0 %v618
      %682 = vmatpush.bf16.msra.mxu0 %v616
      %683 = vmatpush.bf16.msra.mxu0 %v614
      %684 = vmatpush.bf16.msra.mxu0 %v612
      %685 = vmatpush.bf16.msra.mxu0 %v610
      %686 = vmatpush.bf16.msra.mxu0 %v608
      %687 = vmatpush.bf16.msra.mxu0 %v606
      %688 = vmatpush.bf16.msra.mxu0 %v604
      %689 = vmatmul.bf16.gmra.mxu0 %v477
      %v690 = vpop.f32.mrf.mxu0
      %v691 = vadd.f32 %v662, %v690
      %v692 = vpop.f32.mrf.mxu0
      %v693 = vadd.f32 %v664, %v692
      %694 = vmatmul.bf16.gmra.mxu0 %v479
      %v695 = vpop.f32.mrf.mxu0
      %v696 = vadd.f32 %v667, %v695
      %v697 = vpop.f32.mrf.mxu0
      %v698 = vadd.f32 %v669, %v697
      %699 = vmatmul.bf16.gmra.mxu0 %v481
      %v700 = vpop.f32.mrf.mxu0
      %v701 = vadd.f32 %v672, %v700
      %v702 = vpop.f32.mrf.mxu0
      %v703 = vadd.f32 %v674, %v702
      %704 = vmatmul.bf16.gmra.mxu0 %v483
      %v705 = vpop.f32.mrf.mxu0
      %v706 = vadd.f32 %v677, %v705
      %v707 = vpop.f32.mrf.mxu0
      %v708 = vadd.f32 %v679, %v707
      %709 = vdwg.mxu0
      %710 = vmatpush.bf16.msra.mxu0 %v603
      %711 = vmatpush.bf16.msra.mxu0 %v601
      %712 = vmatpush.bf16.msra.mxu0 %v599
      %713 = vmatpush.bf16.msra.mxu0 %v597
      %714 = vmatpush.bf16.msra.mxu0 %v595
      %715 = vmatpush.bf16.msra.mxu0 %v593
      %716 = vmatpush.bf16.msra.mxu0 %v591
      %717 = vmatpush.bf16.msra.mxu0 %v589
      %718 = vmatmul.bf16.gmra.mxu0 %v476
      %v719 = vpop.f32.mrf.mxu0
      %v720 = vadd.f32 0.0, %v719
      %v721 = vpop.f32.mrf.mxu0
      %v722 = vadd.f32 0.0, %v721
      %723 = vmatmul.bf16.gmra.mxu0 %v478
      %v724 = vpop.f32.mrf.mxu0
      %v725 = vadd.f32 0.0, %v724
      %v726 = vpop.f32.mrf.mxu0
      %v727 = vadd.f32 0.0, %v726
      %728 = vmatmul.bf16.gmra.mxu0 %v480
      %v729 = vpop.f32.mrf.mxu0
      %v730 = vadd.f32 0.0, %v729
      %v731 = vpop.f32.mrf.mxu0
      %v732 = vadd.f32 0.0, %v731
      %733 = vmatmul.bf16.gmra.mxu0 %v482
      %v734 = vpop.f32.mrf.mxu0
      %v735 = vadd.f32 0.0, %v734
      %v736 = vpop.f32.mrf.mxu0
      %v737 = vadd.f32 0.0, %v736
      %738 = vdwg.mxu0
      %739 = vmatpush.bf16.msra.mxu0 %v619
      %740 = vmatpush.bf16.msra.mxu0 %v617
      %741 = vmatpush.bf16.msra.mxu0 %v615
      %742 = vmatpush.bf16.msra.mxu0 %v613
      %743 = vmatpush.bf16.msra.mxu0 %v611
      %744 = vmatpush.bf16.msra.mxu0 %v609
      %745 = vmatpush.bf16.msra.mxu0 %v607
      %746 = vmatpush.bf16.msra.mxu0 %v605
      %747 = vmatmul.bf16.gmra.mxu0 %v477
      %v748 = vpop.f32.mrf.mxu0
      %v749 = vadd.f32 %v720, %v748
      %v750 = vpop.f32.mrf.mxu0
      %v751 = vadd.f32 %v722, %v750
      %752 = vmatmul.bf16.gmra.mxu0 %v479
      %v753 = vpop.f32.mrf.mxu0
      %v754 = vadd.f32 %v725, %v753
      %v755 = vpop.f32.mrf.mxu0
      %v756 = vadd.f32 %v727, %v755
      %757 = vmatmul.bf16.gmra.mxu0 %v481
      %v758 = vpop.f32.mrf.mxu0
      %v759 = vadd.f32 %v730, %v758
      %v760 = vpop.f32.mrf.mxu0
      %v761 = vadd.f32 %v732, %v760
      %762 = vmatmul.bf16.gmra.mxu0 %v483
      %v763 = vpop.f32.mrf.mxu0
      %v764 = vadd.f32 %v735, %v763
      %v765 = vpop.f32.mrf.mxu0
      %v766 = vadd.f32 %v737, %v765
      %767 = vdwg.mxu0
      %s768 = scalar_lea.vmem %s1, 256
      %v769 = vld [vmem:[%s768] sm:$0xff]
      %v770 = vld [vmem:[%s768 + $0x8] sm:$0xff]
      %v771 = vld [vmem:[%s768 + $0x10] sm:$0xff]
      %v772 = vld [vmem:[%s768 + $0x18] sm:$0xff]
      %v773 = vld [vmem:[%s768 + $0x20] sm:$0xff]
      %v774 = vld [vmem:[%s768 + $0x28] sm:$0xff]
      %v775 = vld [vmem:[%s768 + $0x30] sm:$0xff]
      %v776 = vld [vmem:[%s768 + $0x38] sm:$0xff]
      %v777 = vld [vmem:[%s768 + $0x40] sm:$0xff]
      %v778 = vld [vmem:[%s768 + $0x48] sm:$0xff]
      %v779 = vld [vmem:[%s768 + $0x50] sm:$0xff]
      %v780 = vld [vmem:[%s768 + $0x58] sm:$0xff]
      %v781 = vld [vmem:[%s768 + $0x60] sm:$0xff]
      %v782 = vld [vmem:[%s768 + $0x68] sm:$0xff]
      %v783 = vld [vmem:[%s768 + $0x70] sm:$0xff]
      %v784 = vld [vmem:[%s768 + $0x78] sm:$0xff]
      %v785 = vld [vmem:[%s768 + $0x80] sm:$0xff]
      %v786 = vld [vmem:[%s768 + $0x88] sm:$0xff]
      %v787 = vld [vmem:[%s768 + $0x90] sm:$0xff]
      %v788 = vld [vmem:[%s768 + $0x98] sm:$0xff]
      %v789 = vld [vmem:[%s768 + $0xa0] sm:$0xff]
      %v790 = vld [vmem:[%s768 + $0xa8] sm:$0xff]
      %v791 = vld [vmem:[%s768 + $0xb0] sm:$0xff]
      %v792 = vld [vmem:[%s768 + $0xb8] sm:$0xff]
      %v793 = vld [vmem:[%s768 + $0xc0] sm:$0xff]
      %v794 = vld [vmem:[%s768 + $0xc8] sm:$0xff]
      %v795 = vld [vmem:[%s768 + $0xd0] sm:$0xff]
      %v796 = vld [vmem:[%s768 + $0xd8] sm:$0xff]
      %v797 = vld [vmem:[%s768 + $0xe0] sm:$0xff]
      %v798 = vld [vmem:[%s768 + $0xe8] sm:$0xff]
      %v799 = vld [vmem:[%s768 + $0xf0] sm:$0xff]
      %v800 = vld [vmem:[%s768 + $0xf8] sm:$0xff]
      %v833 = vunpack.c.l.b16 %v769
      %v834 = vunpack.c.h.b16 %v769
      %v835 = vunpack.c.l.b16 %v770
      %v836 = vunpack.c.h.b16 %v770
      %v837 = vunpack.c.l.b16 %v771
      %v838 = vunpack.c.h.b16 %v771
      %v839 = vunpack.c.l.b16 %v772
      %v840 = vunpack.c.h.b16 %v772
      %v841 = vunpack.c.l.b16 %v773
      %v842 = vunpack.c.h.b16 %v773
      %v843 = vunpack.c.l.b16 %v774
      %v844 = vunpack.c.h.b16 %v774
      %v845 = vunpack.c.l.b16 %v775
      %v846 = vunpack.c.h.b16 %v775
      %v847 = vunpack.c.l.b16 %v776
      %v848 = vunpack.c.h.b16 %v776
      %v849 = vunpack.c.l.b16 %v777
      %v850 = vunpack.c.h.b16 %v777
      %v851 = vunpack.c.l.b16 %v778
      %v852 = vunpack.c.h.b16 %v778
      %v853 = vunpack.c.l.b16 %v779
      %v854 = vunpack.c.h.b16 %v779
      %v855 = vunpack.c.l.b16 %v780
      %v856 = vunpack.c.h.b16 %v780
      %v857 = vunpack.c.l.b16 %v781
      %v858 = vunpack.c.h.b16 %v781
      %v859 = vunpack.c.l.b16 %v782
      %v860 = vunpack.c.h.b16 %v782
      %v861 = vunpack.c.l.b16 %v783
      %v862 = vunpack.c.h.b16 %v783
      %v863 = vunpack.c.l.b16 %v784
      %v864 = vunpack.c.h.b16 %v784
      %v865 = vunpack.c.l.b16 %v785
      %v866 = vunpack.c.h.b16 %v785
      %v867 = vunpack.c.l.b16 %v786
      %v868 = vunpack.c.h.b16 %v786
      %v869 = vunpack.c.l.b16 %v787
      %v870 = vunpack.c.h.b16 %v787
      %v871 = vunpack.c.l.b16 %v788
      %v872 = vunpack.c.h.b16 %v788
      %v873 = vunpack.c.l.b16 %v789
      %v874 = vunpack.c.h.b16 %v789
      %v875 = vunpack.c.l.b16 %v790
      %v876 = vunpack.c.h.b16 %v790
      %v877 = vunpack.c.l.b16 %v791
      %v878 = vunpack.c.h.b16 %v791
      %v879 = vunpack.c.l.b16 %v792
      %v880 = vunpack.c.h.b16 %v792
      %v881 = vunpack.c.l.b16 %v793
      %v882 = vunpack.c.h.b16 %v793
      %v883 = vunpack.c.l.b16 %v794
      %v884 = vunpack.c.h.b16 %v794
      %v885 = vunpack.c.l.b16 %v795
      %v886 = vunpack.c.h.b16 %v795
      %v887 = vunpack.c.l.b16 %v796
      %v888 = vunpack.c.h.b16 %v796
      %v889 = vunpack.c.l.b16 %v797
      %v890 = vunpack.c.h.b16 %v797
      %v891 = vunpack.c.l.b16 %v798
      %v892 = vunpack.c.h.b16 %v798
      %v893 = vunpack.c.l.b16 %v799
      %v894 = vunpack.c.h.b16 %v799
      %v895 = vunpack.c.l.b16 %v800
      %v896 = vunpack.c.h.b16 %v800
      %v897 = vpack.c.b16 %v835, %v833
      %v898 = vpack.c.b16 %v836, %v834
      %v899 = vpack.c.b16 %v839, %v837
      %v900 = vpack.c.b16 %v840, %v838
      %v901 = vpack.c.b16 %v843, %v841
      %v902 = vpack.c.b16 %v844, %v842
      %v903 = vpack.c.b16 %v847, %v845
      %v904 = vpack.c.b16 %v848, %v846
      %v905 = vpack.c.b16 %v851, %v849
      %v906 = vpack.c.b16 %v852, %v850
      %v907 = vpack.c.b16 %v855, %v853
      %v908 = vpack.c.b16 %v856, %v854
      %v909 = vpack.c.b16 %v859, %v857
      %v910 = vpack.c.b16 %v860, %v858
      %v911 = vpack.c.b16 %v863, %v861
      %v912 = vpack.c.b16 %v864, %v862
      %v913 = vpack.c.b16 %v867, %v865
      %v914 = vpack.c.b16 %v868, %v866
      %v915 = vpack.c.b16 %v871, %v869
      %v916 = vpack.c.b16 %v872, %v870
      %v917 = vpack.c.b16 %v875, %v873
      %v918 = vpack.c.b16 %v876, %v874
      %v919 = vpack.c.b16 %v879, %v877
      %v920 = vpack.c.b16 %v880, %v878
      %v921 = vpack.c.b16 %v883, %v881
      %v922 = vpack.c.b16 %v884, %v882
      %v923 = vpack.c.b16 %v887, %v885
      %v924 = vpack.c.b16 %v888, %v886
      %v925 = vpack.c.b16 %v891, %v889
      %v926 = vpack.c.b16 %v892, %v890
      %v927 = vpack.c.b16 %v895, %v893
      %v928 = vpack.c.b16 %v896, %v894
      %961 = vmatpush.bf16.msra.mxu0 %v911
      %962 = vmatpush.bf16.msra.mxu0 %v909
      %963 = vmatpush.bf16.msra.mxu0 %v907
      %964 = vmatpush.bf16.msra.mxu0 %v905
      %965 = vmatpush.bf16.msra.mxu0 %v903
      %966 = vmatpush.bf16.msra.mxu0 %v901
      %967 = vmatpush.bf16.msra.mxu0 %v899
      %968 = vmatpush.bf16.msra.mxu0 %v897
      %969 = vmatmul.bf16.gmra.mxu0 %v476
      %v970 = vpop.f32.mrf.mxu0
      %v971 = vadd.f32 0.0, %v970
      %v972 = vpop.f32.mrf.mxu0
      %v973 = vadd.f32 0.0, %v972
      %974 = vmatmul.bf16.gmra.mxu0 %v478
      %v975 = vpop.f32.mrf.mxu0
      %v976 = vadd.f32 0.0, %v975
      %v977 = vpop.f32.mrf.mxu0
      %v978 = vadd.f32 0.0, %v977
      %979 = vmatmul.bf16.gmra.mxu0 %v480
      %v980 = vpop.f32.mrf.mxu0
      %v981 = vadd.f32 0.0, %v980
      %v982 = vpop.f32.mrf.mxu0
      %v983 = vadd.f32 0.0, %v982
      %984 = vmatmul.bf16.gmra.mxu0 %v482
      %v985 = vpop.f32.mrf.mxu0
      %v986 = vadd.f32 0.0, %v985
      %v987 = vpop.f32.mrf.mxu0
      %v988 = vadd.f32 0.0, %v987
      %989 = vdwg.mxu0
      %990 = vmatpush.bf16.msra.mxu0 %v927
      %991 = vmatpush.bf16.msra.mxu0 %v925
      %992 = vmatpush.bf16.msra.mxu0 %v923
      %993 = vmatpush.bf16.msra.mxu0 %v921
      %994 = vmatpush.bf16.msra.mxu0 %v919
      %995 = vmatpush.bf16.msra.mxu0 %v917
      %996 = vmatpush.bf16.msra.mxu0 %v915
      %997 = vmatpush.bf16.msra.mxu0 %v913
      %998 = vmatmul.bf16.gmra.mxu0 %v477
      %v999 = vpop.f32.mrf.mxu0
      %v1000 = vadd.f32 %v971, %v999
      %v1001 = vpop.f32.mrf.mxu0
      %v1002 = vadd.f32 %v973, %v1001
      %1003 = vmatmul.bf16.gmra.mxu0 %v479
      %v1004 = vpop.f32.mrf.mxu0
      %v1005 = vadd.f32 %v976, %v1004
      %v1006 = vpop.f32.mrf.mxu0
      %v1007 = vadd.f32 %v978, %v1006
      %1008 = vmatmul.bf16.gmra.mxu0 %v481
      %v1009 = vpop.f32.mrf.mxu0
      %v1010 = vadd.f32 %v981, %v1009
      %v1011 = vpop.f32.mrf.mxu0
      %v1012 = vadd.f32 %v983, %v1011
      %1013 = vmatmul.bf16.gmra.mxu0 %v483
      %v1014 = vpop.f32.mrf.mxu0
      %v1015 = vadd.f32 %v986, %v1014
      %v1016 = vpop.f32.mrf.mxu0
      %v1017 = vadd.f32 %v988, %v1016
      %1018 = vdwg.mxu0
      %1019 = vmatpush.bf16.msra.mxu0 %v912
      %1020 = vmatpush.bf16.msra.mxu0 %v910
      %1021 = vmatpush.bf16.msra.mxu0 %v908
      %1022 = vmatpush.bf16.msra.mxu0 %v906
      %1023 = vmatpush.bf16.msra.mxu0 %v904
      %1024 = vmatpush.bf16.msra.mxu0 %v902
      %1025 = vmatpush.bf16.msra.mxu0 %v900
      %1026 = vmatpush.bf16.msra.mxu0 %v898
      %1027 = vmatmul.bf16.gmra.mxu0 %v476
      %v1028 = vpop.f32.mrf.mxu0
      %v1029 = vadd.f32 0.0, %v1028
      %v1030 = vpop.f32.mrf.mxu0
      %v1031 = vadd.f32 0.0, %v1030
      %1032 = vmatmul.bf16.gmra.mxu0 %v478
      %v1033 = vpop.f32.mrf.mxu0
      %v1034 = vadd.f32 0.0, %v1033
      %v1035 = vpop.f32.mrf.mxu0
      %v1036 = vadd.f32 0.0, %v1035
      %1037 = vmatmul.bf16.gmra.mxu0 %v480
      %v1038 = vpop.f32.mrf.mxu0
      %v1039 = vadd.f32 0.0, %v1038
      %v1040 = vpop.f32.mrf.mxu0
      %v1041 = vadd.f32 0.0, %v1040
      %1042 = vmatmul.bf16.gmra.mxu0 %v482
      %v1043 = vpop.f32.mrf.mxu0
      %v1044 = vadd.f32 0.0, %v1043
      %v1045 = vpop.f32.mrf.mxu0
      %v1046 = vadd.f32 0.0, %v1045
      %1047 = vdwg.mxu0
      %1048 = vmatpush.bf16.msra.mxu0 %v928
      %1049 = vmatpush.bf16.msra.mxu0 %v926
      %1050 = vmatpush.bf16.msra.mxu0 %v924
      %1051 = vmatpush.bf16.msra.mxu0 %v922
      %1052 = vmatpush.bf16.msra.mxu0 %v920
      %1053 = vmatpush.bf16.msra.mxu0 %v918
      %1054 = vmatpush.bf16.msra.mxu0 %v916
      %1055 = vmatpush.bf16.msra.mxu0 %v914
      %1056 = vmatmul.bf16.gmra.mxu0 %v477
      %v1057 = vpop.f32.mrf.mxu0
      %v1058 = vadd.f32 %v1029, %v1057
      %v1059 = vpop.f32.mrf.mxu0
      %v1060 = vadd.f32 %v1031, %v1059
      %1061 = vmatmul.bf16.gmra.mxu0 %v479
      %v1062 = vpop.f32.mrf.mxu0
      %v1063 = vadd.f32 %v1034, %v1062
      %v1064 = vpop.f32.mrf.mxu0
      %v1065 = vadd.f32 %v1036, %v1064
      %1066 = vmatmul.bf16.gmra.mxu0 %v481
      %v1067 = vpop.f32.mrf.mxu0
      %v1068 = vadd.f32 %v1039, %v1067
      %v1069 = vpop.f32.mrf.mxu0
      %v1070 = vadd.f32 %v1041, %v1069
      %1071 = vmatmul.bf16.gmra.mxu0 %v483
      %v1072 = vpop.f32.mrf.mxu0
      %v1073 = vadd.f32 %v1044, %v1072
      %v1074 = vpop.f32.mrf.mxu0
      %v1075 = vadd.f32 %v1046, %v1074
      %1076 = vdwg.mxu0
      %s1077 = scalar_lea.vmem %s1, 512
      %v1078 = vld [vmem:[%s1077] sm:$0xff]
      %v1079 = vld [vmem:[%s1077 + $0x8] sm:$0xff]
      %v1080 = vld [vmem:[%s1077 + $0x10] sm:$0xff]
      %v1081 = vld [vmem:[%s1077 + $0x18] sm:$0xff]
      %v1082 = vld [vmem:[%s1077 + $0x20] sm:$0xff]
      %v1083 = vld [vmem:[%s1077 + $0x28] sm:$0xff]
      %v1084 = vld [vmem:[%s1077 + $0x30] sm:$0xff]
      %v1085 = vld [vmem:[%s1077 + $0x38] sm:$0xff]
      %v1086 = vld [vmem:[%s1077 + $0x40] sm:$0xff]
      %v1087 = vld [vmem:[%s1077 + $0x48] sm:$0xff]
      %v1088 = vld [vmem:[%s1077 + $0x50] sm:$0xff]
      %v1089 = vld [vmem:[%s1077 + $0x58] sm:$0xff]
      %v1090 = vld [vmem:[%s1077 + $0x60] sm:$0xff]
      %v1091 = vld [vmem:[%s1077 + $0x68] sm:$0xff]
      %v1092 = vld [vmem:[%s1077 + $0x70] sm:$0xff]
      %v1093 = vld [vmem:[%s1077 + $0x78] sm:$0xff]
      %v1094 = vld [vmem:[%s1077 + $0x80] sm:$0xff]
      %v1095 = vld [vmem:[%s1077 + $0x88] sm:$0xff]
      %v1096 = vld [vmem:[%s1077 + $0x90] sm:$0xff]
      %v1097 = vld [vmem:[%s1077 + $0x98] sm:$0xff]
      %v1098 = vld [vmem:[%s1077 + $0xa0] sm:$0xff]
      %v1099 = vld [vmem:[%s1077 + $0xa8] sm:$0xff]
      %v1100 = vld [vmem:[%s1077 + $0xb0] sm:$0xff]
      %v1101 = vld [vmem:[%s1077 + $0xb8] sm:$0xff]
      %v1102 = vld [vmem:[%s1077 + $0xc0] sm:$0xff]
      %v1103 = vld [vmem:[%s1077 + $0xc8] sm:$0xff]
      %v1104 = vld [vmem:[%s1077 + $0xd0] sm:$0xff]
      %v1105 = vld [vmem:[%s1077 + $0xd8] sm:$0xff]
      %v1106 = vld [vmem:[%s1077 + $0xe0] sm:$0xff]
      %v1107 = vld [vmem:[%s1077 + $0xe8] sm:$0xff]
      %v1108 = vld [vmem:[%s1077 + $0xf0] sm:$0xff]
      %v1109 = vld [vmem:[%s1077 + $0xf8] sm:$0xff]
      %v1142 = vunpack.c.l.b16 %v1078
      %v1143 = vunpack.c.h.b16 %v1078
      %v1144 = vunpack.c.l.b16 %v1079
      %v1145 = vunpack.c.h.b16 %v1079
      %v1146 = vunpack.c.l.b16 %v1080
      %v1147 = vunpack.c.h.b16 %v1080
      %v1148 = vunpack.c.l.b16 %v1081
      %v1149 = vunpack.c.h.b16 %v1081
      %v1150 = vunpack.c.l.b16 %v1082
      %v1151 = vunpack.c.h.b16 %v1082
      %v1152 = vunpack.c.l.b16 %v1083
      %v1153 = vunpack.c.h.b16 %v1083
      %v1154 = vunpack.c.l.b16 %v1084
      %v1155 = vunpack.c.h.b16 %v1084
      %v1156 = vunpack.c.l.b16 %v1085
      %v1157 = vunpack.c.h.b16 %v1085
      %v1158 = vunpack.c.l.b16 %v1086
      %v1159 = vunpack.c.h.b16 %v1086
      %v1160 = vunpack.c.l.b16 %v1087
      %v1161 = vunpack.c.h.b16 %v1087
      %v1162 = vunpack.c.l.b16 %v1088
      %v1163 = vunpack.c.h.b16 %v1088
      %v1164 = vunpack.c.l.b16 %v1089
      %v1165 = vunpack.c.h.b16 %v1089
      %v1166 = vunpack.c.l.b16 %v1090
      %v1167 = vunpack.c.h.b16 %v1090
      %v1168 = vunpack.c.l.b16 %v1091
      %v1169 = vunpack.c.h.b16 %v1091
      %v1170 = vunpack.c.l.b16 %v1092
      %v1171 = vunpack.c.h.b16 %v1092
      %v1172 = vunpack.c.l.b16 %v1093
      %v1173 = vunpack.c.h.b16 %v1093
      %v1174 = vunpack.c.l.b16 %v1094
      %v1175 = vunpack.c.h.b16 %v1094
      %v1176 = vunpack.c.l.b16 %v1095
      %v1177 = vunpack.c.h.b16 %v1095
      %v1178 = vunpack.c.l.b16 %v1096
      %v1179 = vunpack.c.h.b16 %v1096
      %v1180 = vunpack.c.l.b16 %v1097
      %v1181 = vunpack.c.h.b16 %v1097
      %v1182 = vunpack.c.l.b16 %v1098
      %v1183 = vunpack.c.h.b16 %v1098
      %v1184 = vunpack.c.l.b16 %v1099
      %v1185 = vunpack.c.h.b16 %v1099
      %v1186 = vunpack.c.l.b16 %v1100
      %v1187 = vunpack.c.h.b16 %v1100
      %v1188 = vunpack.c.l.b16 %v1101
      %v1189 = vunpack.c.h.b16 %v1101
      %v1190 = vunpack.c.l.b16 %v1102
      %v1191 = vunpack.c.h.b16 %v1102
      %v1192 = vunpack.c.l.b16 %v1103
      %v1193 = vunpack.c.h.b16 %v1103
      %v1194 = vunpack.c.l.b16 %v1104
      %v1195 = vunpack.c.h.b16 %v1104
      %v1196 = vunpack.c.l.b16 %v1105
      %v1197 = vunpack.c.h.b16 %v1105
      %v1198 = vunpack.c.l.b16 %v1106
      %v1199 = vunpack.c.h.b16 %v1106
      %v1200 = vunpack.c.l.b16 %v1107
      %v1201 = vunpack.c.h.b16 %v1107
      %v1202 = vunpack.c.l.b16 %v1108
      %v1203 = vunpack.c.h.b16 %v1108
      %v1204 = vunpack.c.l.b16 %v1109
      %v1205 = vunpack.c.h.b16 %v1109
      %v1206 = vpack.c.b16 %v1144, %v1142
      %v1207 = vpack.c.b16 %v1145, %v1143
      %v1208 = vpack.c.b16 %v1148, %v1146
      %v1209 = vpack.c.b16 %v1149, %v1147
      %v1210 = vpack.c.b16 %v1152, %v1150
      %v1211 = vpack.c.b16 %v1153, %v1151
      %v1212 = vpack.c.b16 %v1156, %v1154
      %v1213 = vpack.c.b16 %v1157, %v1155
      %v1214 = vpack.c.b16 %v1160, %v1158
      %v1215 = vpack.c.b16 %v1161, %v1159
      %v1216 = vpack.c.b16 %v1164, %v1162
      %v1217 = vpack.c.b16 %v1165, %v1163
      %v1218 = vpack.c.b16 %v1168, %v1166
      %v1219 = vpack.c.b16 %v1169, %v1167
      %v1220 = vpack.c.b16 %v1172, %v1170
      %v1221 = vpack.c.b16 %v1173, %v1171
      %v1222 = vpack.c.b16 %v1176, %v1174
      %v1223 = vpack.c.b16 %v1177, %v1175
      %v1224 = vpack.c.b16 %v1180, %v1178
      %v1225 = vpack.c.b16 %v1181, %v1179
      %v1226 = vpack.c.b16 %v1184, %v1182
      %v1227 = vpack.c.b16 %v1185, %v1183
      %v1228 = vpack.c.b16 %v1188, %v1186
      %v1229 = vpack.c.b16 %v1189, %v1187
      %v1230 = vpack.c.b16 %v1192, %v1190
      %v1231 = vpack.c.b16 %v1193, %v1191
      %v1232 = vpack.c.b16 %v1196, %v1194
      %v1233 = vpack.c.b16 %v1197, %v1195
      %v1234 = vpack.c.b16 %v1200, %v1198
      %v1235 = vpack.c.b16 %v1201, %v1199
      %v1236 = vpack.c.b16 %v1204, %v1202
      %v1237 = vpack.c.b16 %v1205, %v1203
      %1270 = vmatpush.bf16.msra.mxu0 %v1220
      %1271 = vmatpush.bf16.msra.mxu0 %v1218
      %1272 = vmatpush.bf16.msra.mxu0 %v1216
      %1273 = vmatpush.bf16.msra.mxu0 %v1214
      %1274 = vmatpush.bf16.msra.mxu0 %v1212
      %1275 = vmatpush.bf16.msra.mxu0 %v1210
      %1276 = vmatpush.bf16.msra.mxu0 %v1208
      %1277 = vmatpush.bf16.msra.mxu0 %v1206
      %1278 = vmatmul.bf16.gmra.mxu0 %v476
      %v1279 = vpop.f32.mrf.mxu0
      %v1280 = vadd.f32 0.0, %v1279
      %v1281 = vpop.f32.mrf.mxu0
      %v1282 = vadd.f32 0.0, %v1281
      %1283 = vmatmul.bf16.gmra.mxu0 %v478
      %v1284 = vpop.f32.mrf.mxu0
      %v1285 = vadd.f32 0.0, %v1284
      %v1286 = vpop.f32.mrf.mxu0
      %v1287 = vadd.f32 0.0, %v1286
      %1288 = vmatmul.bf16.gmra.mxu0 %v480
      %v1289 = vpop.f32.mrf.mxu0
      %v1290 = vadd.f32 0.0, %v1289
      %v1291 = vpop.f32.mrf.mxu0
      %v1292 = vadd.f32 0.0, %v1291
      %1293 = vmatmul.bf16.gmra.mxu0 %v482
      %v1294 = vpop.f32.mrf.mxu0
      %v1295 = vadd.f32 0.0, %v1294
      %v1296 = vpop.f32.mrf.mxu0
      %v1297 = vadd.f32 0.0, %v1296
      %1298 = vdwg.mxu0
      %1299 = vmatpush.bf16.msra.mxu0 %v1236
      %1300 = vmatpush.bf16.msra.mxu0 %v1234
      %1301 = vmatpush.bf16.msra.mxu0 %v1232
      %1302 = vmatpush.bf16.msra.mxu0 %v1230
      %1303 = vmatpush.bf16.msra.mxu0 %v1228
      %1304 = vmatpush.bf16.msra.mxu0 %v1226
      %1305 = vmatpush.bf16.msra.mxu0 %v1224
      %1306 = vmatpush.bf16.msra.mxu0 %v1222
      %1307 = vmatmul.bf16.gmra.mxu0 %v477
      %v1308 = vpop.f32.mrf.mxu0
      %v1309 = vadd.f32 %v1280, %v1308
      %v1310 = vpop.f32.mrf.mxu0
      %v1311 = vadd.f32 %v1282, %v1310
      %1312 = vmatmul.bf16.gmra.mxu0 %v479
      %v1313 = vpop.f32.mrf.mxu0
      %v1314 = vadd.f32 %v1285, %v1313
      %v1315 = vpop.f32.mrf.mxu0
      %v1316 = vadd.f32 %v1287, %v1315
      %1317 = vmatmul.bf16.gmra.mxu0 %v481
      %v1318 = vpop.f32.mrf.mxu0
      %v1319 = vadd.f32 %v1290, %v1318
      %v1320 = vpop.f32.mrf.mxu0
      %v1321 = vadd.f32 %v1292, %v1320
      %1322 = vmatmul.bf16.gmra.mxu0 %v483
      %v1323 = vpop.f32.mrf.mxu0
      %v1324 = vadd.f32 %v1295, %v1323
      %v1325 = vpop.f32.mrf.mxu0
      %v1326 = vadd.f32 %v1297, %v1325
      %1327 = vdwg.mxu0
      %1328 = vmatpush.bf16.msra.mxu0 %v1221
      %1329 = vmatpush.bf16.msra.mxu0 %v1219
      %1330 = vmatpush.bf16.msra.mxu0 %v1217
      %1331 = vmatpush.bf16.msra.mxu0 %v1215
      %1332 = vmatpush.bf16.msra.mxu0 %v1213
      %1333 = vmatpush.bf16.msra.mxu0 %v1211
      %1334 = vmatpush.bf16.msra.mxu0 %v1209
      %1335 = vmatpush.bf16.msra.mxu0 %v1207
      %1336 = vmatmul.bf16.gmra.mxu0 %v476
      %v1337 = vpop.f32.mrf.mxu0
      %v1338 = vadd.f32 0.0, %v1337
      %v1339 = vpop.f32.mrf.mxu0
      %v1340 = vadd.f32 0.0, %v1339
      %1341 = vmatmul.bf16.gmra.mxu0 %v478
      %v1342 = vpop.f32.mrf.mxu0
      %v1343 = vadd.f32 0.0, %v1342
      %v1344 = vpop.f32.mrf.mxu0
      %v1345 = vadd.f32 0.0, %v1344
      %1346 = vmatmul.bf16.gmra.mxu0 %v480
      %v1347 = vpop.f32.mrf.mxu0
      %v1348 = vadd.f32 0.0, %v1347
      %v1349 = vpop.f32.mrf.mxu0
      %v1350 = vadd.f32 0.0, %v1349
      %1351 = vmatmul.bf16.gmra.mxu0 %v482
      %v1352 = vpop.f32.mrf.mxu0
      %v1353 = vadd.f32 0.0, %v1352
      %v1354 = vpop.f32.mrf.mxu0
      %v1355 = vadd.f32 0.0, %v1354
      %1356 = vdwg.mxu0
      %1357 = vmatpush.bf16.msra.mxu0 %v1237
      %1358 = vmatpush.bf16.msra.mxu0 %v1235
      %1359 = vmatpush.bf16.msra.mxu0 %v1233
      %1360 = vmatpush.bf16.msra.mxu0 %v1231
      %1361 = vmatpush.bf16.msra.mxu0 %v1229
      %1362 = vmatpush.bf16.msra.mxu0 %v1227
      %1363 = vmatpush.bf16.msra.mxu0 %v1225
      %1364 = vmatpush.bf16.msra.mxu0 %v1223
      %1365 = vmatmul.bf16.gmra.mxu0 %v477
      %v1366 = vpop.f32.mrf.mxu0
      %v1367 = vadd.f32 %v1338, %v1366
      %v1368 = vpop.f32.mrf.mxu0
      %v1369 = vadd.f32 %v1340, %v1368
      %1370 = vmatmul.bf16.gmra.mxu0 %v479
      %v1371 = vpop.f32.mrf.mxu0
      %v1372 = vadd.f32 %v1343, %v1371
      %v1373 = vpop.f32.mrf.mxu0
      %v1374 = vadd.f32 %v1345, %v1373
      %1375 = vmatmul.bf16.gmra.mxu0 %v481
      %v1376 = vpop.f32.mrf.mxu0
      %v1377 = vadd.f32 %v1348, %v1376
      %v1378 = vpop.f32.mrf.mxu0
      %v1379 = vadd.f32 %v1350, %v1378
      %1380 = vmatmul.bf16.gmra.mxu0 %v483
      %v1381 = vpop.f32.mrf.mxu0
      %v1382 = vadd.f32 %v1353, %v1381
      %v1383 = vpop.f32.mrf.mxu0
      %v1384 = vadd.f32 %v1355, %v1383
      %1385 = vdwg.mxu0
      %vm1402 = vcmask 1040384
      %v1403 = vrot.slane %v691, 7
      %v1404 = vrot.slane %v749, 7
      %v1405 = vrot.slane %v693, 7
      %v1406 = vsel %vm1402, %v1403, %v1405
      %v1407 = vrot.slane %v751, 7
      %v1408 = vsel %vm1402, %v1404, %v1407
      %v1409 = vrot.slane %v696, 7
      %v1410 = vrot.slane %v754, 7
      %v1411 = vrot.slane %v698, 7
      %v1412 = vsel %vm1402, %v1409, %v1411
      %v1413 = vrot.slane %v756, 7
      %v1414 = vsel %vm1402, %v1410, %v1413
      %v1415 = vrot.slane %v701, 7
      %v1416 = vrot.slane %v759, 7
      %v1417 = vrot.slane %v703, 7
      %v1418 = vsel %vm1402, %v1415, %v1417
      %v1419 = vrot.slane %v761, 7
      %v1420 = vsel %vm1402, %v1416, %v1419
      %v1421 = vrot.slane %v706, 7
      %v1422 = vrot.slane %v764, 7
      %v1423 = vrot.slane %v708, 7
      %v1424 = vsel %vm1402, %v1421, %v1423
      %v1425 = vrot.slane %v766, 7
      %v1426 = vsel %vm1402, %v1422, %v1425
      %v1443 = vsel %vm1402, 0.0, %v1403
      %v1444 = vsel %vm1402, 0.0, %v1404
      %v1445 = vsel %vm1402, 0.0, %v1409
      %v1446 = vsel %vm1402, 0.0, %v1410
      %v1447 = vsel %vm1402, 0.0, %v1415
      %v1448 = vsel %vm1402, 0.0, %v1416
      %v1449 = vsel %vm1402, 0.0, %v1421
      %v1450 = vsel %vm1402, 0.0, %v1422
      %vm1467 = vcmask 1046528
      %v1468 = vrot.slane %v1309, 1
      %v1469 = vrot.slane %v1311, 1
      %v1470 = vsel %vm1467, %v1468, %v1469
      %v1471 = vrot.slane %v1367, 1
      %v1472 = vrot.slane %v1369, 1
      %v1473 = vsel %vm1467, %v1471, %v1472
      %v1474 = vrot.slane %v1314, 1
      %v1475 = vrot.slane %v1316, 1
      %v1476 = vsel %vm1467, %v1474, %v1475
      %v1477 = vrot.slane %v1372, 1
      %v1478 = vrot.slane %v1374, 1
      %v1479 = vsel %vm1467, %v1477, %v1478
      %v1480 = vrot.slane %v1319, 1
      %v1481 = vrot.slane %v1321, 1
      %v1482 = vsel %vm1467, %v1480, %v1481
      %v1483 = vrot.slane %v1377, 1
      %v1484 = vrot.slane %v1379, 1
      %v1485 = vsel %vm1467, %v1483, %v1484
      %v1486 = vrot.slane %v1324, 1
      %v1487 = vrot.slane %v1326, 1
      %v1488 = vsel %vm1467, %v1486, %v1487
      %v1489 = vrot.slane %v1382, 1
      %v1490 = vrot.slane %v1384, 1
      %v1491 = vsel %vm1467, %v1489, %v1490
      %v1508 = vsel %vm1467, %v1469, 0.0
      %v1509 = vsel %vm1467, %v1472, 0.0
      %v1510 = vsel %vm1467, %v1475, 0.0
      %v1511 = vsel %vm1467, %v1478, 0.0
      %v1512 = vsel %vm1467, %v1481, 0.0
      %v1513 = vsel %vm1467, %v1484, 0.0
      %v1514 = vsel %vm1467, %v1487, 0.0
      %v1515 = vsel %vm1467, %v1490, 0.0
      %v1516 = vadd.f32 %v1000, %v1443
      %v1517 = vadd.f32 %v1058, %v1444
      %v1518 = vadd.f32 %v1002, %v1406
      %v1519 = vadd.f32 %v1060, %v1408
      %v1520 = vadd.f32 %v1005, %v1445
      %v1521 = vadd.f32 %v1063, %v1446
      %v1522 = vadd.f32 %v1007, %v1412
      %v1523 = vadd.f32 %v1065, %v1414
      %v1524 = vadd.f32 %v1010, %v1447
      %v1525 = vadd.f32 %v1068, %v1448
      %v1526 = vadd.f32 %v1012, %v1418
      %v1527 = vadd.f32 %v1070, %v1420
      %v1528 = vadd.f32 %v1015, %v1449
      %v1529 = vadd.f32 %v1073, %v1450
      %v1530 = vadd.f32 %v1017, %v1424
      %v1531 = vadd.f32 %v1075, %v1426
      %v1532 = vadd.f32 %v1516, %v1470
      %v1533 = vadd.f32 %v1517, %v1473
      %v1534 = vadd.f32 %v1518, %v1508
      %v1535 = vadd.f32 %v1519, %v1509
      %v1536 = vadd.f32 %v1520, %v1476
      %v1537 = vadd.f32 %v1521, %v1479
      %v1538 = vadd.f32 %v1522, %v1510
      %v1539 = vadd.f32 %v1523, %v1511
      %v1540 = vadd.f32 %v1524, %v1482
      %v1541 = vadd.f32 %v1525, %v1485
      %v1542 = vadd.f32 %v1526, %v1512
      %v1543 = vadd.f32 %v1527, %v1513
      %v1544 = vadd.f32 %v1528, %v1488
      %v1545 = vadd.f32 %v1529, %v1491
      %v1546 = vadd.f32 %v1530, %v1514
      %v1547 = vadd.f32 %v1531, %v1515
      %v1548 = vld [vmem:[%s2] sm:$0x3]
      %v1550 = vperm.slane %v1548, 0
      %v1551 = vperm.slane %v1548, 1
      %v1554 = vadd.f32 %v1532, %v1550
      %v1555 = vadd.f32 %v1533, %v1551
      %v1556 = vadd.f32 %v1534, %v1550
      %v1557 = vadd.f32 %v1535, %v1551
      %v1558 = vadd.f32 %v1536, %v1550
      %v1559 = vadd.f32 %v1537, %v1551
      %v1560 = vadd.f32 %v1538, %v1550
      %v1561 = vadd.f32 %v1539, %v1551
      %v1562 = vadd.f32 %v1540, %v1550
      %v1563 = vadd.f32 %v1541, %v1551
      %v1564 = vadd.f32 %v1542, %v1550
      %v1565 = vadd.f32 %v1543, %v1551
      %v1566 = vadd.f32 %v1544, %v1550
      %v1567 = vadd.f32 %v1545, %v1551
      %v1568 = vadd.f32 %v1546, %v1550
      %v1569 = vadd.f32 %v1547, %v1551
      %v1570 = vmax.f32 %v1554, 0.0
      %v1571 = vmax.f32 %v1555, 0.0
      %v1572 = vmax.f32 %v1556, 0.0
      %v1573 = vmax.f32 %v1557, 0.0
      %v1574 = vmax.f32 %v1558, 0.0
      %v1575 = vmax.f32 %v1559, 0.0
      %v1576 = vmax.f32 %v1560, 0.0
      %v1577 = vmax.f32 %v1561, 0.0
      %v1578 = vmax.f32 %v1562, 0.0
      %v1579 = vmax.f32 %v1563, 0.0
      %v1580 = vmax.f32 %v1564, 0.0
      %v1581 = vmax.f32 %v1565, 0.0
      %v1582 = vmax.f32 %v1566, 0.0
      %v1583 = vmax.f32 %v1567, 0.0
      %v1584 = vmax.f32 %v1568, 0.0
      %v1585 = vmax.f32 %v1569, 0.0
      %v1586 = vpack.c.bf16 %v1571, %v1570
      %v1587 = vpack.c.bf16 %v1573, %v1572
      %v1588 = vpack.c.bf16 %v1575, %v1574
      %v1589 = vpack.c.bf16 %v1577, %v1576
      %v1590 = vpack.c.bf16 %v1579, %v1578
      %v1591 = vpack.c.bf16 %v1581, %v1580
      %v1592 = vpack.c.bf16 %v1583, %v1582
      %v1593 = vpack.c.bf16 %v1585, %v1584
      %v1594 = vld [vmem:[%s3] sm:$0xff]
      %v1595 = vld [vmem:[%s3 + $0x8] sm:$0xff]
      %v1596 = vld [vmem:[%s3 + $0x10] sm:$0xff]
      %v1597 = vld [vmem:[%s3 + $0x18] sm:$0xff]
      %v1598 = vld [vmem:[%s3 + $0x20] sm:$0xff]
      %v1599 = vld [vmem:[%s3 + $0x28] sm:$0xff]
      %v1600 = vld [vmem:[%s3 + $0x30] sm:$0xff]
      %v1601 = vld [vmem:[%s3 + $0x38] sm:$0xff]
      %v1602 = vld [vmem:[%s3 + $0x40] sm:$0xff]
      %v1603 = vld [vmem:[%s3 + $0x48] sm:$0xff]
      %v1604 = vld [vmem:[%s3 + $0x50] sm:$0xff]
      %v1605 = vld [vmem:[%s3 + $0x58] sm:$0xff]
      %v1606 = vld [vmem:[%s3 + $0x60] sm:$0xff]
      %v1607 = vld [vmem:[%s3 + $0x68] sm:$0xff]
      %v1608 = vld [vmem:[%s3 + $0x70] sm:$0xff]
      %v1609 = vld [vmem:[%s3 + $0x78] sm:$0xff]
      %v1610 = vld [vmem:[%s3 + $0x80] sm:$0xff]
      %v1611 = vld [vmem:[%s3 + $0x88] sm:$0xff]
      %v1612 = vld [vmem:[%s3 + $0x90] sm:$0xff]
      %v1613 = vld [vmem:[%s3 + $0x98] sm:$0xff]
      %v1614 = vld [vmem:[%s3 + $0xa0] sm:$0xff]
      %v1615 = vld [vmem:[%s3 + $0xa8] sm:$0xff]
      %v1616 = vld [vmem:[%s3 + $0xb0] sm:$0xff]
      %v1617 = vld [vmem:[%s3 + $0xb8] sm:$0xff]
      %v1618 = vld [vmem:[%s3 + $0xc0] sm:$0xff]
      %v1619 = vld [vmem:[%s3 + $0xc8] sm:$0xff]
      %v1620 = vld [vmem:[%s3 + $0xd0] sm:$0xff]
      %v1621 = vld [vmem:[%s3 + $0xd8] sm:$0xff]
      %v1622 = vld [vmem:[%s3 + $0xe0] sm:$0xff]
      %v1623 = vld [vmem:[%s3 + $0xe8] sm:$0xff]
      %v1624 = vld [vmem:[%s3 + $0xf0] sm:$0xff]
      %v1625 = vld [vmem:[%s3 + $0xf8] sm:$0xff]
      %v1634 = vunpack.c.l.b16 %v1586
      %v1635 = vunpack.c.h.b16 %v1586
      %v1636 = vunpack.c.l.b16 %v1587
      %v1637 = vunpack.c.h.b16 %v1587
      %v1638 = vunpack.c.l.b16 %v1588
      %v1639 = vunpack.c.h.b16 %v1588
      %v1640 = vunpack.c.l.b16 %v1589
      %v1641 = vunpack.c.h.b16 %v1589
      %v1642 = vunpack.c.l.b16 %v1590
      %v1643 = vunpack.c.h.b16 %v1590
      %v1644 = vunpack.c.l.b16 %v1591
      %v1645 = vunpack.c.h.b16 %v1591
      %v1646 = vunpack.c.l.b16 %v1592
      %v1647 = vunpack.c.h.b16 %v1592
      %v1648 = vunpack.c.l.b16 %v1593
      %v1649 = vunpack.c.h.b16 %v1593
      %v1650 = vpack.c.b16 %v1636, %v1634
      %v1651 = vpack.c.b16 %v1637, %v1635
      %v1652 = vpack.c.b16 %v1640, %v1638
      %v1653 = vpack.c.b16 %v1641, %v1639
      %v1654 = vpack.c.b16 %v1644, %v1642
      %v1655 = vpack.c.b16 %v1645, %v1643
      %v1656 = vpack.c.b16 %v1648, %v1646
      %v1657 = vpack.c.b16 %v1649, %v1647
      %v1698 = vunpack.c.l.b16 %v1594
      %v1699 = vunpack.c.h.b16 %v1594
      %v1700 = vunpack.c.l.b16 %v1595
      %v1701 = vunpack.c.h.b16 %v1595
      %v1702 = vunpack.c.l.b16 %v1596
      %v1703 = vunpack.c.h.b16 %v1596
      %v1704 = vunpack.c.l.b16 %v1597
      %v1705 = vunpack.c.h.b16 %v1597
      %v1706 = vunpack.c.l.b16 %v1598
      %v1707 = vunpack.c.h.b16 %v1598
      %v1708 = vunpack.c.l.b16 %v1599
      %v1709 = vunpack.c.h.b16 %v1599
      %v1710 = vunpack.c.l.b16 %v1600
      %v1711 = vunpack.c.h.b16 %v1600
      %v1712 = vunpack.c.l.b16 %v1601
      %v1713 = vunpack.c.h.b16 %v1601
      %v1714 = vunpack.c.l.b16 %v1602
      %v1715 = vunpack.c.h.b16 %v1602
      %v1716 = vunpack.c.l.b16 %v1603
      %v1717 = vunpack.c.h.b16 %v1603
      %v1718 = vunpack.c.l.b16 %v1604
      %v1719 = vunpack.c.h.b16 %v1604
      %v1720 = vunpack.c.l.b16 %v1605
      %v1721 = vunpack.c.h.b16 %v1605
      %v1722 = vunpack.c.l.b16 %v1606
      %v1723 = vunpack.c.h.b16 %v1606
      %v1724 = vunpack.c.l.b16 %v1607
      %v1725 = vunpack.c.h.b16 %v1607
      %v1726 = vunpack.c.l.b16 %v1608
      %v1727 = vunpack.c.h.b16 %v1608
      %v1728 = vunpack.c.l.b16 %v1609
      %v1729 = vunpack.c.h.b16 %v1609
      %v1730 = vunpack.c.l.b16 %v1610
      %v1731 = vunpack.c.h.b16 %v1610
      %v1732 = vunpack.c.l.b16 %v1611
      %v1733 = vunpack.c.h.b16 %v1611
      %v1734 = vunpack.c.l.b16 %v1612
      %v1735 = vunpack.c.h.b16 %v1612
      %v1736 = vunpack.c.l.b16 %v1613
      %v1737 = vunpack.c.h.b16 %v1613
      %v1738 = vunpack.c.l.b16 %v1614
      %v1739 = vunpack.c.h.b16 %v1614
      %v1740 = vunpack.c.l.b16 %v1615
      %v1741 = vunpack.c.h.b16 %v1615
      %v1742 = vunpack.c.l.b16 %v1616
      %v1743 = vunpack.c.h.b16 %v1616
      %v1744 = vunpack.c.l.b16 %v1617
      %v1745 = vunpack.c.h.b16 %v1617
      %v1746 = vunpack.c.l.b16 %v1618
      %v1747 = vunpack.c.h.b16 %v1618
      %v1748 = vunpack.c.l.b16 %v1619
      %v1749 = vunpack.c.h.b16 %v1619
      %v1750 = vunpack.c.l.b16 %v1620
      %v1751 = vunpack.c.h.b16 %v1620
      %v1752 = vunpack.c.l.b16 %v1621
      %v1753 = vunpack.c.h.b16 %v1621
      %v1754 = vunpack.c.l.b16 %v1622
      %v1755 = vunpack.c.h.b16 %v1622
      %v1756 = vunpack.c.l.b16 %v1623
      %v1757 = vunpack.c.h.b16 %v1623
      %v1758 = vunpack.c.l.b16 %v1624
      %v1759 = vunpack.c.h.b16 %v1624
      %v1760 = vunpack.c.l.b16 %v1625
      %v1761 = vunpack.c.h.b16 %v1625
      %v1762 = vpack.c.b16 %v1700, %v1698
      %v1763 = vpack.c.b16 %v1701, %v1699
      %v1764 = vpack.c.b16 %v1704, %v1702
      %v1765 = vpack.c.b16 %v1705, %v1703
      %v1766 = vpack.c.b16 %v1708, %v1706
      %v1767 = vpack.c.b16 %v1709, %v1707
      %v1768 = vpack.c.b16 %v1712, %v1710
      %v1769 = vpack.c.b16 %v1713, %v1711
      %v1770 = vpack.c.b16 %v1716, %v1714
      %v1771 = vpack.c.b16 %v1717, %v1715
      %v1772 = vpack.c.b16 %v1720, %v1718
      %v1773 = vpack.c.b16 %v1721, %v1719
      %v1774 = vpack.c.b16 %v1724, %v1722
      %v1775 = vpack.c.b16 %v1725, %v1723
      %v1776 = vpack.c.b16 %v1728, %v1726
      %v1777 = vpack.c.b16 %v1729, %v1727
      %v1778 = vpack.c.b16 %v1732, %v1730
      %v1779 = vpack.c.b16 %v1733, %v1731
      %v1780 = vpack.c.b16 %v1736, %v1734
      %v1781 = vpack.c.b16 %v1737, %v1735
      %v1782 = vpack.c.b16 %v1740, %v1738
      %v1783 = vpack.c.b16 %v1741, %v1739
      %v1784 = vpack.c.b16 %v1744, %v1742
      %v1785 = vpack.c.b16 %v1745, %v1743
      %v1786 = vpack.c.b16 %v1748, %v1746
      %v1787 = vpack.c.b16 %v1749, %v1747
      %v1788 = vpack.c.b16 %v1752, %v1750
      %v1789 = vpack.c.b16 %v1753, %v1751
      %v1790 = vpack.c.b16 %v1756, %v1754
      %v1791 = vpack.c.b16 %v1757, %v1755
      %v1792 = vpack.c.b16 %v1760, %v1758
      %v1793 = vpack.c.b16 %v1761, %v1759
      %1826 = vmatpush.bf16.msra.mxu0 %v1776
      %1827 = vmatpush.bf16.msra.mxu0 %v1774
      %1828 = vmatpush.bf16.msra.mxu0 %v1772
      %1829 = vmatpush.bf16.msra.mxu0 %v1770
      %1830 = vmatpush.bf16.msra.mxu0 %v1768
      %1831 = vmatpush.bf16.msra.mxu0 %v1766
      %1832 = vmatpush.bf16.msra.mxu0 %v1764
      %1833 = vmatpush.bf16.msra.mxu0 %v1762
      %1834 = vmatmul.bf16.gmra.mxu0 %v1650
      %v1835 = vpop.f32.mrf.mxu0
      %v1836 = vadd.f32 0.0, %v1835
      %v1837 = vpop.f32.mrf.mxu0
      %v1838 = vadd.f32 0.0, %v1837
      %1839 = vmatmul.bf16.gmra.mxu0 %v1652
      %v1840 = vpop.f32.mrf.mxu0
      %v1841 = vadd.f32 0.0, %v1840
      %v1842 = vpop.f32.mrf.mxu0
      %v1843 = vadd.f32 0.0, %v1842
      %1844 = vmatmul.bf16.gmra.mxu0 %v1654
      %v1845 = vpop.f32.mrf.mxu0
      %v1846 = vadd.f32 0.0, %v1845
      %v1847 = vpop.f32.mrf.mxu0
      %v1848 = vadd.f32 0.0, %v1847
      %1849 = vmatmul.bf16.gmra.mxu0 %v1656
      %v1850 = vpop.f32.mrf.mxu0
      %v1851 = vadd.f32 0.0, %v1850
      %v1852 = vpop.f32.mrf.mxu0
      %v1853 = vadd.f32 0.0, %v1852
      %1854 = vdwg.mxu0
      %1855 = vmatpush.bf16.msra.mxu0 %v1792
      %1856 = vmatpush.bf16.msra.mxu0 %v1790
      %1857 = vmatpush.bf16.msra.mxu0 %v1788
      %1858 = vmatpush.bf16.msra.mxu0 %v1786
      %1859 = vmatpush.bf16.msra.mxu0 %v1784
      %1860 = vmatpush.bf16.msra.mxu0 %v1782
      %1861 = vmatpush.bf16.msra.mxu0 %v1780
      %1862 = vmatpush.bf16.msra.mxu0 %v1778
      %1863 = vmatmul.bf16.gmra.mxu0 %v1651
      %v1864 = vpop.f32.mrf.mxu0
      %v1865 = vadd.f32 %v1836, %v1864
      %v1866 = vpop.f32.mrf.mxu0
      %v1867 = vadd.f32 %v1838, %v1866
      %1868 = vmatmul.bf16.gmra.mxu0 %v1653
      %v1869 = vpop.f32.mrf.mxu0
      %v1870 = vadd.f32 %v1841, %v1869
      %v1871 = vpop.f32.mrf.mxu0
      %v1872 = vadd.f32 %v1843, %v1871
      %1873 = vmatmul.bf16.gmra.mxu0 %v1655
      %v1874 = vpop.f32.mrf.mxu0
      %v1875 = vadd.f32 %v1846, %v1874
      %v1876 = vpop.f32.mrf.mxu0
      %v1877 = vadd.f32 %v1848, %v1876
      %1878 = vmatmul.bf16.gmra.mxu0 %v1657
      %v1879 = vpop.f32.mrf.mxu0
      %v1880 = vadd.f32 %v1851, %v1879
      %v1881 = vpop.f32.mrf.mxu0
      %v1882 = vadd.f32 %v1853, %v1881
      %1883 = vdwg.mxu0
      %1884 = vmatpush.bf16.msra.mxu0 %v1777
      %1885 = vmatpush.bf16.msra.mxu0 %v1775
      %1886 = vmatpush.bf16.msra.mxu0 %v1773
      %1887 = vmatpush.bf16.msra.mxu0 %v1771
      %1888 = vmatpush.bf16.msra.mxu0 %v1769
      %1889 = vmatpush.bf16.msra.mxu0 %v1767
      %1890 = vmatpush.bf16.msra.mxu0 %v1765
      %1891 = vmatpush.bf16.msra.mxu0 %v1763
      %1892 = vmatmul.bf16.gmra.mxu0 %v1650
      %v1893 = vpop.f32.mrf.mxu0
      %v1894 = vadd.f32 0.0, %v1893
      %v1895 = vpop.f32.mrf.mxu0
      %v1896 = vadd.f32 0.0, %v1895
      %1897 = vmatmul.bf16.gmra.mxu0 %v1652
      %v1898 = vpop.f32.mrf.mxu0
      %v1899 = vadd.f32 0.0, %v1898
      %v1900 = vpop.f32.mrf.mxu0
      %v1901 = vadd.f32 0.0, %v1900
      %1902 = vmatmul.bf16.gmra.mxu0 %v1654
      %v1903 = vpop.f32.mrf.mxu0
      %v1904 = vadd.f32 0.0, %v1903
      %v1905 = vpop.f32.mrf.mxu0
      %v1906 = vadd.f32 0.0, %v1905
      %1907 = vmatmul.bf16.gmra.mxu0 %v1656
      %v1908 = vpop.f32.mrf.mxu0
      %v1909 = vadd.f32 0.0, %v1908
      %v1910 = vpop.f32.mrf.mxu0
      %v1911 = vadd.f32 0.0, %v1910
      %1912 = vdwg.mxu0
      %1913 = vmatpush.bf16.msra.mxu0 %v1793
      %1914 = vmatpush.bf16.msra.mxu0 %v1791
      %1915 = vmatpush.bf16.msra.mxu0 %v1789
      %1916 = vmatpush.bf16.msra.mxu0 %v1787
      %1917 = vmatpush.bf16.msra.mxu0 %v1785
      %1918 = vmatpush.bf16.msra.mxu0 %v1783
      %1919 = vmatpush.bf16.msra.mxu0 %v1781
      %1920 = vmatpush.bf16.msra.mxu0 %v1779
      %1921 = vmatmul.bf16.gmra.mxu0 %v1651
      %v1922 = vpop.f32.mrf.mxu0
      %v1923 = vadd.f32 %v1894, %v1922
      %v1924 = vpop.f32.mrf.mxu0
      %v1925 = vadd.f32 %v1896, %v1924
      %1926 = vmatmul.bf16.gmra.mxu0 %v1653
      %v1927 = vpop.f32.mrf.mxu0
      %v1928 = vadd.f32 %v1899, %v1927
      %v1929 = vpop.f32.mrf.mxu0
      %v1930 = vadd.f32 %v1901, %v1929
      %1931 = vmatmul.bf16.gmra.mxu0 %v1655
      %v1932 = vpop.f32.mrf.mxu0
      %v1933 = vadd.f32 %v1904, %v1932
      %v1934 = vpop.f32.mrf.mxu0
      %v1935 = vadd.f32 %v1906, %v1934
      %1936 = vmatmul.bf16.gmra.mxu0 %v1657
      %v1937 = vpop.f32.mrf.mxu0
      %v1938 = vadd.f32 %v1909, %v1937
      %v1939 = vpop.f32.mrf.mxu0
      %v1940 = vadd.f32 %v1911, %v1939
      %1941 = vdwg.mxu0
      %s1942 = scalar_lea.vmem %s3, 256
      %v1943 = vld [vmem:[%s1942] sm:$0xff]
      %v1944 = vld [vmem:[%s1942 + $0x8] sm:$0xff]
      %v1945 = vld [vmem:[%s1942 + $0x10] sm:$0xff]
      %v1946 = vld [vmem:[%s1942 + $0x18] sm:$0xff]
      %v1947 = vld [vmem:[%s1942 + $0x20] sm:$0xff]
      %v1948 = vld [vmem:[%s1942 + $0x28] sm:$0xff]
      %v1949 = vld [vmem:[%s1942 + $0x30] sm:$0xff]
      %v1950 = vld [vmem:[%s1942 + $0x38] sm:$0xff]
      %v1951 = vld [vmem:[%s1942 + $0x40] sm:$0xff]
      %v1952 = vld [vmem:[%s1942 + $0x48] sm:$0xff]
      %v1953 = vld [vmem:[%s1942 + $0x50] sm:$0xff]
      %v1954 = vld [vmem:[%s1942 + $0x58] sm:$0xff]
      %v1955 = vld [vmem:[%s1942 + $0x60] sm:$0xff]
      %v1956 = vld [vmem:[%s1942 + $0x68] sm:$0xff]
      %v1957 = vld [vmem:[%s1942 + $0x70] sm:$0xff]
      %v1958 = vld [vmem:[%s1942 + $0x78] sm:$0xff]
      %v1959 = vld [vmem:[%s1942 + $0x80] sm:$0xff]
      %v1960 = vld [vmem:[%s1942 + $0x88] sm:$0xff]
      %v1961 = vld [vmem:[%s1942 + $0x90] sm:$0xff]
      %v1962 = vld [vmem:[%s1942 + $0x98] sm:$0xff]
      %v1963 = vld [vmem:[%s1942 + $0xa0] sm:$0xff]
      %v1964 = vld [vmem:[%s1942 + $0xa8] sm:$0xff]
      %v1965 = vld [vmem:[%s1942 + $0xb0] sm:$0xff]
      %v1966 = vld [vmem:[%s1942 + $0xb8] sm:$0xff]
      %v1967 = vld [vmem:[%s1942 + $0xc0] sm:$0xff]
      %v1968 = vld [vmem:[%s1942 + $0xc8] sm:$0xff]
      %v1969 = vld [vmem:[%s1942 + $0xd0] sm:$0xff]
      %v1970 = vld [vmem:[%s1942 + $0xd8] sm:$0xff]
      %v1971 = vld [vmem:[%s1942 + $0xe0] sm:$0xff]
      %v1972 = vld [vmem:[%s1942 + $0xe8] sm:$0xff]
      %v1973 = vld [vmem:[%s1942 + $0xf0] sm:$0xff]
      %v1974 = vld [vmem:[%s1942 + $0xf8] sm:$0xff]
      %v2007 = vunpack.c.l.b16 %v1943
      %v2008 = vunpack.c.h.b16 %v1943
      %v2009 = vunpack.c.l.b16 %v1944
      %v2010 = vunpack.c.h.b16 %v1944
      %v2011 = vunpack.c.l.b16 %v1945
      %v2012 = vunpack.c.h.b16 %v1945
      %v2013 = vunpack.c.l.b16 %v1946
      %v2014 = vunpack.c.h.b16 %v1946
      %v2015 = vunpack.c.l.b16 %v1947
      %v2016 = vunpack.c.h.b16 %v1947
      %v2017 = vunpack.c.l.b16 %v1948
      %v2018 = vunpack.c.h.b16 %v1948
      %v2019 = vunpack.c.l.b16 %v1949
      %v2020 = vunpack.c.h.b16 %v1949
      %v2021 = vunpack.c.l.b16 %v1950
      %v2022 = vunpack.c.h.b16 %v1950
      %v2023 = vunpack.c.l.b16 %v1951
      %v2024 = vunpack.c.h.b16 %v1951
      %v2025 = vunpack.c.l.b16 %v1952
      %v2026 = vunpack.c.h.b16 %v1952
      %v2027 = vunpack.c.l.b16 %v1953
      %v2028 = vunpack.c.h.b16 %v1953
      %v2029 = vunpack.c.l.b16 %v1954
      %v2030 = vunpack.c.h.b16 %v1954
      %v2031 = vunpack.c.l.b16 %v1955
      %v2032 = vunpack.c.h.b16 %v1955
      %v2033 = vunpack.c.l.b16 %v1956
      %v2034 = vunpack.c.h.b16 %v1956
      %v2035 = vunpack.c.l.b16 %v1957
      %v2036 = vunpack.c.h.b16 %v1957
      %v2037 = vunpack.c.l.b16 %v1958
      %v2038 = vunpack.c.h.b16 %v1958
      %v2039 = vunpack.c.l.b16 %v1959
      %v2040 = vunpack.c.h.b16 %v1959
      %v2041 = vunpack.c.l.b16 %v1960
      %v2042 = vunpack.c.h.b16 %v1960
      %v2043 = vunpack.c.l.b16 %v1961
      %v2044 = vunpack.c.h.b16 %v1961
      %v2045 = vunpack.c.l.b16 %v1962
      %v2046 = vunpack.c.h.b16 %v1962
      %v2047 = vunpack.c.l.b16 %v1963
      %v2048 = vunpack.c.h.b16 %v1963
      %v2049 = vunpack.c.l.b16 %v1964
      %v2050 = vunpack.c.h.b16 %v1964
      %v2051 = vunpack.c.l.b16 %v1965
      %v2052 = vunpack.c.h.b16 %v1965
      %v2053 = vunpack.c.l.b16 %v1966
      %v2054 = vunpack.c.h.b16 %v1966
      %v2055 = vunpack.c.l.b16 %v1967
      %v2056 = vunpack.c.h.b16 %v1967
      %v2057 = vunpack.c.l.b16 %v1968
      %v2058 = vunpack.c.h.b16 %v1968
      %v2059 = vunpack.c.l.b16 %v1969
      %v2060 = vunpack.c.h.b16 %v1969
      %v2061 = vunpack.c.l.b16 %v1970
      %v2062 = vunpack.c.h.b16 %v1970
      %v2063 = vunpack.c.l.b16 %v1971
      %v2064 = vunpack.c.h.b16 %v1971
      %v2065 = vunpack.c.l.b16 %v1972
      %v2066 = vunpack.c.h.b16 %v1972
      %v2067 = vunpack.c.l.b16 %v1973
      %v2068 = vunpack.c.h.b16 %v1973
      %v2069 = vunpack.c.l.b16 %v1974
      %v2070 = vunpack.c.h.b16 %v1974
      %v2071 = vpack.c.b16 %v2009, %v2007
      %v2072 = vpack.c.b16 %v2010, %v2008
      %v2073 = vpack.c.b16 %v2013, %v2011
      %v2074 = vpack.c.b16 %v2014, %v2012
      %v2075 = vpack.c.b16 %v2017, %v2015
      %v2076 = vpack.c.b16 %v2018, %v2016
      %v2077 = vpack.c.b16 %v2021, %v2019
      %v2078 = vpack.c.b16 %v2022, %v2020
      %v2079 = vpack.c.b16 %v2025, %v2023
      %v2080 = vpack.c.b16 %v2026, %v2024
      %v2081 = vpack.c.b16 %v2029, %v2027
      %v2082 = vpack.c.b16 %v2030, %v2028
      %v2083 = vpack.c.b16 %v2033, %v2031
      %v2084 = vpack.c.b16 %v2034, %v2032
      %v2085 = vpack.c.b16 %v2037, %v2035
      %v2086 = vpack.c.b16 %v2038, %v2036
      %v2087 = vpack.c.b16 %v2041, %v2039
      %v2088 = vpack.c.b16 %v2042, %v2040
      %v2089 = vpack.c.b16 %v2045, %v2043
      %v2090 = vpack.c.b16 %v2046, %v2044
      %v2091 = vpack.c.b16 %v2049, %v2047
      %v2092 = vpack.c.b16 %v2050, %v2048
      %v2093 = vpack.c.b16 %v2053, %v2051
      %v2094 = vpack.c.b16 %v2054, %v2052
      %v2095 = vpack.c.b16 %v2057, %v2055
      %v2096 = vpack.c.b16 %v2058, %v2056
      %v2097 = vpack.c.b16 %v2061, %v2059
      %v2098 = vpack.c.b16 %v2062, %v2060
      %v2099 = vpack.c.b16 %v2065, %v2063
      %v2100 = vpack.c.b16 %v2066, %v2064
      %v2101 = vpack.c.b16 %v2069, %v2067
      %v2102 = vpack.c.b16 %v2070, %v2068
      %2135 = vmatpush.bf16.msra.mxu0 %v2085
      %2136 = vmatpush.bf16.msra.mxu0 %v2083
      %2137 = vmatpush.bf16.msra.mxu0 %v2081
      %2138 = vmatpush.bf16.msra.mxu0 %v2079
      %2139 = vmatpush.bf16.msra.mxu0 %v2077
      %2140 = vmatpush.bf16.msra.mxu0 %v2075
      %2141 = vmatpush.bf16.msra.mxu0 %v2073
      %2142 = vmatpush.bf16.msra.mxu0 %v2071
      %2143 = vmatmul.bf16.gmra.mxu0 %v1650
      %v2144 = vpop.f32.mrf.mxu0
      %v2145 = vadd.f32 0.0, %v2144
      %v2146 = vpop.f32.mrf.mxu0
      %v2147 = vadd.f32 0.0, %v2146
      %2148 = vmatmul.bf16.gmra.mxu0 %v1652
      %v2149 = vpop.f32.mrf.mxu0
      %v2150 = vadd.f32 0.0, %v2149
      %v2151 = vpop.f32.mrf.mxu0
      %v2152 = vadd.f32 0.0, %v2151
      %2153 = vmatmul.bf16.gmra.mxu0 %v1654
      %v2154 = vpop.f32.mrf.mxu0
      %v2155 = vadd.f32 0.0, %v2154
      %v2156 = vpop.f32.mrf.mxu0
      %v2157 = vadd.f32 0.0, %v2156
      %2158 = vmatmul.bf16.gmra.mxu0 %v1656
      %v2159 = vpop.f32.mrf.mxu0
      %v2160 = vadd.f32 0.0, %v2159
      %v2161 = vpop.f32.mrf.mxu0
      %v2162 = vadd.f32 0.0, %v2161
      %2163 = vdwg.mxu0
      %2164 = vmatpush.bf16.msra.mxu0 %v2101
      %2165 = vmatpush.bf16.msra.mxu0 %v2099
      %2166 = vmatpush.bf16.msra.mxu0 %v2097
      %2167 = vmatpush.bf16.msra.mxu0 %v2095
      %2168 = vmatpush.bf16.msra.mxu0 %v2093
      %2169 = vmatpush.bf16.msra.mxu0 %v2091
      %2170 = vmatpush.bf16.msra.mxu0 %v2089
      %2171 = vmatpush.bf16.msra.mxu0 %v2087
      %2172 = vmatmul.bf16.gmra.mxu0 %v1651
      %v2173 = vpop.f32.mrf.mxu0
      %v2174 = vadd.f32 %v2145, %v2173
      %v2175 = vpop.f32.mrf.mxu0
      %v2176 = vadd.f32 %v2147, %v2175
      %2177 = vmatmul.bf16.gmra.mxu0 %v1653
      %v2178 = vpop.f32.mrf.mxu0
      %v2179 = vadd.f32 %v2150, %v2178
      %v2180 = vpop.f32.mrf.mxu0
      %v2181 = vadd.f32 %v2152, %v2180
      %2182 = vmatmul.bf16.gmra.mxu0 %v1655
      %v2183 = vpop.f32.mrf.mxu0
      %v2184 = vadd.f32 %v2155, %v2183
      %v2185 = vpop.f32.mrf.mxu0
      %v2186 = vadd.f32 %v2157, %v2185
      %2187 = vmatmul.bf16.gmra.mxu0 %v1657
      %v2188 = vpop.f32.mrf.mxu0
      %v2189 = vadd.f32 %v2160, %v2188
      %v2190 = vpop.f32.mrf.mxu0
      %v2191 = vadd.f32 %v2162, %v2190
      %2192 = vdwg.mxu0
      %2193 = vmatpush.bf16.msra.mxu0 %v2086
      %2194 = vmatpush.bf16.msra.mxu0 %v2084
      %2195 = vmatpush.bf16.msra.mxu0 %v2082
      %2196 = vmatpush.bf16.msra.mxu0 %v2080
      %2197 = vmatpush.bf16.msra.mxu0 %v2078
      %2198 = vmatpush.bf16.msra.mxu0 %v2076
      %2199 = vmatpush.bf16.msra.mxu0 %v2074
      %2200 = vmatpush.bf16.msra.mxu0 %v2072
      %2201 = vmatmul.bf16.gmra.mxu0 %v1650
      %v2202 = vpop.f32.mrf.mxu0
      %v2203 = vadd.f32 0.0, %v2202
      %v2204 = vpop.f32.mrf.mxu0
      %v2205 = vadd.f32 0.0, %v2204
      %2206 = vmatmul.bf16.gmra.mxu0 %v1652
      %v2207 = vpop.f32.mrf.mxu0
      %v2208 = vadd.f32 0.0, %v2207
      %v2209 = vpop.f32.mrf.mxu0
      %v2210 = vadd.f32 0.0, %v2209
      %2211 = vmatmul.bf16.gmra.mxu0 %v1654
      %v2212 = vpop.f32.mrf.mxu0
      %v2213 = vadd.f32 0.0, %v2212
      %v2214 = vpop.f32.mrf.mxu0
      %v2215 = vadd.f32 0.0, %v2214
      %2216 = vmatmul.bf16.gmra.mxu0 %v1656
      %v2217 = vpop.f32.mrf.mxu0
      %v2218 = vadd.f32 0.0, %v2217
      %v2219 = vpop.f32.mrf.mxu0
      %v2220 = vadd.f32 0.0, %v2219
      %2221 = vdwg.mxu0
      %2222 = vmatpush.bf16.msra.mxu0 %v2102
      %2223 = vmatpush.bf16.msra.mxu0 %v2100
      %2224 = vmatpush.bf16.msra.mxu0 %v2098
      %2225 = vmatpush.bf16.msra.mxu0 %v2096
      %2226 = vmatpush.bf16.msra.mxu0 %v2094
      %2227 = vmatpush.bf16.msra.mxu0 %v2092
      %2228 = vmatpush.bf16.msra.mxu0 %v2090
      %2229 = vmatpush.bf16.msra.mxu0 %v2088
      %2230 = vmatmul.bf16.gmra.mxu0 %v1651
      %v2231 = vpop.f32.mrf.mxu0
      %v2232 = vadd.f32 %v2203, %v2231
      %v2233 = vpop.f32.mrf.mxu0
      %v2234 = vadd.f32 %v2205, %v2233
      %2235 = vmatmul.bf16.gmra.mxu0 %v1653
      %v2236 = vpop.f32.mrf.mxu0
      %v2237 = vadd.f32 %v2208, %v2236
      %v2238 = vpop.f32.mrf.mxu0
      %v2239 = vadd.f32 %v2210, %v2238
      %2240 = vmatmul.bf16.gmra.mxu0 %v1655
      %v2241 = vpop.f32.mrf.mxu0
      %v2242 = vadd.f32 %v2213, %v2241
      %v2243 = vpop.f32.mrf.mxu0
      %v2244 = vadd.f32 %v2215, %v2243
      %2245 = vmatmul.bf16.gmra.mxu0 %v1657
      %v2246 = vpop.f32.mrf.mxu0
      %v2247 = vadd.f32 %v2218, %v2246
      %v2248 = vpop.f32.mrf.mxu0
      %v2249 = vadd.f32 %v2220, %v2248
      %2250 = vdwg.mxu0
      %s2251 = scalar_lea.vmem %s3, 512
      %v2252 = vld [vmem:[%s2251] sm:$0xff]
      %v2253 = vld [vmem:[%s2251 + $0x8] sm:$0xff]
      %v2254 = vld [vmem:[%s2251 + $0x10] sm:$0xff]
      %v2255 = vld [vmem:[%s2251 + $0x18] sm:$0xff]
      %v2256 = vld [vmem:[%s2251 + $0x20] sm:$0xff]
      %v2257 = vld [vmem:[%s2251 + $0x28] sm:$0xff]
      %v2258 = vld [vmem:[%s2251 + $0x30] sm:$0xff]
      %v2259 = vld [vmem:[%s2251 + $0x38] sm:$0xff]
      %v2260 = vld [vmem:[%s2251 + $0x40] sm:$0xff]
      %v2261 = vld [vmem:[%s2251 + $0x48] sm:$0xff]
      %v2262 = vld [vmem:[%s2251 + $0x50] sm:$0xff]
      %v2263 = vld [vmem:[%s2251 + $0x58] sm:$0xff]
      %v2264 = vld [vmem:[%s2251 + $0x60] sm:$0xff]
      %v2265 = vld [vmem:[%s2251 + $0x68] sm:$0xff]
      %v2266 = vld [vmem:[%s2251 + $0x70] sm:$0xff]
      %v2267 = vld [vmem:[%s2251 + $0x78] sm:$0xff]
      %v2268 = vld [vmem:[%s2251 + $0x80] sm:$0xff]
      %v2269 = vld [vmem:[%s2251 + $0x88] sm:$0xff]
      %v2270 = vld [vmem:[%s2251 + $0x90] sm:$0xff]
      %v2271 = vld [vmem:[%s2251 + $0x98] sm:$0xff]
      %v2272 = vld [vmem:[%s2251 + $0xa0] sm:$0xff]
      %v2273 = vld [vmem:[%s2251 + $0xa8] sm:$0xff]
      %v2274 = vld [vmem:[%s2251 + $0xb0] sm:$0xff]
      %v2275 = vld [vmem:[%s2251 + $0xb8] sm:$0xff]
      %v2276 = vld [vmem:[%s2251 + $0xc0] sm:$0xff]
      %v2277 = vld [vmem:[%s2251 + $0xc8] sm:$0xff]
      %v2278 = vld [vmem:[%s2251 + $0xd0] sm:$0xff]
      %v2279 = vld [vmem:[%s2251 + $0xd8] sm:$0xff]
      %v2280 = vld [vmem:[%s2251 + $0xe0] sm:$0xff]
      %v2281 = vld [vmem:[%s2251 + $0xe8] sm:$0xff]
      %v2282 = vld [vmem:[%s2251 + $0xf0] sm:$0xff]
      %v2283 = vld [vmem:[%s2251 + $0xf8] sm:$0xff]
      %v2316 = vunpack.c.l.b16 %v2252
      %v2317 = vunpack.c.h.b16 %v2252
      %v2318 = vunpack.c.l.b16 %v2253
      %v2319 = vunpack.c.h.b16 %v2253
      %v2320 = vunpack.c.l.b16 %v2254
      %v2321 = vunpack.c.h.b16 %v2254
      %v2322 = vunpack.c.l.b16 %v2255
      %v2323 = vunpack.c.h.b16 %v2255
      %v2324 = vunpack.c.l.b16 %v2256
      %v2325 = vunpack.c.h.b16 %v2256
      %v2326 = vunpack.c.l.b16 %v2257
      %v2327 = vunpack.c.h.b16 %v2257
      %v2328 = vunpack.c.l.b16 %v2258
      %v2329 = vunpack.c.h.b16 %v2258
      %v2330 = vunpack.c.l.b16 %v2259
      %v2331 = vunpack.c.h.b16 %v2259
      %v2332 = vunpack.c.l.b16 %v2260
      %v2333 = vunpack.c.h.b16 %v2260
      %v2334 = vunpack.c.l.b16 %v2261
      %v2335 = vunpack.c.h.b16 %v2261
      %v2336 = vunpack.c.l.b16 %v2262
      %v2337 = vunpack.c.h.b16 %v2262
      %v2338 = vunpack.c.l.b16 %v2263
      %v2339 = vunpack.c.h.b16 %v2263
      %v2340 = vunpack.c.l.b16 %v2264
      %v2341 = vunpack.c.h.b16 %v2264
      %v2342 = vunpack.c.l.b16 %v2265
      %v2343 = vunpack.c.h.b16 %v2265
      %v2344 = vunpack.c.l.b16 %v2266
      %v2345 = vunpack.c.h.b16 %v2266
      %v2346 = vunpack.c.l.b16 %v2267
      %v2347 = vunpack.c.h.b16 %v2267
      %v2348 = vunpack.c.l.b16 %v2268
      %v2349 = vunpack.c.h.b16 %v2268
      %v2350 = vunpack.c.l.b16 %v2269
      %v2351 = vunpack.c.h.b16 %v2269
      %v2352 = vunpack.c.l.b16 %v2270
      %v2353 = vunpack.c.h.b16 %v2270
      %v2354 = vunpack.c.l.b16 %v2271
      %v2355 = vunpack.c.h.b16 %v2271
      %v2356 = vunpack.c.l.b16 %v2272
      %v2357 = vunpack.c.h.b16 %v2272
      %v2358 = vunpack.c.l.b16 %v2273
      %v2359 = vunpack.c.h.b16 %v2273
      %v2360 = vunpack.c.l.b16 %v2274
      %v2361 = vunpack.c.h.b16 %v2274
      %v2362 = vunpack.c.l.b16 %v2275
      %v2363 = vunpack.c.h.b16 %v2275
      %v2364 = vunpack.c.l.b16 %v2276
      %v2365 = vunpack.c.h.b16 %v2276
      %v2366 = vunpack.c.l.b16 %v2277
      %v2367 = vunpack.c.h.b16 %v2277
      %v2368 = vunpack.c.l.b16 %v2278
      %v2369 = vunpack.c.h.b16 %v2278
      %v2370 = vunpack.c.l.b16 %v2279
      %v2371 = vunpack.c.h.b16 %v2279
      %v2372 = vunpack.c.l.b16 %v2280
      %v2373 = vunpack.c.h.b16 %v2280
      %v2374 = vunpack.c.l.b16 %v2281
      %v2375 = vunpack.c.h.b16 %v2281
      %v2376 = vunpack.c.l.b16 %v2282
      %v2377 = vunpack.c.h.b16 %v2282
      %v2378 = vunpack.c.l.b16 %v2283
      %v2379 = vunpack.c.h.b16 %v2283
      %v2380 = vpack.c.b16 %v2318, %v2316
      %v2381 = vpack.c.b16 %v2319, %v2317
      %v2382 = vpack.c.b16 %v2322, %v2320
      %v2383 = vpack.c.b16 %v2323, %v2321
      %v2384 = vpack.c.b16 %v2326, %v2324
      %v2385 = vpack.c.b16 %v2327, %v2325
      %v2386 = vpack.c.b16 %v2330, %v2328
      %v2387 = vpack.c.b16 %v2331, %v2329
      %v2388 = vpack.c.b16 %v2334, %v2332
      %v2389 = vpack.c.b16 %v2335, %v2333
      %v2390 = vpack.c.b16 %v2338, %v2336
      %v2391 = vpack.c.b16 %v2339, %v2337
      %v2392 = vpack.c.b16 %v2342, %v2340
      %v2393 = vpack.c.b16 %v2343, %v2341
      %v2394 = vpack.c.b16 %v2346, %v2344
      %v2395 = vpack.c.b16 %v2347, %v2345
      %v2396 = vpack.c.b16 %v2350, %v2348
      %v2397 = vpack.c.b16 %v2351, %v2349
      %v2398 = vpack.c.b16 %v2354, %v2352
      %v2399 = vpack.c.b16 %v2355, %v2353
      %v2400 = vpack.c.b16 %v2358, %v2356
      %v2401 = vpack.c.b16 %v2359, %v2357
      %v2402 = vpack.c.b16 %v2362, %v2360
      %v2403 = vpack.c.b16 %v2363, %v2361
      %v2404 = vpack.c.b16 %v2366, %v2364
      %v2405 = vpack.c.b16 %v2367, %v2365
      %v2406 = vpack.c.b16 %v2370, %v2368
      %v2407 = vpack.c.b16 %v2371, %v2369
      %v2408 = vpack.c.b16 %v2374, %v2372
      %v2409 = vpack.c.b16 %v2375, %v2373
      %v2410 = vpack.c.b16 %v2378, %v2376
      %v2411 = vpack.c.b16 %v2379, %v2377
      %2444 = vmatpush.bf16.msra.mxu0 %v2394
      %2445 = vmatpush.bf16.msra.mxu0 %v2392
      %2446 = vmatpush.bf16.msra.mxu0 %v2390
      %2447 = vmatpush.bf16.msra.mxu0 %v2388
      %2448 = vmatpush.bf16.msra.mxu0 %v2386
      %2449 = vmatpush.bf16.msra.mxu0 %v2384
      %2450 = vmatpush.bf16.msra.mxu0 %v2382
      %2451 = vmatpush.bf16.msra.mxu0 %v2380
      %2452 = vmatmul.bf16.gmra.mxu0 %v1650
      %v2453 = vpop.f32.mrf.mxu0
      %v2454 = vadd.f32 0.0, %v2453
      %v2455 = vpop.f32.mrf.mxu0
      %v2456 = vadd.f32 0.0, %v2455
      %2457 = vmatmul.bf16.gmra.mxu0 %v1652
      %v2458 = vpop.f32.mrf.mxu0
      %v2459 = vadd.f32 0.0, %v2458
      %v2460 = vpop.f32.mrf.mxu0
      %v2461 = vadd.f32 0.0, %v2460
      %2462 = vmatmul.bf16.gmra.mxu0 %v1654
      %v2463 = vpop.f32.mrf.mxu0
      %v2464 = vadd.f32 0.0, %v2463
      %v2465 = vpop.f32.mrf.mxu0
      %v2466 = vadd.f32 0.0, %v2465
      %2467 = vmatmul.bf16.gmra.mxu0 %v1656
      %v2468 = vpop.f32.mrf.mxu0
      %v2469 = vadd.f32 0.0, %v2468
      %v2470 = vpop.f32.mrf.mxu0
      %v2471 = vadd.f32 0.0, %v2470
      %2472 = vdwg.mxu0
      %2473 = vmatpush.bf16.msra.mxu0 %v2410
      %2474 = vmatpush.bf16.msra.mxu0 %v2408
      %2475 = vmatpush.bf16.msra.mxu0 %v2406
      %2476 = vmatpush.bf16.msra.mxu0 %v2404
      %2477 = vmatpush.bf16.msra.mxu0 %v2402
      %2478 = vmatpush.bf16.msra.mxu0 %v2400
      %2479 = vmatpush.bf16.msra.mxu0 %v2398
      %2480 = vmatpush.bf16.msra.mxu0 %v2396
      %2481 = vmatmul.bf16.gmra.mxu0 %v1651
      %v2482 = vpop.f32.mrf.mxu0
      %v2483 = vadd.f32 %v2454, %v2482
      %v2484 = vpop.f32.mrf.mxu0
      %v2485 = vadd.f32 %v2456, %v2484
      %2486 = vmatmul.bf16.gmra.mxu0 %v1653
      %v2487 = vpop.f32.mrf.mxu0
      %v2488 = vadd.f32 %v2459, %v2487
      %v2489 = vpop.f32.mrf.mxu0
      %v2490 = vadd.f32 %v2461, %v2489
      %2491 = vmatmul.bf16.gmra.mxu0 %v1655
      %v2492 = vpop.f32.mrf.mxu0
      %v2493 = vadd.f32 %v2464, %v2492
      %v2494 = vpop.f32.mrf.mxu0
      %v2495 = vadd.f32 %v2466, %v2494
      %2496 = vmatmul.bf16.gmra.mxu0 %v1657
      %v2497 = vpop.f32.mrf.mxu0
      %v2498 = vadd.f32 %v2469, %v2497
      %v2499 = vpop.f32.mrf.mxu0
      %v2500 = vadd.f32 %v2471, %v2499
      %2501 = vdwg.mxu0
      %2502 = vmatpush.bf16.msra.mxu0 %v2395
      %2503 = vmatpush.bf16.msra.mxu0 %v2393
      %2504 = vmatpush.bf16.msra.mxu0 %v2391
      %2505 = vmatpush.bf16.msra.mxu0 %v2389
      %2506 = vmatpush.bf16.msra.mxu0 %v2387
      %2507 = vmatpush.bf16.msra.mxu0 %v2385
      %2508 = vmatpush.bf16.msra.mxu0 %v2383
      %2509 = vmatpush.bf16.msra.mxu0 %v2381
      %2510 = vmatmul.bf16.gmra.mxu0 %v1650
      %v2511 = vpop.f32.mrf.mxu0
      %v2512 = vadd.f32 0.0, %v2511
      %v2513 = vpop.f32.mrf.mxu0
      %v2514 = vadd.f32 0.0, %v2513
      %2515 = vmatmul.bf16.gmra.mxu0 %v1652
      %v2516 = vpop.f32.mrf.mxu0
      %v2517 = vadd.f32 0.0, %v2516
      %v2518 = vpop.f32.mrf.mxu0
      %v2519 = vadd.f32 0.0, %v2518
      %2520 = vmatmul.bf16.gmra.mxu0 %v1654
      %v2521 = vpop.f32.mrf.mxu0
      %v2522 = vadd.f32 0.0, %v2521
      %v2523 = vpop.f32.mrf.mxu0
      %v2524 = vadd.f32 0.0, %v2523
      %2525 = vmatmul.bf16.gmra.mxu0 %v1656
      %v2526 = vpop.f32.mrf.mxu0
      %v2527 = vadd.f32 0.0, %v2526
      %v2528 = vpop.f32.mrf.mxu0
      %v2529 = vadd.f32 0.0, %v2528
      %2530 = vdwg.mxu0
      %2531 = vmatpush.bf16.msra.mxu0 %v2411
      %2532 = vmatpush.bf16.msra.mxu0 %v2409
      %2533 = vmatpush.bf16.msra.mxu0 %v2407
      %2534 = vmatpush.bf16.msra.mxu0 %v2405
      %2535 = vmatpush.bf16.msra.mxu0 %v2403
      %2536 = vmatpush.bf16.msra.mxu0 %v2401
      %2537 = vmatpush.bf16.msra.mxu0 %v2399
      %2538 = vmatpush.bf16.msra.mxu0 %v2397
      %2539 = vmatmul.bf16.gmra.mxu0 %v1651
      %v2540 = vpop.f32.mrf.mxu0
      %v2541 = vadd.f32 %v2512, %v2540
      %v2542 = vpop.f32.mrf.mxu0
      %v2543 = vadd.f32 %v2514, %v2542
      %2544 = vmatmul.bf16.gmra.mxu0 %v1653
      %v2545 = vpop.f32.mrf.mxu0
      %v2546 = vadd.f32 %v2517, %v2545
      %v2547 = vpop.f32.mrf.mxu0
      %v2548 = vadd.f32 %v2519, %v2547
      %2549 = vmatmul.bf16.gmra.mxu0 %v1655
      %v2550 = vpop.f32.mrf.mxu0
      %v2551 = vadd.f32 %v2522, %v2550
      %v2552 = vpop.f32.mrf.mxu0
      %v2553 = vadd.f32 %v2524, %v2552
      %2554 = vmatmul.bf16.gmra.mxu0 %v1657
      %v2555 = vpop.f32.mrf.mxu0
      %v2556 = vadd.f32 %v2527, %v2555
      %v2557 = vpop.f32.mrf.mxu0
      %v2558 = vadd.f32 %v2529, %v2557
      %2559 = vdwg.mxu0
      %v2576 = vrot.slane %v1865, 7
      %v2577 = vrot.slane %v1923, 7
      %v2578 = vrot.slane %v1867, 7
      %v2579 = vsel %vm1402, %v2576, %v2578
      %v2580 = vrot.slane %v1925, 7
      %v2581 = vsel %vm1402, %v2577, %v2580
      %v2582 = vrot.slane %v1870, 7
      %v2583 = vrot.slane %v1928, 7
      %v2584 = vrot.slane %v1872, 7
      %v2585 = vsel %vm1402, %v2582, %v2584
      %v2586 = vrot.slane %v1930, 7
      %v2587 = vsel %vm1402, %v2583, %v2586
      %v2588 = vrot.slane %v1875, 7
      %v2589 = vrot.slane %v1933, 7
      %v2590 = vrot.slane %v1877, 7
      %v2591 = vsel %vm1402, %v2588, %v2590
      %v2592 = vrot.slane %v1935, 7
      %v2593 = vsel %vm1402, %v2589, %v2592
      %v2594 = vrot.slane %v1880, 7
      %v2595 = vrot.slane %v1938, 7
      %v2596 = vrot.slane %v1882, 7
      %v2597 = vsel %vm1402, %v2594, %v2596
      %v2598 = vrot.slane %v1940, 7
      %v2599 = vsel %vm1402, %v2595, %v2598
      %v2616 = vsel %vm1402, 0.0, %v2576
      %v2617 = vsel %vm1402, 0.0, %v2577
      %v2618 = vsel %vm1402, 0.0, %v2582
      %v2619 = vsel %vm1402, 0.0, %v2583
      %v2620 = vsel %vm1402, 0.0, %v2588
      %v2621 = vsel %vm1402, 0.0, %v2589
      %v2622 = vsel %vm1402, 0.0, %v2594
      %v2623 = vsel %vm1402, 0.0, %v2595
      %v2640 = vrot.slane %v2483, 1
      %v2641 = vrot.slane %v2485, 1
      %v2642 = vsel %vm1467, %v2640, %v2641
      %v2643 = vrot.slane %v2541, 1
      %v2644 = vrot.slane %v2543, 1
      %v2645 = vsel %vm1467, %v2643, %v2644
      %v2646 = vrot.slane %v2488, 1
      %v2647 = vrot.slane %v2490, 1
      %v2648 = vsel %vm1467, %v2646, %v2647
      %v2649 = vrot.slane %v2546, 1
      %v2650 = vrot.slane %v2548, 1
      %v2651 = vsel %vm1467, %v2649, %v2650
      %v2652 = vrot.slane %v2493, 1
      %v2653 = vrot.slane %v2495, 1
      %v2654 = vsel %vm1467, %v2652, %v2653
      %v2655 = vrot.slane %v2551, 1
      %v2656 = vrot.slane %v2553, 1
      %v2657 = vsel %vm1467, %v2655, %v2656
      %v2658 = vrot.slane %v2498, 1
      %v2659 = vrot.slane %v2500, 1
      %v2660 = vsel %vm1467, %v2658, %v2659
      %v2661 = vrot.slane %v2556, 1
      %v2662 = vrot.slane %v2558, 1
      %v2663 = vsel %vm1467, %v2661, %v2662
      %v2680 = vsel %vm1467, %v2641, 0.0
      %v2681 = vsel %vm1467, %v2644, 0.0
      %v2682 = vsel %vm1467, %v2647, 0.0
      %v2683 = vsel %vm1467, %v2650, 0.0
      %v2684 = vsel %vm1467, %v2653, 0.0
      %v2685 = vsel %vm1467, %v2656, 0.0
      %v2686 = vsel %vm1467, %v2659, 0.0
      %v2687 = vsel %vm1467, %v2662, 0.0
      %v2688 = vadd.f32 %v2174, %v2616
      %v2689 = vadd.f32 %v2232, %v2617
      %v2690 = vadd.f32 %v2176, %v2579
      %v2691 = vadd.f32 %v2234, %v2581
      %v2692 = vadd.f32 %v2179, %v2618
      %v2693 = vadd.f32 %v2237, %v2619
      %v2694 = vadd.f32 %v2181, %v2585
      %v2695 = vadd.f32 %v2239, %v2587
      %v2696 = vadd.f32 %v2184, %v2620
      %v2697 = vadd.f32 %v2242, %v2621
      %v2698 = vadd.f32 %v2186, %v2591
      %v2699 = vadd.f32 %v2244, %v2593
      %v2700 = vadd.f32 %v2189, %v2622
      %v2701 = vadd.f32 %v2247, %v2623
      %v2702 = vadd.f32 %v2191, %v2597
      %v2703 = vadd.f32 %v2249, %v2599
      %v2704 = vadd.f32 %v2688, %v2642
      %v2705 = vadd.f32 %v2689, %v2645
      %v2706 = vadd.f32 %v2690, %v2680
      %v2707 = vadd.f32 %v2691, %v2681
      %v2708 = vadd.f32 %v2692, %v2648
      %v2709 = vadd.f32 %v2693, %v2651
      %v2710 = vadd.f32 %v2694, %v2682
      %v2711 = vadd.f32 %v2695, %v2683
      %v2712 = vadd.f32 %v2696, %v2654
      %v2713 = vadd.f32 %v2697, %v2657
      %v2714 = vadd.f32 %v2698, %v2684
      %v2715 = vadd.f32 %v2699, %v2685
      %v2716 = vadd.f32 %v2700, %v2660
      %v2717 = vadd.f32 %v2701, %v2663
      %v2718 = vadd.f32 %v2702, %v2686
      %v2719 = vadd.f32 %v2703, %v2687
      %v2720 = vld [vmem:[%s4] sm:$0x3]
      %v2722 = vperm.slane %v2720, 0
      %v2723 = vperm.slane %v2720, 1
      %v2726 = vadd.f32 %v2704, %v2722
      %v2727 = vadd.f32 %v2705, %v2723
      %v2728 = vadd.f32 %v2706, %v2722
      %v2729 = vadd.f32 %v2707, %v2723
      %v2730 = vadd.f32 %v2708, %v2722
      %v2731 = vadd.f32 %v2709, %v2723
      %v2732 = vadd.f32 %v2710, %v2722
      %v2733 = vadd.f32 %v2711, %v2723
      %v2734 = vadd.f32 %v2712, %v2722
      %v2735 = vadd.f32 %v2713, %v2723
      %v2736 = vadd.f32 %v2714, %v2722
      %v2737 = vadd.f32 %v2715, %v2723
      %v2738 = vadd.f32 %v2716, %v2722
      %v2739 = vadd.f32 %v2717, %v2723
      %v2740 = vadd.f32 %v2718, %v2722
      %v2741 = vadd.f32 %v2719, %v2723
      %v2742 = vadd.f32 %v2726, %v2728
      %v2743 = vrot.slane %v2742, 4
      %v2744 = vadd.f32 %v2742, %v2743
      %v2745 = vrot.slane %v2744, 2
      %v2746 = vadd.f32 %v2744, %v2745
      %v2747 = vrot.slane %v2746, 1
      %v2748 = vadd.f32 %v2746, %v2747
      %v2749 = vadd.f32 %v2727, %v2729
      %v2750 = vrot.slane %v2749, 4
      %v2751 = vadd.f32 %v2749, %v2750
      %v2752 = vrot.slane %v2751, 2
      %v2753 = vadd.f32 %v2751, %v2752
      %v2754 = vrot.slane %v2753, 1
      %v2755 = vadd.f32 %v2753, %v2754
      %v2756 = vadd.f32 %v2730, %v2732
      %v2757 = vrot.slane %v2756, 4
      %v2758 = vadd.f32 %v2756, %v2757
      %v2759 = vrot.slane %v2758, 2
      %v2760 = vadd.f32 %v2758, %v2759
      %v2761 = vrot.slane %v2760, 1
      %v2762 = vadd.f32 %v2760, %v2761
      %v2763 = vadd.f32 %v2731, %v2733
      %v2764 = vrot.slane %v2763, 4
      %v2765 = vadd.f32 %v2763, %v2764
      %v2766 = vrot.slane %v2765, 2
      %v2767 = vadd.f32 %v2765, %v2766
      %v2768 = vrot.slane %v2767, 1
      %v2769 = vadd.f32 %v2767, %v2768
      %v2770 = vadd.f32 %v2734, %v2736
      %v2771 = vrot.slane %v2770, 4
      %v2772 = vadd.f32 %v2770, %v2771
      %v2773 = vrot.slane %v2772, 2
      %v2774 = vadd.f32 %v2772, %v2773
      %v2775 = vrot.slane %v2774, 1
      %v2776 = vadd.f32 %v2774, %v2775
      %v2777 = vadd.f32 %v2735, %v2737
      %v2778 = vrot.slane %v2777, 4
      %v2779 = vadd.f32 %v2777, %v2778
      %v2780 = vrot.slane %v2779, 2
      %v2781 = vadd.f32 %v2779, %v2780
      %v2782 = vrot.slane %v2781, 1
      %v2783 = vadd.f32 %v2781, %v2782
      %v2784 = vadd.f32 %v2738, %v2740
      %v2785 = vrot.slane %v2784, 4
      %v2786 = vadd.f32 %v2784, %v2785
      %v2787 = vrot.slane %v2786, 2
      %v2788 = vadd.f32 %v2786, %v2787
      %v2789 = vrot.slane %v2788, 1
      %v2790 = vadd.f32 %v2788, %v2789
      %v2791 = vadd.f32 %v2739, %v2741
      %v2792 = vrot.slane %v2791, 4
      %v2793 = vadd.f32 %v2791, %v2792
      %v2794 = vrot.slane %v2793, 2
      %v2795 = vadd.f32 %v2793, %v2794
      %v2796 = vrot.slane %v2795, 1
      %v2797 = vadd.f32 %v2795, %v2796
      %v2798 = vpack.c.bf16 %v2748, %v2748
      %v2799 = vpack.c.bf16 %v2755, %v2755
      %v2800 = vpack.c.bf16 %v2762, %v2762
      %v2801 = vpack.c.bf16 %v2769, %v2769
      %v2802 = vpack.c.bf16 %v2776, %v2776
      %v2803 = vpack.c.bf16 %v2783, %v2783
      %v2804 = vpack.c.bf16 %v2790, %v2790
      %v2805 = vpack.c.bf16 %v2797, %v2797
      %v2806 = vld [vmem:[%s9] sm:$0xf]
      %v2807 = vld [vmem:[%s9 + $0x4] sm:$0xf]
      %v2808 = vld [vmem:[%s9 + $0x8] sm:$0xf]
      %v2809 = vld [vmem:[%s9 + $0xc] sm:$0xf]
      %v2810 = vld [vmem:[%s9 + $0x10] sm:$0xf]
      %v2811 = vld [vmem:[%s9 + $0x14] sm:$0xf]
      %v2812 = vld [vmem:[%s9 + $0x18] sm:$0xf]
      %v2813 = vld [vmem:[%s9 + $0x1c] sm:$0xf]
      %v2814 = vld [vmem:[%s9 + $0x20] sm:$0xf]
      %v2815 = vld [vmem:[%s9 + $0x24] sm:$0xf]
      %v2816 = vld [vmem:[%s9 + $0x28] sm:$0xf]
      %v2817 = vld [vmem:[%s9 + $0x2c] sm:$0xf]
      %v2818 = vld [vmem:[%s9 + $0x30] sm:$0xf]
      %v2819 = vld [vmem:[%s9 + $0x34] sm:$0xf]
      %v2820 = vld [vmem:[%s9 + $0x38] sm:$0xf]
      %v2821 = vld [vmem:[%s9 + $0x3c] sm:$0xf]
      %v2822 = vld [vmem:[%s9 + $0x40] sm:$0xf]
      %v2823 = vld [vmem:[%s9 + $0x44] sm:$0xf]
      %v2824 = vld [vmem:[%s9 + $0x48] sm:$0xf]
      %v2825 = vld [vmem:[%s9 + $0x4c] sm:$0xf]
      %v2826 = vld [vmem:[%s9 + $0x50] sm:$0xf]
      %v2827 = vld [vmem:[%s9 + $0x54] sm:$0xf]
      %v2828 = vld [vmem:[%s9 + $0x58] sm:$0xf]
      %v2829 = vld [vmem:[%s9 + $0x5c] sm:$0xf]
      %v2830 = vld [vmem:[%s9 + $0x60] sm:$0xf]
      %v2831 = vld [vmem:[%s9 + $0x64] sm:$0xf]
      %v2832 = vld [vmem:[%s9 + $0x68] sm:$0xf]
      %v2833 = vld [vmem:[%s9 + $0x6c] sm:$0xf]
      %v2834 = vld [vmem:[%s9 + $0x70] sm:$0xf]
      %v2835 = vld [vmem:[%s9 + $0x74] sm:$0xf]
      %v2836 = vld [vmem:[%s9 + $0x78] sm:$0xf]
      %v2837 = vld [vmem:[%s9 + $0x7c] sm:$0xf]
      %v2846 = vunpack.c.l.b16 %v2798
      %v2847 = vunpack.c.l.b16 %v2799
      %v2848 = vunpack.c.l.b16 %v2800
      %v2849 = vunpack.c.l.b16 %v2801
      %v2850 = vunpack.c.l.b16 %v2802
      %v2851 = vunpack.c.l.b16 %v2803
      %v2852 = vunpack.c.l.b16 %v2804
      %v2853 = vunpack.c.l.b16 %v2805
      %vm2854 = vcmask 1041409
      %v2855 = vsel %vm2854, %v2848, %v2846
      %vm2856 = vcmask 1042434
      %v2857 = vsel %vm2856, %v2850, %v2855
      %vm2858 = vcmask 1043459
      %v2859 = vsel %vm2858, %v2852, %v2857
      %v2860 = vsel %vm2854, %v2849, %v2847
      %v2861 = vsel %vm2856, %v2851, %v2860
      %v2862 = vsel %vm2858, %v2853, %v2861
      %v2863 = vpack.c.b16 %v2859, %v2859
      %v2864 = vpack.c.b16 %v2862, %v2862
      %v2899 = vunpack.c.l.b16 %v2806
      %v2900 = vunpack.c.l.b16 %v2807
      %v2901 = vunpack.c.l.b16 %v2808
      %v2902 = vunpack.c.l.b16 %v2809
      %v2903 = vunpack.c.l.b16 %v2810
      %v2904 = vunpack.c.l.b16 %v2811
      %v2905 = vunpack.c.l.b16 %v2812
      %v2906 = vunpack.c.l.b16 %v2813
      %v2907 = vunpack.c.l.b16 %v2814
      %v2908 = vunpack.c.l.b16 %v2815
      %v2909 = vunpack.c.l.b16 %v2816
      %v2910 = vunpack.c.l.b16 %v2817
      %v2911 = vunpack.c.l.b16 %v2818
      %v2912 = vunpack.c.l.b16 %v2819
      %v2913 = vunpack.c.l.b16 %v2820
      %v2914 = vunpack.c.l.b16 %v2821
      %v2915 = vunpack.c.l.b16 %v2822
      %v2916 = vunpack.c.l.b16 %v2823
      %v2917 = vunpack.c.l.b16 %v2824
      %v2918 = vunpack.c.l.b16 %v2825
      %v2919 = vunpack.c.l.b16 %v2826
      %v2920 = vunpack.c.l.b16 %v2827
      %v2921 = vunpack.c.l.b16 %v2828
      %v2922 = vunpack.c.l.b16 %v2829
      %v2923 = vunpack.c.l.b16 %v2830
      %v2924 = vunpack.c.l.b16 %v2831
      %v2925 = vunpack.c.l.b16 %v2832
      %v2926 = vunpack.c.l.b16 %v2833
      %v2927 = vunpack.c.l.b16 %v2834
      %v2928 = vunpack.c.l.b16 %v2835
      %v2929 = vunpack.c.l.b16 %v2836
      %v2930 = vunpack.c.l.b16 %v2837
      %v2931 = vpack.c.b16 %v2900, %v2899
      %v2932 = vpack.c.b16 %v2902, %v2901
      %v2933 = vpack.c.b16 %v2904, %v2903
      %v2934 = vpack.c.b16 %v2906, %v2905
      %v2935 = vpack.c.b16 %v2908, %v2907
      %v2936 = vpack.c.b16 %v2910, %v2909
      %v2937 = vpack.c.b16 %v2912, %v2911
      %v2938 = vpack.c.b16 %v2914, %v2913
      %v2939 = vpack.c.b16 %v2916, %v2915
      %v2940 = vpack.c.b16 %v2918, %v2917
      %v2941 = vpack.c.b16 %v2920, %v2919
      %v2942 = vpack.c.b16 %v2922, %v2921
      %v2943 = vpack.c.b16 %v2924, %v2923
      %v2944 = vpack.c.b16 %v2926, %v2925
      %v2945 = vpack.c.b16 %v2928, %v2927
      %v2946 = vpack.c.b16 %v2930, %v2929
      %2963 = vmatpush.bf16.msra.mxu0 %v2938
      %2964 = vmatpush.bf16.msra.mxu0 %v2937
      %2965 = vmatpush.bf16.msra.mxu0 %v2936
      %2966 = vmatpush.bf16.msra.mxu0 %v2935
      %2967 = vmatpush.bf16.msra.mxu0 %v2934
      %2968 = vmatpush.bf16.msra.mxu0 %v2933
      %2969 = vmatpush.bf16.msra.mxu0 %v2932
      %2970 = vmatpush.bf16.msra.mxu0 %v2931
      %2971 = vmatmul.bf16.gmra.mxu0 %v2863
      %v2972 = vpop.f32.mrf.mxu0
      %v2973 = vadd.f32 0.0, %v2972
      %v2974 = vpop.f32.mrf.mxu0
      %2975 = vdwg.mxu0
      %2976 = vmatpush.bf16.msra.mxu0 %v2946
      %2977 = vmatpush.bf16.msra.mxu0 %v2945
      %2978 = vmatpush.bf16.msra.mxu0 %v2944
      %2979 = vmatpush.bf16.msra.mxu0 %v2943
      %2980 = vmatpush.bf16.msra.mxu0 %v2942
      %2981 = vmatpush.bf16.msra.mxu0 %v2941
      %2982 = vmatpush.bf16.msra.mxu0 %v2940
      %2983 = vmatpush.bf16.msra.mxu0 %v2939
      %2984 = vmatmul.bf16.gmra.mxu0 %v2864
      %v2985 = vpop.f32.mrf.mxu0
      %v2986 = vadd.f32 %v2973, %v2985
      %v2987 = vpop.f32.mrf.mxu0
      %2988 = vdwg.mxu0
      %v2989 = vmul.f32 %v2986, 0.00390625
      %v2990 = vpack.c.bf16 %v2989, %v2989
      %v2991 = vld [vmem:[%s5] sm:$0xf]
      %v2992 = vld [vmem:[%s5 + $0x4] sm:$0xf]
      %v2993 = vld [vmem:[%s6] sm:$0x1]
      %v2995 = vperm.slane %v2993, 0
      %v2999 = vunpack.c.l.b16 %v2991
      %v3000 = vunpack.c.l.b16 %v2992
      %v3001 = vpack.c.b16 %v3000, %v2999
      %vm3003 = vcmask 130048
      %v3005 = vsel %vm3003, %v2990, 0
      %3007 = vmatpush.bf16.msra.mxu0 0
      %3008 = vmatpush.bf16.msra.mxu0 0
      %3009 = vmatpush.bf16.msra.mxu0 0
      %3010 = vmatpush.bf16.msra.mxu0 0
      %3011 = vmatpush.bf16.msra.mxu0 0
      %3012 = vmatpush.bf16.msra.mxu0 0
      %3013 = vmatpush.bf16.msra.mxu0 0
      %3014 = vmatpush.bf16.msra.mxu0 %v3001
      %3015 = vmatmul.bf16.gmra.mxu0 %v3005
      %v3016 = vpop.f32.mrf.mxu0
      %v3017 = vadd.f32 %v2995, %v3016
      %v3018 = vpop.f32.mrf.mxu0
      %3019 = vdwg.mxu0
      %v3020 = vmax.f32 %v3017, 0.0
      %v3021 = vpack.c.bf16 %v3020, %v3020
      %v3022 = vld [vmem:[%s7] sm:$0x3]
      %v3023 = vld [vmem:[%s8] sm:$0x1]
      %v3025 = vperm.slane %v3023, 0
      %vm3027 = vcmask 31744
      %v3029 = vsel %vm3027, %v3021, 0
      %vm3031 = vcmask 1041408
      %v3033 = vsel %vm3031, %v3022, 0
      %3035 = vmatpush.bf16.msra.mxu0 0
      %3036 = vmatpush.bf16.msra.mxu0 0
      %3037 = vmatpush.bf16.msra.mxu0 0
      %3038 = vmatpush.bf16.msra.mxu0 0
      %3039 = vmatpush.bf16.msra.mxu0 0
      %3040 = vmatpush.bf16.msra.mxu0 0
      %3041 = vmatpush.bf16.msra.mxu0 0
      %3042 = vmatpush.bf16.msra.mxu0 %v3033
      %3043 = vmatmul.bf16.gmra.mxu0 %v3029
      %v3044 = vpop.f32.mrf.mxu0
      %v3045 = vadd.f32 %v3025, %v3044
      %v3046 = vpop.f32.mrf.mxu0
      %3047 = vdwg.mxu0
      %v3048 = vxor.u32 %v3045, 2147483648
      %v3049 = vmul.f32 %v3048, 1.442695
      %v3050 = vpow.pop %v3049
      %v3051 = vadd.f32 %v3050, 1.0
      %v3052 = vrcp.pop %v3051
      %v3053 = vmul.f32 %v3051, %v3052
      %v3054 = vsub.f32 1.0, %v3053
      %v3055 = vmul.f32 %v3052, %v3054
      %v3056 = vadd.f32 %v3052, %v3055
      %vm3057 = vweird.f32 %v3051
      %vm3058 = vweird.f32 %v3052
      %vm3059 = vmor %vm3057, %vm3058
      %v3060 = vsel %vm3059, %v3052, %v3056
      %v3061 = vand.u32 2147483647, %v3051
      %vm3062 = vcmp.eq.f32.partialorder %v3061, 8.507059e+37
      %v3063 = vand.u32 %v3051, 2147483648
      %v3064 = vor.u32 1.1754944e-38, %v3063
      %v3065 = vsel %vm3062, %v3064, %v3060
      %v3066 = vmul.f32 1.0, %v3065
      %v3067 = vpack.c.bf16 %v3066, %v3066
      %v3068 = vld [vmem:[%s10] sm:$0xff]
      %v3069 = vld [vmem:[%s10 + $0x8] sm:$0xff]
      %v3072 = vunpack.c.l.b16 %v3068
      %v3073 = vunpack.c.h.b16 %v3068
      %v3074 = vunpack.c.l.b16 %v3069
      %v3075 = vunpack.c.h.b16 %v3069
      %v3076 = vpack.c.b16 %v3074, %v3072
      %v3077 = vpack.c.b16 %v3075, %v3073
      %v3081 = vsel %vm3003, %v3067, 0
      %3083 = vmatpush.bf16.msra.mxu0 0
      %3084 = vmatpush.bf16.msra.mxu0 0
      %3085 = vmatpush.bf16.msra.mxu0 0
      %3086 = vmatpush.bf16.msra.mxu0 0
      %3087 = vmatpush.bf16.msra.mxu0 0
      %3088 = vmatpush.bf16.msra.mxu0 0
      %3089 = vmatpush.bf16.msra.mxu0 0
      %3090 = vmatpush.bf16.msra.mxu0 %v3076
      %3091 = vmatmul.bf16.gmra.mxu0 %v3081
      %v3092 = vpop.f32.mrf.mxu0
      %v3093 = vadd.f32 0.0, %v3092
      %v3094 = vpop.f32.mrf.mxu0
      %3095 = vdwg.mxu0
      %3096 = vmatpush.bf16.msra.mxu0 0
      %3097 = vmatpush.bf16.msra.mxu0 0
      %3098 = vmatpush.bf16.msra.mxu0 0
      %3099 = vmatpush.bf16.msra.mxu0 0
      %3100 = vmatpush.bf16.msra.mxu0 0
      %3101 = vmatpush.bf16.msra.mxu0 0
      %3102 = vmatpush.bf16.msra.mxu0 0
      %3103 = vmatpush.bf16.msra.mxu0 %v3077
      %3104 = vmatmul.bf16.gmra.mxu0 %v3081
      %v3105 = vpop.f32.mrf.mxu0
      %v3106 = vadd.f32 0.0, %v3105
      %v3107 = vpop.f32.mrf.mxu0
      %3108 = vdwg.mxu0
      %v3111 = vrot.slane %v3106, 7
      %v3112 = vsel %vm1402, %v3093, %v3111
      %v3113 = vsel %vm2854, %v3093, %v3111
      %v3114 = vrot.slane %v3113, 1
      %v3115 = vsel %vm2856, %v3093, %v3111
      %v3116 = vrot.slane %v3115, 2
      %v3117 = vsel %vm2858, %v3093, %v3111
      %v3118 = vrot.slane %v3117, 3
      %v3119 = vperm.slane %v3112, 0
      %v3120 = vperm.slane %v3112, 1
      %v3121 = vperm.slane %v3114, 0
      %v3122 = vperm.slane %v3114, 1
      %v3123 = vperm.slane %v3116, 0
      %v3124 = vperm.slane %v3116, 1
      %v3125 = vperm.slane %v3118, 0
      %v3126 = vperm.slane %v3118, 1
      %v3135 = vmul.f32 %v2726, %v3119
      %v3136 = vmul.f32 %v2727, %v3120
      %v3137 = vmul.f32 %v2728, %v3119
      %v3138 = vmul.f32 %v2729, %v3120
      %v3139 = vmul.f32 %v2730, %v3121
      %v3140 = vmul.f32 %v2731, %v3122
      %v3141 = vmul.f32 %v2732, %v3121
      %v3142 = vmul.f32 %v2733, %v3122
      %v3143 = vmul.f32 %v2734, %v3123
      %v3144 = vmul.f32 %v2735, %v3124
      %v3145 = vmul.f32 %v2736, %v3123
      %v3146 = vmul.f32 %v2737, %v3124
      %v3147 = vmul.f32 %v2738, %v3125
      %v3148 = vmul.f32 %v2739, %v3126
      %v3149 = vmul.f32 %v2740, %v3125
      %v3150 = vmul.f32 %v2741, %v3126
      %v3151 = vadd.f32 %v3135, %v396
      %v3152 = vadd.f32 %v3136, %v397
      %v3153 = vadd.f32 %v3137, %v398
      %v3154 = vadd.f32 %v3138, %v399
      %v3155 = vadd.f32 %v3139, %v400
      %v3156 = vadd.f32 %v3140, %v401
      %v3157 = vadd.f32 %v3141, %v402
      %v3158 = vadd.f32 %v3142, %v403
      %v3159 = vadd.f32 %v3143, %v404
      %v3160 = vadd.f32 %v3144, %v405
      %v3161 = vadd.f32 %v3145, %v406
      %v3162 = vadd.f32 %v3146, %v407
      %v3163 = vadd.f32 %v3147, %v408
      %v3164 = vadd.f32 %v3148, %v409
      %v3165 = vadd.f32 %v3149, %v410
      %v3166 = vadd.f32 %v3150, %v411
      %3167 = vst [vmem:[%s393] sm:$0xff] %v3151
      %3168 = vst [vmem:[%s393 + $0x8] sm:$0xff] %v3152
      %3169 = vst [vmem:[%s393 + $0x10] sm:$0xff] %v3153
      %3170 = vst [vmem:[%s393 + $0x18] sm:$0xff] %v3154
      %3171 = vst [vmem:[%s393 + $0x20] sm:$0xff] %v3155
      %3172 = vst [vmem:[%s393 + $0x28] sm:$0xff] %v3156
      %3173 = vst [vmem:[%s393 + $0x30] sm:$0xff] %v3157
      %3174 = vst [vmem:[%s393 + $0x38] sm:$0xff] %v3158
      %3175 = vst [vmem:[%s393 + $0x40] sm:$0xff] %v3159
      %3176 = vst [vmem:[%s393 + $0x48] sm:$0xff] %v3160
      %3177 = vst [vmem:[%s393 + $0x50] sm:$0xff] %v3161
      %3178 = vst [vmem:[%s393 + $0x58] sm:$0xff] %v3162
      %3179 = vst [vmem:[%s393 + $0x60] sm:$0xff] %v3163
      %3180 = vst [vmem:[%s393 + $0x68] sm:$0xff] %v3164
      %3181 = vst [vmem:[%s393 + $0x70] sm:$0xff] %v3165
      %3182 = vst [vmem:[%s393 + $0x78] sm:$0xff] %v3166
      %s3183 = smul.u32 4, %s22
      %p3184 = scmp.lt.s32.totalorder %s3183, 7
      %s3185 = scalar_select %p3184, %s3183, 7
      %s3186 = smul.addr %s3185, 4
      %s3187 = smul.addr %s3186, 8
      %s3188 = scalar_lea.vmem %s11, %s3187
      // Predicated region
      $region65: #{rcab_forward.1} parent=63 // pred_check
        %p3189 = pneg %p276
      $region66: #{rcab_forward.1} parent=63 // pred_check_branch
        %3191 = sbr.rel (%p3189) target = $region68
      $region67: #{rcab_forward.1} parent=63 // pred_region
        %s3192 = smul.u32 4, %s22
      $region68: #{rcab_forward.1} parent=63 // pred_fallthru
        _
    $region64: #{rcab_forward.1} parent=5 // pred_fallthru
      _
    %p3193 = scmp.le.s32.totalorder 2, %s17
    // Predicated region
    $region69: #{rcab_forward.1} parent=5 // pred_check
      %p3194 = pneg %p3193
    $region70: #{rcab_forward.1} parent=5 // pred_check_branch
      %3196 = sbr.rel (%p3194) target = $region72
    $region71: #{rcab_forward.1} parent=5 // pred_region
      %s3197 = ssub.s32 %s17, 2
      // Predicated region
      $region73: #{rcab_forward.1} parent=71 // pred_check
        %p3198 = pneg %p282
      $region74: #{rcab_forward.1} parent=71 // pred_check_branch
        %3200 = sbr.rel (%p3198) target = $region76
      $region75: #{rcab_forward.1} parent=71 // pred_region
        %s3201 = smul.u32 4, %s23
        %p3202 = scmp.lt.s32.totalorder %s3201, 7
        %s3203 = scalar_select %p3202, %s3201, 7
        %s3204 = smul.addr %s3203, 4
        %s3205 = smul.addr %s3204, 8
        %s3206 = scalar_lea.vmem %s11, %s3205
      $region76: #{rcab_forward.1} parent=71 // pred_fallthru
        _
    $region72: #{rcab_forward.1} parent=5 // pred_fallthru
      _
  $region6: #{rcab_forward.1} parent=0 // loop_footer
    %s21 = sadd.s32 1, %s17
  $region7: #{rcab_forward.1} parent=0 // loop_footer_branch
    %16 = sbr.rel target = $region3
  $region8: #{rcab_forward.1} parent=0 // loop_exit
    _

</llo_original>
